<compile_context>
chip_gen: v7x
topology: tpu7x:2x2x1
jax: 0.10.0
libtpu: 0.0.40
codegen_flags: <defaults>
</compile_context>

<pallas_src>
import numpy as np
import jax
import jax.numpy as jnp
from jax.experimental import pallas as pl
from jax.experimental.pallas import tpu as pltpu

# ----------------------------- config ---------------------------------------
PCA_COMPONENTS = 8
N_QUBITS = 4
QUANTUM_LAYERS = 2
DIM = 2 ** N_QUBITS          # statevector dimension
LEAKY_SLOPE = 0.2
BN_EPS = 1e-5
PACK_WIDTH = 128             # lane width of the packed parameter buffer
PACK_ROWS = 160              # rows of the packed parameter buffer
OUT_PAD = 128                # lane-dense padded output width (logits in cols 0..1)
TILE_B = 256                 # batch rows per grid step
BATCH = 1024                 # example batch


# ----------------------------- Pallas kernel --------------------------------
def make_hybrid_kernel(off):
    """Kernel closed over static (row, col, rows, cols) views into the packed
    parameter buffer."""

    def kernel(x_ref, p_ref, out_ref):
        def blk(name):
            r, c, nr, nc = off[name]                    # static python ints
            return p_ref[r:r + nr, c:c + nc]

        x = x_ref[...]

        # ---- classical head: Linear(P,64) [BN folded] -> LeakyReLU(0.2)
        h = jnp.dot(x, blk("w1"), preferred_element_type=jnp.float32) + blk("b1")
        h = jnp.maximum(h, LEAKY_SLOPE * h)             # Dropout = identity (eval)

        # ---- Linear(64,NQ) with 0.5 folded in and angles duplicated+shifted:
        #      cos(ang2) = (cos(a/2) | sin(a/2))
        ang2 = jnp.dot(h, blk("w2b"), preferred_element_type=jnp.float32) + blk("b2b")
        cd = jnp.cos(ang2)                              # [B, 2*N_QUBITS]

        # ---- quantum circuit (exact statevector simulation) ----
        # per-qubit amplitude factors via selector matmuls:
        #   Fi[b,s] = cos(a_i/2) if bit_i(s)=0 else sin(a_i/2)
        fa = jnp.dot(cd, blk("sa"), preferred_element_type=jnp.float32)   # (F0 | F2)
        fb = jnp.dot(cd, blk("sb"), preferred_element_type=jnp.float32)   # (F1 | F3)
        p = fa * fb                                     # (F0*F1 | F2*F3)
        mag = p[:, 0:DIM] * p[:, DIM:2 * DIM]           # [B, DIM] amplitude magnitudes

        # phase-folded fixed unitary: single [DIM, 2*DIM] matmul -> (real | imag)
        ri = jnp.dot(mag, blk("uu"), preferred_element_type=jnp.float32)

        # |psi|^2, PauliZ expvals and Linear(NQ,32) fused: (ri*ri) @ [zw3; zw3] + b3
        h2 = jnp.dot(ri * ri, blk("zw3s"), preferred_element_type=jnp.float32) + blk("b3")
        h2 = jnp.maximum(h2, 0.0)

        # ---- Linear(32,2), padded to a lane-dense 128-wide store
        out_ref[...] = jnp.dot(h2, blk("w4"),
                               preferred_element_type=jnp.float32) + blk("b4")

    return kernel


def build_hybrid_forward(off, tile_b=TILE_B):
    kernel = make_hybrid_kernel(off)

    @jax.jit
    def fwd(x, packed):
        b = x.shape[0]
        pb = ((b + tile_b - 1) // tile_b) * tile_b
        xp = x if pb == b else jnp.pad(x, ((0, pb - b), (0, 0)))
        out = pl.pallas_call(
            kernel,
            out_shape=jax.ShapeDtypeStruct((pb, OUT_PAD), jnp.float32),
            grid=(pb // tile_b,),
            in_specs=[
                pl.BlockSpec((tile_b, PCA_COMPONENTS), lambda i: (i, 0)),
                # constant index_map -> parameter buffer DMA'd once, VMEM resident
                pl.BlockSpec(packed.shape, lambda i: (0, 0)),
            ],
            out_specs=pl.BlockSpec((tile_b, OUT_PAD), lambda i: (i, 0)),
            compiler_params=pltpu.CompilerParams(
                dimension_semantics=("parallel",)),     # megacore split on v7x
        )(xp, packed)
        return out[:b, :2]                              # logits

    return fwd


# ------------------- host-side parameter packing -----------------------------
def pack_params(entries, rows=PACK_ROWS, width=PACK_WIDTH):
    """Pack small 2D f32 arrays into one (rows, width) buffer at explicit
    (row, col) placements; returns the buffer and name -> (r, c, h, w) views."""
    packed = np.zeros((rows, width), np.float32)
    used = np.zeros((rows, width), dtype=bool)
    off = {}
    for name, arr, r, c in entries:
        a = np.asarray(arr, np.float32)
        h, w = a.shape
        assert r + h <= rows and c + w <= width, name
        assert not used[r:r + h, c:c + w].any(), name   # no overlaps
        used[r:r + h, c:c + w] = True
        packed[r:r + h, c:c + w] = a
        off[name] = (r, c, h, w)
    return packed, off


# ------------------- host-side quantum-parameter glue -----------------------
def _kron_list(mats):
    out = mats[0]
    for m in mats[1:]:
        out = np.kron(out, m)
    return out


def _single(gate, wire, n):
    mats = [np.eye(2, dtype=complex)] * n
    mats[wire] = gate
    return _kron_list(mats)


def _cnot(control, target, n):
    dim = 2 ** n
    U = np.zeros((dim, dim), dtype=complex)
    for src in range(dim):
        bits = [(src >> (n - 1 - w)) & 1 for w in range(n)]
        if bits[control] == 1:
            bits[target] ^= 1
        dst = 0
        for w in range(n):
            dst = (dst << 1) | bits[w]
        U[dst, src] = 1.0
    return U


def _rx(t):
    c, s = np.cos(t / 2), np.sin(t / 2)
    return np.array([[c, -1j * s], [-1j * s, c]])


def _ry(t):
    c, s = np.cos(t / 2), np.sin(t / 2)
    return np.array([[c, -s], [s, c]])


def _rz(t):
    return np.array([[np.exp(-1j * t / 2), 0], [0, np.exp(1j * t / 2)]])


def _rot(phi, theta, omega):
    return _rz(omega) @ _ry(theta) @ _rz(phi)


def build_fixed_unitary(weights_strong, weights_basic):
    """Parameter-only part of the circuit: StronglyEntanglingLayers followed by
    BasicEntanglerLayers (PennyLane conventions, CNOT imprimitive)."""
    n = N_QUBITS
    U = np.eye(DIM, dtype=complex)
    for l in range(QUANTUM_LAYERS):                     # StronglyEntanglingLayers
        for i in range(n):
            phi, theta, omega = weights_strong[l, i]
            U = _single(_rot(phi, theta, omega), i, n) @ U
        if n > 1:
            r = (l % (n - 1)) + 1
            for i in range(n):
                U = _cnot(i, (i + r) % n, n) @ U
    for l in range(QUANTUM_LAYERS):                     # BasicEntanglerLayers
        for i in range(n):
            U = _single(_rx(weights_basic[l, i]), i, n) @ U
        if n == 2:
            U = _cnot(0, 1, n) @ U
        elif n > 2:
            for i in range(n):
                U = _cnot(i, (i + 1) % n, n) @ U
    return U


def build_static_tables():
    """Bit masks, (-i)^popcount phases and PauliZ sign table (wire 0 = MSB)."""
    bitmask = np.zeros((N_QUBITS, DIM), np.float64)
    zsign = np.zeros((DIM, N_QUBITS), np.float64)
    re_ph = np.zeros((DIM,), np.float64)
    im_ph = np.zeros((DIM,), np.float64)
    phase_table = [(1.0, 0.0), (0.0, -1.0), (-1.0, 0.0), (0.0, 1.0)]  # (-i)^k
    for s in range(DIM):
        k = 0
        for i in range(N_QUBITS):
            bit = (s >> (N_QUBITS - 1 - i)) & 1
            bitmask[i, s] = float(bit)
            zsign[s, i] = 1.0 - 2.0 * bit
            k += bit
        re_ph[s], im_ph[s] = phase_table[k % 4]
    return bitmask, zsign, re_ph, im_ph


def build_selectors(bitmask):
    """Selector matrices so that (cos|sin) @ SA = (F0|F2), (cos|sin) @ SB = (F1|F3),
    where Fi[b,s] = cos(a_i/2) if bit_i(s)=0 else sin(a_i/2)."""
    assert N_QUBITS == 4
    SA = np.zeros((2 * N_QUBITS, 2 * DIM), np.float64)
    SB = np.zeros((2 * N_QUBITS, 2 * DIM), np.float64)
    for half, (qa, qb) in enumerate([(0, 1), (2, 3)]):
        cols = slice(half * DIM, (half + 1) * DIM)
        SA[qa, cols] = 1.0 - bitmask[qa]
        SA[N_QUBITS + qa, cols] = bitmask[qa]
        SB[qb, cols] = 1.0 - bitmask[qb]
        SB[N_QUBITS + qb, cols] = bitmask[qb]
    return SA, SB


# ----------------------------- numpy reference -------------------------------
def reference_forward(x, p_np, U_fixed, zsign):
    h = x @ p_np["w1"] + p_np["b1"]
    h = h * p_np["bn_scale"] + p_np["bn_shift"]
    h = np.where(h > 0, h, LEAKY_SLOPE * h)
    ang = h @ p_np["w2"] + p_np["b2"]
    B = x.shape[0]
    psi0 = np.zeros((B, DIM), dtype=complex)
    for b in range(B):
        v = np.array([1.0 + 0j])
        for i in range(N_QUBITS):
            a = ang[b, i]
            v = np.kron(v, np.array([np.cos(a / 2), -1j * np.sin(a / 2)]))
        psi0[b] = v
    psi = psi0 @ U_fixed.T
    probs = np.abs(psi) ** 2
    expv = probs @ zsign
    h2 = np.maximum(expv @ p_np["w3"] + p_np["b3"], 0.0)
    return h2 @ p_np["w4"] + p_np["b4"]


# ----------------------------- main -------------------------------------------
if __name__ == "__main__":
    key = jax.random.PRNGKey(0)
    keys = jax.random.split(key, 16)

    def uni(k, shape, scale):
        return jax.random.uniform(k, shape, jnp.float32, -scale, scale)

    # classical head params
    w1 = uni(keys[0], (PCA_COMPONENTS, 64), 1.0 / np.sqrt(PCA_COMPONENTS))
    b1 = uni(keys[1], (1, 64), 1.0 / np.sqrt(PCA_COMPONENTS))
    gamma = 1.0 + 0.1 * jax.random.normal(keys[2], (64,), jnp.float32)
    beta = 0.1 * jax.random.normal(keys[3], (64,), jnp.float32)
    run_mean = 0.05 * jax.random.normal(keys[4], (64,), jnp.float32)
    run_var = 1.0 + 0.1 * jax.random.uniform(keys[5], (64,), jnp.float32)
    inv_std = 1.0 / jnp.sqrt(run_var + BN_EPS)
    bn_scale = (gamma * inv_std).reshape(1, 64)
    bn_shift = (beta - run_mean * gamma * inv_std).reshape(1, 64)
    w2 = uni(keys[6], (64, N_QUBITS), 0.125)
    b2 = uni(keys[7], (1, N_QUBITS), 0.125)

    # quantum circuit params (parameter-only unitary precomputed on host)
    weights_strong = np.array(
        jax.random.uniform(keys[8], (QUANTUM_LAYERS, N_QUBITS, 3), jnp.float32, 0.0, 2 * np.pi),
        dtype=np.float64)
    weights_basic = np.array(
        jax.random.uniform(keys[9], (QUANTUM_LAYERS, N_QUBITS), jnp.float32, 0.0, 2 * np.pi),
        dtype=np.float64)
    U_fixed = build_fixed_unitary(weights_strong, weights_basic)
    bitmask_np, zsign_np, re_ph_np, im_ph_np = build_static_tables()

    # output head params
    w3 = uni(keys[10], (N_QUBITS, 32), 0.5)
    b3 = uni(keys[11], (1, 32), 0.5)
    w4 = uni(keys[12], (32, 2), 1.0 / np.sqrt(32))
    b4 = uni(keys[13], (1, 2), 1.0 / np.sqrt(32))

    # ---- host-side algebraic folds (float64, stored f32) ----
    w1_64 = np.array(w1, np.float64)
    b1_64 = np.array(b1, np.float64)
    sc_64 = np.array(bn_scale, np.float64)
    sh_64 = np.array(bn_shift, np.float64)
    w1f = w1_64 * sc_64                                 # BN scale folded into weight
    b1f = b1_64 * sc_64 + sh_64                         # BN shift folded into bias

    # 0.5 folded + duplicated/shifted angles: cos(a/2 - pi/2) == sin(a/2)
    w2_64 = np.array(w2, np.float64)
    b2_64 = np.array(b2, np.float64)
    w2b = np.concatenate([0.5 * w2_64, 0.5 * w2_64], axis=1)                  # (64, 8)
    b2b = np.concatenate([0.5 * b2_64, 0.5 * b2_64 - np.pi / 2.0], axis=1)    # (1, 8)

    # selector matrices for per-qubit amplitude factors
    SA, SB = build_selectors(bitmask_np)                                       # (8, 32) each

    # embedding phases folded into the fixed unitary, real|imag concatenated
    phase = re_ph_np + 1j * im_ph_np                    # (-i)^popcount(s)
    M = phase[:, None] * U_fixed.T                      # psi @ U^T == mag @ M
    uu = np.concatenate([M.real, M.imag], axis=1)       # (DIM, 2*DIM)

    # PauliZ expvals fused with Linear(NQ,32), stacked so (ri*ri) @ zw3s = probs @ zw3
    zw3 = zsign_np @ np.array(w3, np.float64)           # (DIM, 32)
    zw3s = np.vstack([zw3, zw3])                        # (2*DIM, 32)

    # last Linear padded to a lane-dense 128-wide output
    w4pad = np.zeros((32, OUT_PAD), np.float64)
    w4pad[:, :2] = np.array(w4, np.float64)
    b4pad = np.zeros((1, OUT_PAD), np.float64)
    b4pad[:, :2] = np.array(b4, np.float64)

    # ---- lane-co-packed parameter buffer (explicit row/col placements) ----
    entries = [
        ("w1",   w1f,                 0,   0),   # (8, 64)
        ("sa",   SA,                  0,  64),   # (8, 32)
        ("sb",   SB,                  0,  96),   # (8, 32)
        ("w2b",  w2b,                 8,   0),   # (64, 8)
        ("b1",   b1f,                72,   0),   # (1, 64)
        ("b2b",  b2b,                72,  64),   # (1, 8)
        ("b3",   np.array(b3, np.float64), 72, 80),   # (1, 32)
        ("b4",   b4pad,              73,   0),   # (1, 128)
        ("uu",   uu,                 80,   0),   # (16, 32)
        ("zw3s", zw3s,               96,   0),   # (32, 32)
        ("w4",   w4pad,             128,   0),   # (32, 128)
    ]
    packed_np, off = pack_params(entries)
    packed = jnp.asarray(packed_np)

    hybrid_forward = build_hybrid_forward(off, tile_b=TILE_B)

    # example input: [batch, PCA_COMPONENTS]
    x = jax.random.normal(keys[14], (BATCH, PCA_COMPONENTS), jnp.float32)

    out = hybrid_forward(x, packed)
    jax.block_until_ready(out)
    assert out.shape == (BATCH, 2)

    # independent full-precision reference (complex statevector, no folds)
    p_np = {
        "w1": np.array(w1, np.float64), "b1": np.array(b1, np.float64),
        "bn_scale": sc_64, "bn_shift": sh_64,
        "w2": w2_64, "b2": b2_64,
        "w3": np.array(w3, np.float64), "b3": np.array(b3, np.float64),
        "w4": np.array(w4, np.float64), "b4": np.array(b4, np.float64),
    }
    ref = reference_forward(np.array(x, dtype=np.float64), p_np, U_fixed, zsign_np)
    np.testing.assert_allclose(np.array(out, dtype=np.float64), ref, rtol=2e-3, atol=2e-3)

    print("KERNEL_OK")
</pallas_src>

<mosaic_0001>
module attributes {stable_mosaic.version = 11 : i64} {
  func.func @kernel(%arg0: i32, %arg1: memref<256x8xf32, #tpu.memory_space<vmem>>, %arg2: memref<160x128xf32, #tpu.memory_space<vmem>>, %arg3: memref<256x128xf32, #tpu.memory_space<vmem>>) attributes {dimension_semantics = [#tpu.dimension_semantics<parallel>], iteration_bounds = array<i64: 4>, scalar_prefetch = 0 : i64, scratch_operands = 0 : i64, tpu.core_type = #tpu.core_type<tc>, window_params = [{transform_indices = @transform_0, window_bounds = array<i64: 256, 8>}, {pipeline_mode = #tpu.pipeline_mode<synchronous>, transform_indices = @transform_1, window_bounds = array<i64: 160, 128>}, {transform_indices = @transform_2, window_bounds = array<i64: 256, 128>}]} {
    %c0 = arith.constant 0 : index
    %c0_0 = arith.constant 0 : index
    %0 = vector.load %arg1[%c0, %c0_0] : memref<256x8xf32, #tpu.memory_space<vmem>>, vector<256x8xf32>
    %c0_1 = arith.constant 0 : index
    %c0_2 = arith.constant 0 : index
    %1 = vector.load %arg2[%c0_1, %c0_2] : memref<160x128xf32, #tpu.memory_space<vmem>>, vector<8x64xf32>
    %cst = arith.constant dense<0.000000e+00> : vector<256x64xf32>
    %2 = tpu.matmul %0, %1, %cst {dimension_numbers = #tpu.dot_dimension_numbers<[1], [0], [0], [1], [0, 0, 1, 1], [], []>} : vector<256x8xf32>, vector<8x64xf32>, vector<256x64xf32> -> vector<256x64xf32>
    %c72 = arith.constant 72 : index
    %c0_3 = arith.constant 0 : index
    %3 = vector.load %arg2[%c72, %c0_3] : memref<160x128xf32, #tpu.memory_space<vmem>>, vector<1x64xf32>
    %4 = vector.broadcast %3 : vector<1x64xf32> to vector<256x64xf32>
    %5 = arith.addf %2, %4 : vector<256x64xf32>
    %cst_4 = arith.constant 2.000000e-01 : f32
    %6 = vector.broadcast %cst_4 : f32 to vector<256x64xf32>
    %7 = arith.mulf %6, %5 : vector<256x64xf32>
    %8 = arith.maximumf %5, %7 : vector<256x64xf32>
    %c8 = arith.constant 8 : index
    %c0_5 = arith.constant 0 : index
    %9 = vector.load %arg2[%c8, %c0_5] : memref<160x128xf32, #tpu.memory_space<vmem>>, vector<64x8xf32>
    %cst_6 = arith.constant dense<0.000000e+00> : vector<256x8xf32>
    %10 = tpu.matmul %8, %9, %cst_6 {dimension_numbers = #tpu.dot_dimension_numbers<[1], [0], [0], [1], [0, 0, 1, 1], [], []>} : vector<256x64xf32>, vector<64x8xf32>, vector<256x8xf32> -> vector<256x8xf32>
    %c72_7 = arith.constant 72 : index
    %c64 = arith.constant 64 : index
    %11 = vector.load %arg2[%c72_7, %c64] : memref<160x128xf32, #tpu.memory_space<vmem>>, vector<1x8xf32>
    %12 = vector.broadcast %11 : vector<1x8xf32> to vector<256x8xf32>
    %13 = arith.addf %10, %12 : vector<256x8xf32>
    %14 = math.cos %13 : vector<256x8xf32>
    %c0_8 = arith.constant 0 : index
    %c64_9 = arith.constant 64 : index
    %15 = vector.load %arg2[%c0_8, %c64_9] : memref<160x128xf32, #tpu.memory_space<vmem>>, vector<8x32xf32>
    %cst_10 = arith.constant dense<0.000000e+00> : vector<256x32xf32>
    %16 = tpu.matmul %14, %15, %cst_10 {dimension_numbers = #tpu.dot_dimension_numbers<[1], [0], [0], [1], [0, 0, 1, 1], [], []>} : vector<256x8xf32>, vector<8x32xf32>, vector<256x32xf32> -> vector<256x32xf32>
    %c0_11 = arith.constant 0 : index
    %c96 = arith.constant 96 : index
    %17 = vector.load %arg2[%c0_11, %c96] : memref<160x128xf32, #tpu.memory_space<vmem>>, vector<8x32xf32>
    %cst_12 = arith.constant dense<0.000000e+00> : vector<256x32xf32>
    %18 = tpu.matmul %14, %17, %cst_12 {dimension_numbers = #tpu.dot_dimension_numbers<[1], [0], [0], [1], [0, 0, 1, 1], [], []>} : vector<256x8xf32>, vector<8x32xf32>, vector<256x32xf32> -> vector<256x32xf32>
    %19 = arith.mulf %16, %18 : vector<256x32xf32>
    %20 = vector.extract_strided_slice %19 {offsets = [0, 0], sizes = [256, 16], strides = [1, 1]} : vector<256x32xf32> to vector<256x16xf32>
    %21 = vector.extract_strided_slice %19 {offsets = [0, 16], sizes = [256, 16], strides = [1, 1]} : vector<256x32xf32> to vector<256x16xf32>
    %22 = arith.mulf %20, %21 : vector<256x16xf32>
    %c80 = arith.constant 80 : index
    %c0_13 = arith.constant 0 : index
    %23 = vector.load %arg2[%c80, %c0_13] : memref<160x128xf32, #tpu.memory_space<vmem>>, vector<16x32xf32>
    %cst_14 = arith.constant dense<0.000000e+00> : vector<256x32xf32>
    %24 = tpu.matmul %22, %23, %cst_14 {dimension_numbers = #tpu.dot_dimension_numbers<[1], [0], [0], [1], [0, 0, 1, 1], [], []>} : vector<256x16xf32>, vector<16x32xf32>, vector<256x32xf32> -> vector<256x32xf32>
    %25 = arith.mulf %24, %24 : vector<256x32xf32>
    %c96_15 = arith.constant 96 : index
    %c0_16 = arith.constant 0 : index
    %26 = vector.load %arg2[%c96_15, %c0_16] : memref<160x128xf32, #tpu.memory_space<vmem>>, vector<32x32xf32>
    %cst_17 = arith.constant dense<0.000000e+00> : vector<256x32xf32>
    %27 = tpu.matmul %25, %26, %cst_17 {dimension_numbers = #tpu.dot_dimension_numbers<[1], [0], [0], [1], [0, 0, 1, 1], [], []>} : vector<256x32xf32>, vector<32x32xf32>, vector<256x32xf32> -> vector<256x32xf32>
    %c72_18 = arith.constant 72 : index
    %c80_19 = arith.constant 80 : index
    %28 = vector.load %arg2[%c72_18, %c80_19] : memref<160x128xf32, #tpu.memory_space<vmem>>, vector<1x32xf32>
    %29 = vector.broadcast %28 : vector<1x32xf32> to vector<256x32xf32>
    %30 = arith.addf %27, %29 : vector<256x32xf32>
    %cst_20 = arith.constant 0.000000e+00 : f32
    %31 = vector.broadcast %cst_20 : f32 to vector<256x32xf32>
    %32 = arith.maximumf %30, %31 : vector<256x32xf32>
    %c128 = arith.constant 128 : index
    %c0_21 = arith.constant 0 : index
    %33 = vector.load %arg2[%c128, %c0_21] : memref<160x128xf32, #tpu.memory_space<vmem>>, vector<32x128xf32>
    %cst_22 = arith.constant dense<0.000000e+00> : vector<256x128xf32>
    %34 = tpu.matmul %32, %33, %cst_22 {dimension_numbers = #tpu.dot_dimension_numbers<[1], [0], [0], [1], [0, 0, 1, 1], [], []>} : vector<256x32xf32>, vector<32x128xf32>, vector<256x128xf32> -> vector<256x128xf32>
    %c73 = arith.constant 73 : index
    %c0_23 = arith.constant 0 : index
    %35 = vector.load %arg2[%c73, %c0_23] : memref<160x128xf32, #tpu.memory_space<vmem>>, vector<1x128xf32>
    %36 = vector.broadcast %35 : vector<1x128xf32> to vector<256x128xf32>
    %37 = arith.addf %34, %36 : vector<256x128xf32>
    %c0_24 = arith.constant 0 : index
    %c0_25 = arith.constant 0 : index
    %38 = vector.load %arg3[%c0_24, %c0_25] : memref<256x128xf32, #tpu.memory_space<vmem>>, vector<256x128xf32>
    tpu.vector_store %arg3[%c0_24, %c0_25], %37 {strides = array<i32>} : memref<256x128xf32, #tpu.memory_space<vmem>>, vector<256x128xf32>,
    return
  }
  func.func @transform_0(%arg0: i32) -> (i32, i32) {
    %c0_i32 = arith.constant 0 : i32
    %c0_i32_0 = arith.constant 0 : i32
    return %arg0, %c0_i32 : i32, i32
  }
  func.func @transform_1(%arg0: i32) -> (i32, i32) {
    %c0_i32 = arith.constant 0 : i32
    %c0_i32_0 = arith.constant 0 : i32
    %c0_i32_1 = arith.constant 0 : i32
    return %c0_i32, %c0_i32_0 : i32, i32
  }
  func.func @transform_2(%arg0: i32) -> (i32, i32) {
    %c0_i32 = arith.constant 0 : i32
    %c0_i32_0 = arith.constant 0 : i32
    return %arg0, %c0_i32 : i32, i32
  }
}

</mosaic_0001>

<llo_original>
// kernel: fwd.1
$region0: #{fwd.1}
  #allocation0 [shape = 'u32[]', space=smem, size = 0x4, offset = 0x4, fixed_abs, tag = 'smem constant byte address 0x4 - core index']
  #allocation1 [shape = 'u32[144,128]{1,0:T(1,128)}', space=vmem, size = 0x12000, scoped, tag = 'internal scratch']
  %s0 = inlined_call_operand.vmem [shape: f32[1024,8], index: 0, kind: input, shape index: {}]
  %s1 = inlined_call_operand.vmem [shape: f32[160,128], index: 1, kind: input, shape index: {}]
  %s2 = inlined_call_operand.vmem [shape: f32[1024,128], index: 2, kind: output, shape index: {}]
  %s3 = sld [smem:[#allocation0]]
  $region41: #{fwd.1} parent=0
    _
  %s5 = ssub.s32 1, %s3
  %s6 = scalar_select 0, %s5, %s3
  loop: start=0, step=1, limit=6
  $region2: #{fwd.1} parent=0 // loop_pre_header
    _
  $region3: #{fwd.1} parent=0 // loop_header
    %s8 = sphi 0, %s12
    %p9 = scmp.ge.s32.totalorder %s8, 6
    %s18 = sphi 0, %s20
    %s21 = sphi 0, %s18
    %s22 = sphi 0, %s21
    %s38 = sphi 0, %s22
    %s42 = sphi 0, %s42
    %s44 = sphi 0, %s42
    %s45 = sphi 0, %s44
    %s59 = sphi 0, %s45
    %s65 = sphi 0, %s67
    %s68 = sphi 0, %s65
    %s69 = sphi 0, %s68
    %s85 = sphi 0, %s69
  $region4: #{fwd.1} parent=0 // loop_header_branch
    %11 = sbr.rel (%p9) target = $region8
  $region5: #{fwd.1} parent=0 // loop_body
    %s13 = ssub.s32 %s8, 1
    %s14 = ssub.s32 %s8, 2
    %s15 = sadd.s32 %s8, 1
    %s16 = ssub.s32 %s8, %s15
    %p17 = scmp.eq.s32.totalorder %s16, 0
    %s19 = sadd.s32 %s18, 1
    %s20 = scalar_select %p17, %s18, %s19
    %p23 = pneg %p17
    %p24 = scmp.eq.s32.totalorder %s8, 3
    %p25 = por %p23, %p24
    %p26 = scmp.ne.s32.totalorder %s18, %s21
    %p27 = scmp.eq.s32.totalorder %s8, 0
    %p28 = por %p26, %p27
    %p29 = scmp.ne.s32.totalorder %s18, %s21
    %p30 = scmp.eq.s32.totalorder %s13, 3
    %p31 = por %p29, %p30
    %p32 = scmp.ne.s32.totalorder %s21, %s22
    %p33 = scmp.eq.s32.totalorder %s13, 0
    %p34 = por %p32, %p33
    %p35 = scmp.ne.s32.totalorder %s21, %s22
    %p36 = scmp.eq.s32.totalorder %s14, 3
    %p37 = por %p35, %p36
    %p39 = scmp.ne.s32.totalorder %s22, %s38
    %p40 = scmp.eq.s32.totalorder %s14, 0
    %p41 = por %p39, %p40
    %s43 = sadd.s32 %s42, 1
    %p46 = scmp.eq.s32.totalorder %s8, 3
    %p47 = scmp.ne.s32.totalorder %s42, %s44
    %p48 = scmp.eq.s32.totalorder %s8, 0
    %p49 = por %p47, %p48
    %p50 = scmp.ne.s32.totalorder %s42, %s44
    %p51 = scmp.eq.s32.totalorder %s13, 3
    %p52 = por %p50, %p51
    %p53 = scmp.ne.s32.totalorder %s44, %s45
    %p54 = scmp.eq.s32.totalorder %s13, 0
    %p55 = por %p53, %p54
    %p56 = scmp.ne.s32.totalorder %s44, %s45
    %p57 = scmp.eq.s32.totalorder %s14, 3
    %p58 = por %p56, %p57
    %p60 = scmp.ne.s32.totalorder %s45, %s59
    %p61 = scmp.eq.s32.totalorder %s14, 0
    %p62 = por %p60, %p61
    %s63 = ssub.s32 %s8, %s15
    %p64 = scmp.eq.s32.totalorder %s63, 0
    %s66 = sadd.s32 %s65, 1
    %s67 = scalar_select %p64, %s65, %s66
    %p70 = pneg %p64
    %p71 = scmp.eq.s32.totalorder %s8, 3
    %p72 = por %p70, %p71
    %p73 = scmp.ne.s32.totalorder %s65, %s68
    %p74 = scmp.eq.s32.totalorder %s8, 0
    %p75 = por %p73, %p74
    %p76 = scmp.ne.s32.totalorder %s65, %s68
    %p77 = scmp.eq.s32.totalorder %s13, 3
    %p78 = por %p76, %p77
    %p79 = scmp.ne.s32.totalorder %s68, %s69
    %p80 = scmp.eq.s32.totalorder %s13, 0
    %p81 = por %p79, %p80
    %p82 = scmp.ne.s32.totalorder %s68, %s69
    %p83 = scmp.eq.s32.totalorder %s14, 3
    %p84 = por %p82, %p83
    %p86 = scmp.ne.s32.totalorder %s69, %s85
    %p87 = scmp.eq.s32.totalorder %s14, 0
    %p88 = por %p86, %p87
    %p89 = scmp.le.s32.totalorder 1, %s8
    %p90 = scmp.lt.s32.totalorder %s8, 5
    %p91 = pnand %p89, %p90
    %p92 = pneg %p91
    // Predicated region
    $region9: #{fwd.1} parent=5 // pred_check
      _
    $region10: #{fwd.1} parent=5 // pred_check_branch
      %94 = sbr.rel (%p91) target = $region12
    $region11: #{fwd.1} parent=5 // pred_region
      %s95 = ssub.s32 %s8, 1
      // Predicated region
      $region13: #{fwd.1} parent=11 // pred_check
        %p96 = pneg %p55
      $region14: #{fwd.1} parent=11 // pred_check_branch
        %98 = sbr.rel (%p96) target = $region16
      $region15: #{fwd.1} parent=11 // pred_region
        _
      $region16: #{fwd.1} parent=11 // pred_fallthru
        _
    $region12: #{fwd.1} parent=5 // pred_fallthru
      _
    %p99 = scmp.lt.s32.totalorder %s8, 4
    // Predicated region
    $region17: #{fwd.1} parent=5 // pred_check
      %p100 = pneg %p99
    $region18: #{fwd.1} parent=5 // pred_check_branch
      %102 = sbr.rel (%p100) target = $region20
    $region19: #{fwd.1} parent=5 // pred_region
      // Predicated region
      $region21: #{fwd.1} parent=19 // pred_check
        %p103 = pneg %p28
      $region22: #{fwd.1} parent=19 // pred_check_branch
        %105 = sbr.rel (%p103) target = $region24
      $region23: #{fwd.1} parent=19 // pred_region
        %s106 = smul.u32 32, %s8
        %p107 = scmp.lt.s32.totalorder %s106, 127
        %s108 = scalar_select %p107, %s106, 127
        %s109 = smul.addr %s108, 8
        %s110 = scalar_lea.vmem %s0, %s109
        %s111 = smul.u32 32, %s8
      $region24: #{fwd.1} parent=19 // pred_fallthru
        _
    $region20: #{fwd.1} parent=5 // pred_fallthru
      _
    %p112 = scmp.le.s32.totalorder 1, %s8
    %p113 = scmp.lt.s32.totalorder %s8, 5
    %p114 = pnand %p112, %p113
    %p115 = pneg %p114
    // Predicated region
    $region25: #{fwd.1} parent=5 // pred_check
      _
    $region26: #{fwd.1} parent=5 // pred_check_branch
      %117 = sbr.rel (%p114) target = $region28
    $region27: #{fwd.1} parent=5 // pred_region
      %s118 = ssub.s32 %s8, 1
      %s119 = smul.u32 32, %s13
      %p120 = scmp.lt.s32.totalorder %s119, 127
      %s121 = scalar_select %p120, %s119, 127
      %s122 = smul.addr %s121, 8
      %s123 = scalar_lea.vmem %s0, %s122
      %p124 = pneg %p34
      %p125 = pneg %p31
      %p126 = pneg %p55
      %p127 = pneg %p52
      %p128 = pneg %p81
      %p129 = pneg %p78
      %s130 = smul.u32 32, %s13
      %p131 = scmp.lt.s32.totalorder %s130, 127
      %s132 = scalar_select %p131, %s130, 127
      %s133 = smul.addr %s132, 8
      %s134 = scalar_lea.vmem %s2, %s133
      %s135 = smul.u32 32, %s13
      %p136 = scmp.lt.s32.totalorder %s135, 127
      %s137 = scalar_select %p136, %s135, 127
      %s138 = smul.addr %s137, 8
      %s139 = scalar_lea.vmem %s0, %s138
      %s140 = smul.u32 32, %s13
      %s141 = smul.u32 32, %s13
      %p142 = scmp.lt.s32.totalorder %s141, 127
      %s143 = scalar_select %p142, %s141, 127
      %s144 = smul.addr %s143, 8
      %s145 = scalar_lea.vmem %s2, %s144
      %s146 = smul.u32 32, %s13
      %v147 = vld [vmem:[%s139] sm:$0xff]
      %v148 = vld [vmem:[%s139 + $0x8] sm:$0xff]
      %v149 = vld [vmem:[%s139 + $0x10] sm:$0xff]
      %v150 = vld [vmem:[%s139 + $0x18] sm:$0xff]
      %v151 = vld [vmem:[%s139 + $0x20] sm:$0xff]
      %v152 = vld [vmem:[%s139 + $0x28] sm:$0xff]
      %v153 = vld [vmem:[%s139 + $0x30] sm:$0xff]
      %v154 = vld [vmem:[%s139 + $0x38] sm:$0xff]
      %v155 = vld [vmem:[%s139 + $0x40] sm:$0xff]
      %v156 = vld [vmem:[%s139 + $0x48] sm:$0xff]
      %v157 = vld [vmem:[%s139 + $0x50] sm:$0xff]
      %v158 = vld [vmem:[%s139 + $0x58] sm:$0xff]
      %v159 = vld [vmem:[%s139 + $0x60] sm:$0xff]
      %v160 = vld [vmem:[%s139 + $0x68] sm:$0xff]
      %v161 = vld [vmem:[%s139 + $0x70] sm:$0xff]
      %v162 = vld [vmem:[%s139 + $0x78] sm:$0xff]
      %v163 = vld [vmem:[%s139 + $0x80] sm:$0xff]
      %v164 = vld [vmem:[%s139 + $0x88] sm:$0xff]
      %v165 = vld [vmem:[%s139 + $0x90] sm:$0xff]
      %v166 = vld [vmem:[%s139 + $0x98] sm:$0xff]
      %v167 = vld [vmem:[%s139 + $0xa0] sm:$0xff]
      %v168 = vld [vmem:[%s139 + $0xa8] sm:$0xff]
      %v169 = vld [vmem:[%s139 + $0xb0] sm:$0xff]
      %v170 = vld [vmem:[%s139 + $0xb8] sm:$0xff]
      %v171 = vld [vmem:[%s139 + $0xc0] sm:$0xff]
      %v172 = vld [vmem:[%s139 + $0xc8] sm:$0xff]
      %v173 = vld [vmem:[%s139 + $0xd0] sm:$0xff]
      %v174 = vld [vmem:[%s139 + $0xd8] sm:$0xff]
      %v175 = vld [vmem:[%s139 + $0xe0] sm:$0xff]
      %v176 = vld [vmem:[%s139 + $0xe8] sm:$0xff]
      %v177 = vld [vmem:[%s139 + $0xf0] sm:$0xff]
      %v178 = vld [vmem:[%s139 + $0xf8] sm:$0xff]
      %v179 = vld [vmem:[%s1] sm:$0xff]
      %v180 = vld [vmem:[%s1 + $0x48] sm:$0x1]
      %v181 = vlaneseq
      %v182 = vshrl.u32 %v181, 7
      %v183 = vsub.s32 0, %v182
      %v184 = vrot.slane %v180, %v183
      %vm185 = vcmask 64512
      %v187 = vsel %vm185, %v147, 0
      %v190 = vsel %vm185, %v148, 0
      %v193 = vsel %vm185, %v149, 0
      %v196 = vsel %vm185, %v150, 0
      %v199 = vsel %vm185, %v151, 0
      %v202 = vsel %vm185, %v152, 0
      %v205 = vsel %vm185, %v153, 0
      %v208 = vsel %vm185, %v154, 0
      %v211 = vsel %vm185, %v155, 0
      %v214 = vsel %vm185, %v156, 0
      %v217 = vsel %vm185, %v157, 0
      %v220 = vsel %vm185, %v158, 0
      %v223 = vsel %vm185, %v159, 0
      %v226 = vsel %vm185, %v160, 0
      %v229 = vsel %vm185, %v161, 0
      %v232 = vsel %vm185, %v162, 0
      %v235 = vsel %vm185, %v163, 0
      %v238 = vsel %vm185, %v164, 0
      %v241 = vsel %vm185, %v165, 0
      %v244 = vsel %vm185, %v166, 0
      %v247 = vsel %vm185, %v167, 0
      %v250 = vsel %vm185, %v168, 0
      %v253 = vsel %vm185, %v169, 0
      %v256 = vsel %vm185, %v170, 0
      %v259 = vsel %vm185, %v171, 0
      %v262 = vsel %vm185, %v172, 0
      %v265 = vsel %vm185, %v173, 0
      %v268 = vsel %vm185, %v174, 0
      %v271 = vsel %vm185, %v175, 0
      %v274 = vsel %vm185, %v176, 0
      %v277 = vsel %vm185, %v177, 0
      %v280 = vsel %vm185, %v178, 0
      %282 = vmatprep.subr.mxu0 0.0
      %283 = vmatpush1.msra.mxu0 %v179
      %284 = vmatprep.subr.mxu0 0.0
      %285 = vmatpush1.msra.mxu0 0.0
      %286 = vmatprep.subr.mxu0 0.0
      %287 = vmatpush1.msra.mxu0 0.0
      %288 = vmatprep.subr.mxu0 0.0
      %289 = vmatpush1.msra.mxu0 0.0
      %290 = vmatprep.subr.mxu0 0.0
      %291 = vmatpush1.msra.mxu0 0.0
      %292 = vmatprep.subr.mxu0 0.0
      %293 = vmatpush1.msra.mxu0 0.0
      %294 = vmatprep.subr.mxu0 0.0
      %295 = vmatpush1.msra.mxu0 0.0
      %296 = vmatprep.subr.mxu0 0.0
      %297 = vmatpush1.msra.mxu0 0.0
      %298 = vmatprep.subr.mxu0 0.0
      %299 = vmatpush1.msra.mxu0 0.0
      %300 = vmatprep.subr.mxu0 0.0
      %301 = vmatpush1.msra.mxu0 0.0
      %302 = vmatprep.subr.mxu0 0.0
      %303 = vmatpush1.msra.mxu0 0.0
      %304 = vmatprep.subr.mxu0 0.0
      %305 = vmatpush1.msra.mxu0 0.0
      %306 = vmatprep.subr.mxu0 0.0
      %307 = vmatpush1.msra.mxu0 0.0
      %308 = vmatprep.subr.mxu0 0.0
      %309 = vmatpush1.msra.mxu0 0.0
      %310 = vmatprep.subr.mxu0 0.0
      %311 = vmatpush1.msra.mxu0 0.0
      %312 = vmatprep.subr.mxu0 0.0
      %313 = vmatpush1.msra.mxu0 0.0
      %314 = vmatprep.subr.mxu0 0.0
      %315 = vmatpush1.msra.mxu0 0.0
      %316 = vmatprep.subr.mxu0 0.0
      %317 = vmatpush1.msra.mxu0 0.0
      %318 = vmatprep.subr.mxu0 0.0
      %319 = vmatpush1.msra.mxu0 0.0
      %320 = vmatprep.subr.mxu0 0.0
      %321 = vmatpush1.msra.mxu0 0.0
      %322 = vmatprep.subr.mxu0 0.0
      %323 = vmatpush1.msra.mxu0 0.0
      %324 = vmatprep.subr.mxu0 0.0
      %325 = vmatpush1.msra.mxu0 0.0
      %326 = vmatprep.subr.mxu0 0.0
      %327 = vmatpush1.msra.mxu0 0.0
      %328 = vmatprep.subr.mxu0 0.0
      %329 = vmatpush1.msra.mxu0 0.0
      %330 = vmatprep.subr.mxu0 0.0
      %331 = vmatpush1.msra.mxu0 0.0
      %332 = vmatprep.subr.mxu0 0.0
      %333 = vmatpush1.msra.mxu0 0.0
      %334 = vmatprep.subr.mxu0 0.0
      %335 = vmatpush1.msra.mxu0 0.0
      %336 = vmatprep.subr.mxu0 0.0
      %337 = vmatpush1.msra.mxu0 0.0
      %338 = vmatprep.subr.mxu0 0.0
      %339 = vmatpush1.msra.mxu0 0.0
      %340 = vmatprep.subr.mxu0 0.0
      %341 = vmatpush1.msra.mxu0 0.0
      %342 = vmatprep.subr.mxu0 0.0
      %343 = vmatpush1.msra.mxu0 0.0
      %344 = vmatprep.subr.mxu0 0.0
      %345 = vmatpush1.msra.mxu0 0.0
      %346 = vmatprep.mubr.f32.mxu0 0.0
      %347 = vmatmul.mubr.f32.gmra.mrb[0].mxu0 %v187
      %v348 = vpop.f32.mrb[0].mxu0
      %v349 = vadd.f32 %v184, %v348
      %v350 = vpop.f32.mrb[0].mxu0
      %351 = vmatprep.mubr.f32.mxu0 0.0
      %352 = vmatmul.mubr.f32.gmra.mrb[0].mxu0 %v190
      %v353 = vpop.f32.mrb[0].mxu0
      %v354 = vadd.f32 %v184, %v353
      %v355 = vpop.f32.mrb[0].mxu0
      %356 = vmatprep.mubr.f32.mxu0 0.0
      %357 = vmatmul.mubr.f32.gmra.mrb[0].mxu0 %v193
      %v358 = vpop.f32.mrb[0].mxu0
      %v359 = vadd.f32 %v184, %v358
      %v360 = vpop.f32.mrb[0].mxu0
      %361 = vmatprep.mubr.f32.mxu0 0.0
      %362 = vmatmul.mubr.f32.gmra.mrb[0].mxu0 %v196
      %v363 = vpop.f32.mrb[0].mxu0
      %v364 = vadd.f32 %v184, %v363
      %v365 = vpop.f32.mrb[0].mxu0
      %366 = vmatprep.mubr.f32.mxu0 0.0
      %367 = vmatmul.mubr.f32.gmra.mrb[0].mxu0 %v199
      %v368 = vpop.f32.mrb[0].mxu0
      %v369 = vadd.f32 %v184, %v368
      %v370 = vpop.f32.mrb[0].mxu0
      %371 = vmatprep.mubr.f32.mxu0 0.0
      %372 = vmatmul.mubr.f32.gmra.mrb[0].mxu0 %v202
      %v373 = vpop.f32.mrb[0].mxu0
      %v374 = vadd.f32 %v184, %v373
      %v375 = vpop.f32.mrb[0].mxu0
      %376 = vmatprep.mubr.f32.mxu0 0.0
      %377 = vmatmul.mubr.f32.gmra.mrb[0].mxu0 %v205
      %v378 = vpop.f32.mrb[0].mxu0
      %v379 = vadd.f32 %v184, %v378
      %v380 = vpop.f32.mrb[0].mxu0
      %381 = vmatprep.mubr.f32.mxu0 0.0
      %382 = vmatmul.mubr.f32.gmra.mrb[0].mxu0 %v208
      %v383 = vpop.f32.mrb[0].mxu0
      %v384 = vadd.f32 %v184, %v383
      %v385 = vpop.f32.mrb[0].mxu0
      %386 = vmatprep.mubr.f32.mxu0 0.0
      %387 = vmatmul.mubr.f32.gmra.mrb[0].mxu0 %v211
      %v388 = vpop.f32.mrb[0].mxu0
      %v389 = vadd.f32 %v184, %v388
      %v390 = vpop.f32.mrb[0].mxu0
      %391 = vmatprep.mubr.f32.mxu0 0.0
      %392 = vmatmul.mubr.f32.gmra.mrb[0].mxu0 %v214
      %v393 = vpop.f32.mrb[0].mxu0
      %v394 = vadd.f32 %v184, %v393
      %v395 = vpop.f32.mrb[0].mxu0
      %396 = vmatprep.mubr.f32.mxu0 0.0
      %397 = vmatmul.mubr.f32.gmra.mrb[0].mxu0 %v217
      %v398 = vpop.f32.mrb[0].mxu0
      %v399 = vadd.f32 %v184, %v398
      %v400 = vpop.f32.mrb[0].mxu0
      %401 = vmatprep.mubr.f32.mxu0 0.0
      %402 = vmatmul.mubr.f32.gmra.mrb[0].mxu0 %v220
      %v403 = vpop.f32.mrb[0].mxu0
      %v404 = vadd.f32 %v184, %v403
      %v405 = vpop.f32.mrb[0].mxu0
      %406 = vmatprep.mubr.f32.mxu0 0.0
      %407 = vmatmul.mubr.f32.gmra.mrb[0].mxu0 %v223
      %v408 = vpop.f32.mrb[0].mxu0
      %v409 = vadd.f32 %v184, %v408
      %v410 = vpop.f32.mrb[0].mxu0
      %411 = vmatprep.mubr.f32.mxu0 0.0
      %412 = vmatmul.mubr.f32.gmra.mrb[0].mxu0 %v226
      %v413 = vpop.f32.mrb[0].mxu0
      %v414 = vadd.f32 %v184, %v413
      %v415 = vpop.f32.mrb[0].mxu0
      %416 = vmatprep.mubr.f32.mxu0 0.0
      %417 = vmatmul.mubr.f32.gmra.mrb[0].mxu0 %v229
      %v418 = vpop.f32.mrb[0].mxu0
      %v419 = vadd.f32 %v184, %v418
      %v420 = vpop.f32.mrb[0].mxu0
      %421 = vmatprep.mubr.f32.mxu0 0.0
      %422 = vmatmul.mubr.f32.gmra.mrb[0].mxu0 %v232
      %v423 = vpop.f32.mrb[0].mxu0
      %v424 = vadd.f32 %v184, %v423
      %v425 = vpop.f32.mrb[0].mxu0
      %426 = vmatprep.mubr.f32.mxu0 0.0
      %427 = vmatmul.mubr.f32.gmra.mrb[0].mxu0 %v235
      %v428 = vpop.f32.mrb[0].mxu0
      %v429 = vadd.f32 %v184, %v428
      %v430 = vpop.f32.mrb[0].mxu0
      %431 = vmatprep.mubr.f32.mxu0 0.0
      %432 = vmatmul.mubr.f32.gmra.mrb[0].mxu0 %v238
      %v433 = vpop.f32.mrb[0].mxu0
      %v434 = vadd.f32 %v184, %v433
      %v435 = vpop.f32.mrb[0].mxu0
      %436 = vmatprep.mubr.f32.mxu0 0.0
      %437 = vmatmul.mubr.f32.gmra.mrb[0].mxu0 %v241
      %v438 = vpop.f32.mrb[0].mxu0
      %v439 = vadd.f32 %v184, %v438
      %v440 = vpop.f32.mrb[0].mxu0
      %441 = vmatprep.mubr.f32.mxu0 0.0
      %442 = vmatmul.mubr.f32.gmra.mrb[0].mxu0 %v244
      %v443 = vpop.f32.mrb[0].mxu0
      %v444 = vadd.f32 %v184, %v443
      %v445 = vpop.f32.mrb[0].mxu0
      %446 = vmatprep.mubr.f32.mxu0 0.0
      %447 = vmatmul.mubr.f32.gmra.mrb[0].mxu0 %v247
      %v448 = vpop.f32.mrb[0].mxu0
      %v449 = vadd.f32 %v184, %v448
      %v450 = vpop.f32.mrb[0].mxu0
      %451 = vmatprep.mubr.f32.mxu0 0.0
      %452 = vmatmul.mubr.f32.gmra.mrb[0].mxu0 %v250
      %v453 = vpop.f32.mrb[0].mxu0
      %v454 = vadd.f32 %v184, %v453
      %v455 = vpop.f32.mrb[0].mxu0
      %456 = vmatprep.mubr.f32.mxu0 0.0
      %457 = vmatmul.mubr.f32.gmra.mrb[0].mxu0 %v253
      %v458 = vpop.f32.mrb[0].mxu0
      %v459 = vadd.f32 %v184, %v458
      %v460 = vpop.f32.mrb[0].mxu0
      %461 = vmatprep.mubr.f32.mxu0 0.0
      %462 = vmatmul.mubr.f32.gmra.mrb[0].mxu0 %v256
      %v463 = vpop.f32.mrb[0].mxu0
      %v464 = vadd.f32 %v184, %v463
      %v465 = vpop.f32.mrb[0].mxu0
      %466 = vmatprep.mubr.f32.mxu0 0.0
      %467 = vmatmul.mubr.f32.gmra.mrb[0].mxu0 %v259
      %v468 = vpop.f32.mrb[0].mxu0
      %v469 = vadd.f32 %v184, %v468
      %v470 = vpop.f32.mrb[0].mxu0
      %471 = vmatprep.mubr.f32.mxu0 0.0
      %472 = vmatmul.mubr.f32.gmra.mrb[0].mxu0 %v262
      %v473 = vpop.f32.mrb[0].mxu0
      %v474 = vadd.f32 %v184, %v473
      %v475 = vpop.f32.mrb[0].mxu0
      %476 = vmatprep.mubr.f32.mxu0 0.0
      %477 = vmatmul.mubr.f32.gmra.mrb[0].mxu0 %v265
      %v478 = vpop.f32.mrb[0].mxu0
      %v479 = vadd.f32 %v184, %v478
      %v480 = vpop.f32.mrb[0].mxu0
      %481 = vmatprep.mubr.f32.mxu0 0.0
      %482 = vmatmul.mubr.f32.gmra.mrb[0].mxu0 %v268
      %v483 = vpop.f32.mrb[0].mxu0
      %v484 = vadd.f32 %v184, %v483
      %v485 = vpop.f32.mrb[0].mxu0
      %486 = vmatprep.mubr.f32.mxu0 0.0
      %487 = vmatmul.mubr.f32.gmra.mrb[0].mxu0 %v271
      %v488 = vpop.f32.mrb[0].mxu0
      %v489 = vadd.f32 %v184, %v488
      %v490 = vpop.f32.mrb[0].mxu0
      %491 = vmatprep.mubr.f32.mxu0 0.0
      %492 = vmatmul.mubr.f32.gmra.mrb[0].mxu0 %v274
      %v493 = vpop.f32.mrb[0].mxu0
      %v494 = vadd.f32 %v184, %v493
      %v495 = vpop.f32.mrb[0].mxu0
      %496 = vmatprep.mubr.f32.mxu0 0.0
      %497 = vmatmul.mubr.f32.gmra.mrb[0].mxu0 %v277
      %v498 = vpop.f32.mrb[0].mxu0
      %v499 = vadd.f32 %v184, %v498
      %v500 = vpop.f32.mrb[0].mxu0
      %501 = vmatprep.mubr.f32.mxu0 0.0
      %502 = vmatmul.mubr.f32.gmra.mrb[0].mxu0 %v280
      %v503 = vpop.f32.mrb[0].mxu0
      %v504 = vadd.f32 %v184, %v503
      %v505 = vpop.f32.mrb[0].mxu0
      %506 = vdwg.mxu0
      %v507 = vmul.f32 %v349, 0.2
      %v508 = vmul.f32 %v354, 0.2
      %v509 = vmul.f32 %v359, 0.2
      %v510 = vmul.f32 %v364, 0.2
      %v511 = vmul.f32 %v369, 0.2
      %v512 = vmul.f32 %v374, 0.2
      %v513 = vmul.f32 %v379, 0.2
      %v514 = vmul.f32 %v384, 0.2
      %v515 = vmul.f32 %v389, 0.2
      %v516 = vmul.f32 %v394, 0.2
      %v517 = vmul.f32 %v399, 0.2
      %v518 = vmul.f32 %v404, 0.2
      %v519 = vmul.f32 %v409, 0.2
      %v520 = vmul.f32 %v414, 0.2
      %v521 = vmul.f32 %v419, 0.2
      %v522 = vmul.f32 %v424, 0.2
      %v523 = vmul.f32 %v429, 0.2
      %v524 = vmul.f32 %v434, 0.2
      %v525 = vmul.f32 %v439, 0.2
      %v526 = vmul.f32 %v444, 0.2
      %v527 = vmul.f32 %v449, 0.2
      %v528 = vmul.f32 %v454, 0.2
      %v529 = vmul.f32 %v459, 0.2
      %v530 = vmul.f32 %v464, 0.2
      %v531 = vmul.f32 %v469, 0.2
      %v532 = vmul.f32 %v474, 0.2
      %v533 = vmul.f32 %v479, 0.2
      %v534 = vmul.f32 %v484, 0.2
      %v535 = vmul.f32 %v489, 0.2
      %v536 = vmul.f32 %v494, 0.2
      %v537 = vmul.f32 %v499, 0.2
      %v538 = vmul.f32 %v504, 0.2
      %v539 = vmax.f32 %v349, %v507
      %v540 = vmax.f32 %v354, %v508
      %v541 = vmax.f32 %v359, %v509
      %v542 = vmax.f32 %v364, %v510
      %v543 = vmax.f32 %v369, %v511
      %v544 = vmax.f32 %v374, %v512
      %v545 = vmax.f32 %v379, %v513
      %v546 = vmax.f32 %v384, %v514
      %v547 = vmax.f32 %v389, %v515
      %v548 = vmax.f32 %v394, %v516
      %v549 = vmax.f32 %v399, %v517
      %v550 = vmax.f32 %v404, %v518
      %v551 = vmax.f32 %v409, %v519
      %v552 = vmax.f32 %v414, %v520
      %v553 = vmax.f32 %v419, %v521
      %v554 = vmax.f32 %v424, %v522
      %v555 = vmax.f32 %v429, %v523
      %v556 = vmax.f32 %v434, %v524
      %v557 = vmax.f32 %v439, %v525
      %v558 = vmax.f32 %v444, %v526
      %v559 = vmax.f32 %v449, %v527
      %v560 = vmax.f32 %v454, %v528
      %v561 = vmax.f32 %v459, %v529
      %v562 = vmax.f32 %v464, %v530
      %v563 = vmax.f32 %v469, %v531
      %v564 = vmax.f32 %v474, %v532
      %v565 = vmax.f32 %v479, %v533
      %v566 = vmax.f32 %v484, %v534
      %v567 = vmax.f32 %v489, %v535
      %v568 = vmax.f32 %v494, %v536
      %v569 = vmax.f32 %v499, %v537
      %v570 = vmax.f32 %v504, %v538
      %v571 = vld [vmem:[%s1 + $0x8] sm:$0xff]
      %v572 = vld [vmem:[%s1 + $0x10] sm:$0xff]
      %v573 = vld [vmem:[%s1 + $0x18] sm:$0xff]
      %v574 = vld [vmem:[%s1 + $0x20] sm:$0xff]
      %v575 = vld [vmem:[%s1 + $0x28] sm:$0xff]
      %v576 = vld [vmem:[%s1 + $0x30] sm:$0xff]
      %v577 = vld [vmem:[%s1 + $0x38] sm:$0xff]
      %v578 = vld [vmem:[%s1 + $0x40] sm:$0xff]
      %580 = vrot.lane.b32.xlu0 %v184, 64
      %v581 = vpop.permute.xlu0 %580
      %vm583 = vcmask 523264
      %v585 = vsel %vm583, %v539, 0
      %v588 = vsel %vm583, %v540, 0
      %v591 = vsel %vm583, %v541, 0
      %v594 = vsel %vm583, %v542, 0
      %v597 = vsel %vm583, %v543, 0
      %v600 = vsel %vm583, %v544, 0
      %v603 = vsel %vm583, %v545, 0
      %v606 = vsel %vm583, %v546, 0
      %v609 = vsel %vm583, %v547, 0
      %v612 = vsel %vm583, %v548, 0
      %v615 = vsel %vm583, %v549, 0
      %v618 = vsel %vm583, %v550, 0
      %v621 = vsel %vm583, %v551, 0
      %v624 = vsel %vm583, %v552, 0
      %v627 = vsel %vm583, %v553, 0
      %v630 = vsel %vm583, %v554, 0
      %v633 = vsel %vm583, %v555, 0
      %v636 = vsel %vm583, %v556, 0
      %v639 = vsel %vm583, %v557, 0
      %v642 = vsel %vm583, %v558, 0
      %v645 = vsel %vm583, %v559, 0
      %v648 = vsel %vm583, %v560, 0
      %v651 = vsel %vm583, %v561, 0
      %v654 = vsel %vm583, %v562, 0
      %v657 = vsel %vm583, %v563, 0
      %v660 = vsel %vm583, %v564, 0
      %v663 = vsel %vm583, %v565, 0
      %v666 = vsel %vm583, %v566, 0
      %v669 = vsel %vm583, %v567, 0
      %v672 = vsel %vm583, %v568, 0
      %v675 = vsel %vm583, %v569, 0
      %v678 = vsel %vm583, %v570, 0
      %680 = vmatprep.subr.mxu0 0.0
      %681 = vmatpush1.msra.mxu0 %v571
      %682 = vmatprep.subr.mxu0 0.0
      %683 = vmatpush1.msra.mxu0 %v572
      %684 = vmatprep.subr.mxu0 0.0
      %685 = vmatpush1.msra.mxu0 %v573
      %686 = vmatprep.subr.mxu0 0.0
      %687 = vmatpush1.msra.mxu0 %v574
      %688 = vmatprep.subr.mxu0 0.0
      %689 = vmatpush1.msra.mxu0 %v575
      %690 = vmatprep.subr.mxu0 0.0
      %691 = vmatpush1.msra.mxu0 %v576
      %692 = vmatprep.subr.mxu0 0.0
      %693 = vmatpush1.msra.mxu0 %v577
      %694 = vmatprep.subr.mxu0 0.0
      %695 = vmatpush1.msra.mxu0 %v578
      %696 = vmatprep.subr.mxu0 0.0
      %697 = vmatpush1.msra.mxu0 0.0
      %698 = vmatprep.subr.mxu0 0.0
      %699 = vmatpush1.msra.mxu0 0.0
      %700 = vmatprep.subr.mxu0 0.0
      %701 = vmatpush1.msra.mxu0 0.0
      %702 = vmatprep.subr.mxu0 0.0
      %703 = vmatpush1.msra.mxu0 0.0
      %704 = vmatprep.subr.mxu0 0.0
      %705 = vmatpush1.msra.mxu0 0.0
      %706 = vmatprep.subr.mxu0 0.0
      %707 = vmatpush1.msra.mxu0 0.0
      %708 = vmatprep.subr.mxu0 0.0
      %709 = vmatpush1.msra.mxu0 0.0
      %710 = vmatprep.subr.mxu0 0.0
      %711 = vmatpush1.msra.mxu0 0.0
      %712 = vmatprep.subr.mxu0 0.0
      %713 = vmatpush1.msra.mxu0 0.0
      %714 = vmatprep.subr.mxu0 0.0
      %715 = vmatpush1.msra.mxu0 0.0
      %716 = vmatprep.subr.mxu0 0.0
      %717 = vmatpush1.msra.mxu0 0.0
      %718 = vmatprep.subr.mxu0 0.0
      %719 = vmatpush1.msra.mxu0 0.0
      %720 = vmatprep.subr.mxu0 0.0
      %721 = vmatpush1.msra.mxu0 0.0
      %722 = vmatprep.subr.mxu0 0.0
      %723 = vmatpush1.msra.mxu0 0.0
      %724 = vmatprep.subr.mxu0 0.0
      %725 = vmatpush1.msra.mxu0 0.0
      %726 = vmatprep.subr.mxu0 0.0
      %727 = vmatpush1.msra.mxu0 0.0
      %728 = vmatprep.subr.mxu0 0.0
      %729 = vmatpush1.msra.mxu0 0.0
      %730 = vmatprep.subr.mxu0 0.0
      %731 = vmatpush1.msra.mxu0 0.0
      %732 = vmatprep.subr.mxu0 0.0
      %733 = vmatpush1.msra.mxu0 0.0
      %734 = vmatprep.subr.mxu0 0.0
      %735 = vmatpush1.msra.mxu0 0.0
      %736 = vmatprep.subr.mxu0 0.0
      %737 = vmatpush1.msra.mxu0 0.0
      %738 = vmatprep.subr.mxu0 0.0
      %739 = vmatpush1.msra.mxu0 0.0
      %740 = vmatprep.subr.mxu0 0.0
      %741 = vmatpush1.msra.mxu0 0.0
      %742 = vmatprep.subr.mxu0 0.0
      %743 = vmatpush1.msra.mxu0 0.0
      %744 = vmatprep.mubr.f32.mxu0 0.0
      %745 = vmatmul.mubr.f32.gmra.mrb[0].mxu0 %v585
      %v746 = vpop.f32.mrb[0].mxu0
      %v747 = vadd.f32 %v581, %v746
      %v748 = vpop.f32.mrb[0].mxu0
      %749 = vmatprep.mubr.f32.mxu0 0.0
      %750 = vmatmul.mubr.f32.gmra.mrb[0].mxu0 %v588
      %v751 = vpop.f32.mrb[0].mxu0
      %v752 = vadd.f32 %v581, %v751
      %v753 = vpop.f32.mrb[0].mxu0
      %754 = vmatprep.mubr.f32.mxu0 0.0
      %755 = vmatmul.mubr.f32.gmra.mrb[0].mxu0 %v591
      %v756 = vpop.f32.mrb[0].mxu0
      %v757 = vadd.f32 %v581, %v756
      %v758 = vpop.f32.mrb[0].mxu0
      %759 = vmatprep.mubr.f32.mxu0 0.0
      %760 = vmatmul.mubr.f32.gmra.mrb[0].mxu0 %v594
      %v761 = vpop.f32.mrb[0].mxu0
      %v762 = vadd.f32 %v581, %v761
      %v763 = vpop.f32.mrb[0].mxu0
      %764 = vmatprep.mubr.f32.mxu0 0.0
      %765 = vmatmul.mubr.f32.gmra.mrb[0].mxu0 %v597
      %v766 = vpop.f32.mrb[0].mxu0
      %v767 = vadd.f32 %v581, %v766
      %v768 = vpop.f32.mrb[0].mxu0
      %769 = vmatprep.mubr.f32.mxu0 0.0
      %770 = vmatmul.mubr.f32.gmra.mrb[0].mxu0 %v600
      %v771 = vpop.f32.mrb[0].mxu0
      %v772 = vadd.f32 %v581, %v771
      %v773 = vpop.f32.mrb[0].mxu0
      %774 = vmatprep.mubr.f32.mxu0 0.0
      %775 = vmatmul.mubr.f32.gmra.mrb[0].mxu0 %v603
      %v776 = vpop.f32.mrb[0].mxu0
      %v777 = vadd.f32 %v581, %v776
      %v778 = vpop.f32.mrb[0].mxu0
      %779 = vmatprep.mubr.f32.mxu0 0.0
      %780 = vmatmul.mubr.f32.gmra.mrb[0].mxu0 %v606
      %v781 = vpop.f32.mrb[0].mxu0
      %v782 = vadd.f32 %v581, %v781
      %v783 = vpop.f32.mrb[0].mxu0
      %784 = vmatprep.mubr.f32.mxu0 0.0
      %785 = vmatmul.mubr.f32.gmra.mrb[0].mxu0 %v609
      %v786 = vpop.f32.mrb[0].mxu0
      %v787 = vadd.f32 %v581, %v786
      %v788 = vpop.f32.mrb[0].mxu0
      %789 = vmatprep.mubr.f32.mxu0 0.0
      %790 = vmatmul.mubr.f32.gmra.mrb[0].mxu0 %v612
      %v791 = vpop.f32.mrb[0].mxu0
      %v792 = vadd.f32 %v581, %v791
      %v793 = vpop.f32.mrb[0].mxu0
      %794 = vmatprep.mubr.f32.mxu0 0.0
      %795 = vmatmul.mubr.f32.gmra.mrb[0].mxu0 %v615
      %v796 = vpop.f32.mrb[0].mxu0
      %v797 = vadd.f32 %v581, %v796
      %v798 = vpop.f32.mrb[0].mxu0
      %799 = vmatprep.mubr.f32.mxu0 0.0
      %800 = vmatmul.mubr.f32.gmra.mrb[0].mxu0 %v618
      %v801 = vpop.f32.mrb[0].mxu0
      %v802 = vadd.f32 %v581, %v801
      %v803 = vpop.f32.mrb[0].mxu0
      %804 = vmatprep.mubr.f32.mxu0 0.0
      %805 = vmatmul.mubr.f32.gmra.mrb[0].mxu0 %v621
      %v806 = vpop.f32.mrb[0].mxu0
      %v807 = vadd.f32 %v581, %v806
      %v808 = vpop.f32.mrb[0].mxu0
      %809 = vmatprep.mubr.f32.mxu0 0.0
      %810 = vmatmul.mubr.f32.gmra.mrb[0].mxu0 %v624
      %v811 = vpop.f32.mrb[0].mxu0
      %v812 = vadd.f32 %v581, %v811
      %v813 = vpop.f32.mrb[0].mxu0
      %814 = vmatprep.mubr.f32.mxu0 0.0
      %815 = vmatmul.mubr.f32.gmra.mrb[0].mxu0 %v627
      %v816 = vpop.f32.mrb[0].mxu0
      %v817 = vadd.f32 %v581, %v816
      %v818 = vpop.f32.mrb[0].mxu0
      %819 = vmatprep.mubr.f32.mxu0 0.0
      %820 = vmatmul.mubr.f32.gmra.mrb[0].mxu0 %v630
      %v821 = vpop.f32.mrb[0].mxu0
      %v822 = vadd.f32 %v581, %v821
      %v823 = vpop.f32.mrb[0].mxu0
      %824 = vmatprep.mubr.f32.mxu0 0.0
      %825 = vmatmul.mubr.f32.gmra.mrb[0].mxu0 %v633
      %v826 = vpop.f32.mrb[0].mxu0
      %v827 = vadd.f32 %v581, %v826
      %v828 = vpop.f32.mrb[0].mxu0
      %829 = vmatprep.mubr.f32.mxu0 0.0
      %830 = vmatmul.mubr.f32.gmra.mrb[0].mxu0 %v636
      %v831 = vpop.f32.mrb[0].mxu0
      %v832 = vadd.f32 %v581, %v831
      %v833 = vpop.f32.mrb[0].mxu0
      %834 = vmatprep.mubr.f32.mxu0 0.0
      %835 = vmatmul.mubr.f32.gmra.mrb[0].mxu0 %v639
      %v836 = vpop.f32.mrb[0].mxu0
      %v837 = vadd.f32 %v581, %v836
      %v838 = vpop.f32.mrb[0].mxu0
      %839 = vmatprep.mubr.f32.mxu0 0.0
      %840 = vmatmul.mubr.f32.gmra.mrb[0].mxu0 %v642
      %v841 = vpop.f32.mrb[0].mxu0
      %v842 = vadd.f32 %v581, %v841
      %v843 = vpop.f32.mrb[0].mxu0
      %844 = vmatprep.mubr.f32.mxu0 0.0
      %845 = vmatmul.mubr.f32.gmra.mrb[0].mxu0 %v645
      %v846 = vpop.f32.mrb[0].mxu0
      %v847 = vadd.f32 %v581, %v846
      %v848 = vpop.f32.mrb[0].mxu0
      %849 = vmatprep.mubr.f32.mxu0 0.0
      %850 = vmatmul.mubr.f32.gmra.mrb[0].mxu0 %v648
      %v851 = vpop.f32.mrb[0].mxu0
      %v852 = vadd.f32 %v581, %v851
      %v853 = vpop.f32.mrb[0].mxu0
      %854 = vmatprep.mubr.f32.mxu0 0.0
      %855 = vmatmul.mubr.f32.gmra.mrb[0].mxu0 %v651
      %v856 = vpop.f32.mrb[0].mxu0
      %v857 = vadd.f32 %v581, %v856
      %v858 = vpop.f32.mrb[0].mxu0
      %859 = vmatprep.mubr.f32.mxu0 0.0
      %860 = vmatmul.mubr.f32.gmra.mrb[0].mxu0 %v654
      %v861 = vpop.f32.mrb[0].mxu0
      %v862 = vadd.f32 %v581, %v861
      %v863 = vpop.f32.mrb[0].mxu0
      %864 = vmatprep.mubr.f32.mxu0 0.0
      %865 = vmatmul.mubr.f32.gmra.mrb[0].mxu0 %v657
      %v866 = vpop.f32.mrb[0].mxu0
      %v867 = vadd.f32 %v581, %v866
      %v868 = vpop.f32.mrb[0].mxu0
      %869 = vmatprep.mubr.f32.mxu0 0.0
      %870 = vmatmul.mubr.f32.gmra.mrb[0].mxu0 %v660
      %v871 = vpop.f32.mrb[0].mxu0
      %v872 = vadd.f32 %v581, %v871
      %v873 = vpop.f32.mrb[0].mxu0
      %874 = vmatprep.mubr.f32.mxu0 0.0
      %875 = vmatmul.mubr.f32.gmra.mrb[0].mxu0 %v663
      %v876 = vpop.f32.mrb[0].mxu0
      %v877 = vadd.f32 %v581, %v876
      %v878 = vpop.f32.mrb[0].mxu0
      %879 = vmatprep.mubr.f32.mxu0 0.0
      %880 = vmatmul.mubr.f32.gmra.mrb[0].mxu0 %v666
      %v881 = vpop.f32.mrb[0].mxu0
      %v882 = vadd.f32 %v581, %v881
      %v883 = vpop.f32.mrb[0].mxu0
      %884 = vmatprep.mubr.f32.mxu0 0.0
      %885 = vmatmul.mubr.f32.gmra.mrb[0].mxu0 %v669
      %v886 = vpop.f32.mrb[0].mxu0
      %v887 = vadd.f32 %v581, %v886
      %v888 = vpop.f32.mrb[0].mxu0
      %889 = vmatprep.mubr.f32.mxu0 0.0
      %890 = vmatmul.mubr.f32.gmra.mrb[0].mxu0 %v672
      %v891 = vpop.f32.mrb[0].mxu0
      %v892 = vadd.f32 %v581, %v891
      %v893 = vpop.f32.mrb[0].mxu0
      %894 = vmatprep.mubr.f32.mxu0 0.0
      %895 = vmatmul.mubr.f32.gmra.mrb[0].mxu0 %v675
      %v896 = vpop.f32.mrb[0].mxu0
      %v897 = vadd.f32 %v581, %v896
      %v898 = vpop.f32.mrb[0].mxu0
      %899 = vmatprep.mubr.f32.mxu0 0.0
      %900 = vmatmul.mubr.f32.gmra.mrb[0].mxu0 %v678
      %v901 = vpop.f32.mrb[0].mxu0
      %v902 = vadd.f32 %v581, %v901
      %v903 = vpop.f32.mrb[0].mxu0
      %904 = vdwg.mxu0
      %v905 = vand.u32 2147483647, %v747
      %vm906 = vcmp.le.f32.partialorder %v905, 0.7853982
      %vm907 = vcmp.lt.s32.totalorder %v747, 0
      %v908 = vand.u32 %v747, 2139095040
      %v909 = vshrl.u32 %v908, 23
      %v910 = vsub.s32 %v909, 127
      %v911 = vand.u32 2147483647, %v747
      %v912 = vand.u32 %v911, 8388607
      %v913 = vor.u32 %v912, 8388608
      %v914 = vsub.s32 0, %v913
      %v915 = vadd.s32 %v910, 1
      %vm916 = vcmp.gt.s32.totalorder %v915, 0
      %v917 = vsel %vm916, %v915, 0
      %v918 = vshrl.u32 %v917, 5
      %v919 = vand.u32 %v917, 31
      %v920 = vsub.s32 32, %v919
      %v921 = vshrl.u32 683565275, %v920
      %v922 = vshll.u32 683565275, %v919
      %v923 = vshrl.u32 2475754826, %v920
      %v924 = vor.u32 %v922, %v923
      %v925 = vshll.u32 2475754826, %v919
      %v926 = vshrl.u32 2131351028, %v920
      %v927 = vor.u32 %v925, %v926
      %v928 = vshll.u32 2131351028, %v919
      %v929 = vshrl.u32 2102212464, %v920
      %v930 = vor.u32 %v928, %v929
      %v931 = vshll.u32 2102212464, %v919
      %v932 = vshrl.u32 920167782, %v920
      %v933 = vor.u32 %v931, %v932
      %v934 = vshll.u32 920167782, %v919
      %v935 = vshrl.u32 1326507024, %v920
      %v936 = vor.u32 %v934, %v935
      %vm937 = vcmp.lt.s32.totalorder %v918, 1
      %vm938 = vcmp.lt.s32.totalorder %v918, 2
      %vm939 = vcmp.lt.s32.totalorder %v918, 3
      %vm940 = vcmp.lt.s32.totalorder %v918, 4
      %v941 = vsel %vm937, %v921, %v924
      %v942 = vsel %vm940, %v930, 2102212464
      %v943 = vsel %vm939, %v927, %v942
      %v944 = vsel %vm938, %v941, %v943
      %v945 = vsel %vm937, %v924, %v927
      %v946 = vsel %vm940, %v933, 920167782
      %v947 = vsel %vm939, %v930, %v946
      %v948 = vsel %vm938, %v945, %v947
      %v949 = vsel %vm937, %v927, %v930
      %v950 = vsel %vm940, %v936, 1326507024
      %v951 = vsel %vm939, %v933, %v950
      %v952 = vsel %vm938, %v949, %v951
      %v953 = vshll.u32 %v913, 8
      %v954 = vmul.u32.u64.compose %v953, %v952
      %v955 = vextract.low.u32 %v954
      %v956 = vextract.high.u32 %v954
      %v957 = vmul.u32.u64.compose %v953, %v948
      %v958 = vextract.low.u32 %v957
      %v959 = vextract.high.u32 %v957
      %v960 = vmul.u32 %v953, %v944
      %v961 = vadd.s32 %v956, %v958
      %vm962 = vc.u32 %v956, %v958
      %v963 = vadd.s32 %v959, 1
      %v964 = vsel %vm962, %v963, %v959
      %v965 = vadd.s32 %v960, %v964
      %v966 = vadd.s32 %v965, 536870912
      %v967 = vshrl.u32 %v966, 30
      %v968 = vshll.u32 %v967, 30
      %v969 = vsub.s32 %v965, %v968
      %vm970 = vcmp.lt.s32.totalorder %v969, 0
      %v971 = vsub.s32 0, %v969
      %v972 = vsel %vm970, %v971, %v969
      %v973 = vclz %v972
      %v974 = vsub.s32 %v973, 2
      %vm975 = vcmp.gt.s32.totalorder 0, %v974
      %v976 = vsel %vm975, 0, %v974
      %v977 = vsub.s32 32, %v976
      %v978 = vshll.u32 %v969, %v976
      %v979 = vshrl.u32 %v961, %v977
      %v980 = vor.u32 %v978, %v979
      %v981 = vsub.s32 4294967266, %v976
      %v982 = vadd.s32 %v981, 127
      %v983 = vshll.u32 %v982, 23
      %v984 = vor.u32 4788187, %v983
      %v985 = vand.u32 2147483647, %v984
      %v987 = vcvt.s32.f32 %v980
      %v988 = vmul.f32 %v987, %v985
      %v989 = vxor.u32 %v988, 2147483648
      %v990 = vsel %vm907, %v989, %v988
      %v991 = vsub.s32 4, %v967
      %v992 = vsel %vm907, %v991, %v967
      %v993 = vsel %vm906, %v747, %v990
      %v994 = vsel %vm906, 0, %v992
      %v995 = vcosq.f32.pop %v993
      %v996 = vsinq.f32.pop %v993
      %vm997 = vweird.f32 %v747
      %v998 = vand.u32 %v994, 3
      %vm999 = vcmp.lt.s32.totalorder %v998, 2
      %vm1000 = vcmp.eq.s32.totalorder %v998, 0
      %v1001 = vxor.u32 %v996, 2147483648
      %v1002 = vsel %vm1000, %v995, %v1001
      %vm1003 = vcmp.eq.s32.totalorder %v998, 2
      %v1004 = vxor.u32 %v995, 2147483648
      %v1005 = vsel %vm1003, %v1004, %v996
      %v1006 = vsel %vm999, %v1002, %v1005
      %v1007 = vsel %vm997, nan, %v1006
      %v1008 = vand.u32 2147483647, %v752
      %vm1009 = vcmp.le.f32.partialorder %v1008, 0.7853982
      %vm1010 = vcmp.lt.s32.totalorder %v752, 0
      %v1011 = vand.u32 %v752, 2139095040
      %v1012 = vshrl.u32 %v1011, 23
      %v1013 = vsub.s32 %v1012, 127
      %v1014 = vand.u32 2147483647, %v752
      %v1015 = vand.u32 %v1014, 8388607
      %v1016 = vor.u32 %v1015, 8388608
      %v1017 = vsub.s32 0, %v1016
      %v1018 = vadd.s32 %v1013, 1
      %vm1019 = vcmp.gt.s32.totalorder %v1018, 0
      %v1020 = vsel %vm1019, %v1018, 0
      %v1021 = vshrl.u32 %v1020, 5
      %v1022 = vand.u32 %v1020, 31
      %v1023 = vsub.s32 32, %v1022
      %v1024 = vshrl.u32 683565275, %v1023
      %v1025 = vshll.u32 683565275, %v1022
      %v1026 = vshrl.u32 2475754826, %v1023
      %v1027 = vor.u32 %v1025, %v1026
      %v1028 = vshll.u32 2475754826, %v1022
      %v1029 = vshrl.u32 2131351028, %v1023
      %v1030 = vor.u32 %v1028, %v1029
      %v1031 = vshll.u32 2131351028, %v1022
      %v1032 = vshrl.u32 2102212464, %v1023
      %v1033 = vor.u32 %v1031, %v1032
      %v1034 = vshll.u32 2102212464, %v1022
      %v1035 = vshrl.u32 920167782, %v1023
      %v1036 = vor.u32 %v1034, %v1035
      %v1037 = vshll.u32 920167782, %v1022
      %v1038 = vshrl.u32 1326507024, %v1023
      %v1039 = vor.u32 %v1037, %v1038
      %vm1040 = vcmp.lt.s32.totalorder %v1021, 1
      %vm1041 = vcmp.lt.s32.totalorder %v1021, 2
      %vm1042 = vcmp.lt.s32.totalorder %v1021, 3
      %vm1043 = vcmp.lt.s32.totalorder %v1021, 4
      %v1044 = vsel %vm1040, %v1024, %v1027
      %v1045 = vsel %vm1043, %v1033, 2102212464
      %v1046 = vsel %vm1042, %v1030, %v1045
      %v1047 = vsel %vm1041, %v1044, %v1046
      %v1048 = vsel %vm1040, %v1027, %v1030
      %v1049 = vsel %vm1043, %v1036, 920167782
      %v1050 = vsel %vm1042, %v1033, %v1049
      %v1051 = vsel %vm1041, %v1048, %v1050
      %v1052 = vsel %vm1040, %v1030, %v1033
      %v1053 = vsel %vm1043, %v1039, 1326507024
      %v1054 = vsel %vm1042, %v1036, %v1053
      %v1055 = vsel %vm1041, %v1052, %v1054
      %v1056 = vshll.u32 %v1016, 8
      %v1057 = vmul.u32.u64.compose %v1056, %v1055
      %v1058 = vextract.low.u32 %v1057
      %v1059 = vextract.high.u32 %v1057
      %v1060 = vmul.u32.u64.compose %v1056, %v1051
      %v1061 = vextract.low.u32 %v1060
      %v1062 = vextract.high.u32 %v1060
      %v1063 = vmul.u32 %v1056, %v1047
      %v1064 = vadd.s32 %v1059, %v1061
      %vm1065 = vc.u32 %v1059, %v1061
      %v1066 = vadd.s32 %v1062, 1
      %v1067 = vsel %vm1065, %v1066, %v1062
      %v1068 = vadd.s32 %v1063, %v1067
      %v1069 = vadd.s32 %v1068, 536870912
      %v1070 = vshrl.u32 %v1069, 30
      %v1071 = vshll.u32 %v1070, 30
      %v1072 = vsub.s32 %v1068, %v1071
      %vm1073 = vcmp.lt.s32.totalorder %v1072, 0
      %v1074 = vsub.s32 0, %v1072
      %v1075 = vsel %vm1073, %v1074, %v1072
      %v1076 = vclz %v1075
      %v1077 = vsub.s32 %v1076, 2
      %vm1078 = vcmp.gt.s32.totalorder 0, %v1077
      %v1079 = vsel %vm1078, 0, %v1077
      %v1080 = vsub.s32 32, %v1079
      %v1081 = vshll.u32 %v1072, %v1079
      %v1082 = vshrl.u32 %v1064, %v1080
      %v1083 = vor.u32 %v1081, %v1082
      %v1084 = vsub.s32 4294967266, %v1079
      %v1085 = vadd.s32 %v1084, 127
      %v1086 = vshll.u32 %v1085, 23
      %v1087 = vor.u32 4788187, %v1086
      %v1088 = vand.u32 2147483647, %v1087
      %v1090 = vcvt.s32.f32 %v1083
      %v1091 = vmul.f32 %v1090, %v1088
      %v1092 = vxor.u32 %v1091, 2147483648
      %v1093 = vsel %vm1010, %v1092, %v1091
      %v1094 = vsub.s32 4, %v1070
      %v1095 = vsel %vm1010, %v1094, %v1070
      %v1096 = vsel %vm1009, %v752, %v1093
      %v1097 = vsel %vm1009, 0, %v1095
      %v1098 = vcosq.f32.pop %v1096
      %v1099 = vsinq.f32.pop %v1096
      %vm1100 = vweird.f32 %v752
      %v1101 = vand.u32 %v1097, 3
      %vm1102 = vcmp.lt.s32.totalorder %v1101, 2
      %vm1103 = vcmp.eq.s32.totalorder %v1101, 0
      %v1104 = vxor.u32 %v1099, 2147483648
      %v1105 = vsel %vm1103, %v1098, %v1104
      %vm1106 = vcmp.eq.s32.totalorder %v1101, 2
      %v1107 = vxor.u32 %v1098, 2147483648
      %v1108 = vsel %vm1106, %v1107, %v1099
      %v1109 = vsel %vm1102, %v1105, %v1108
      %v1110 = vsel %vm1100, nan, %v1109
      %v1111 = vand.u32 2147483647, %v757
      %vm1112 = vcmp.le.f32.partialorder %v1111, 0.7853982
      %vm1113 = vcmp.lt.s32.totalorder %v757, 0
      %v1114 = vand.u32 %v757, 2139095040
      %v1115 = vshrl.u32 %v1114, 23
      %v1116 = vsub.s32 %v1115, 127
      %v1117 = vand.u32 2147483647, %v757
      %v1118 = vand.u32 %v1117, 8388607
      %v1119 = vor.u32 %v1118, 8388608
      %v1120 = vsub.s32 0, %v1119
      %v1121 = vadd.s32 %v1116, 1
      %vm1122 = vcmp.gt.s32.totalorder %v1121, 0
      %v1123 = vsel %vm1122, %v1121, 0
      %v1124 = vshrl.u32 %v1123, 5
      %v1125 = vand.u32 %v1123, 31
      %v1126 = vsub.s32 32, %v1125
      %v1127 = vshrl.u32 683565275, %v1126
      %v1128 = vshll.u32 683565275, %v1125
      %v1129 = vshrl.u32 2475754826, %v1126
      %v1130 = vor.u32 %v1128, %v1129
      %v1131 = vshll.u32 2475754826, %v1125
      %v1132 = vshrl.u32 2131351028, %v1126
      %v1133 = vor.u32 %v1131, %v1132
      %v1134 = vshll.u32 2131351028, %v1125
      %v1135 = vshrl.u32 2102212464, %v1126
      %v1136 = vor.u32 %v1134, %v1135
      %v1137 = vshll.u32 2102212464, %v1125
      %v1138 = vshrl.u32 920167782, %v1126
      %v1139 = vor.u32 %v1137, %v1138
      %v1140 = vshll.u32 920167782, %v1125
      %v1141 = vshrl.u32 1326507024, %v1126
      %v1142 = vor.u32 %v1140, %v1141
      %vm1143 = vcmp.lt.s32.totalorder %v1124, 1
      %vm1144 = vcmp.lt.s32.totalorder %v1124, 2
      %vm1145 = vcmp.lt.s32.totalorder %v1124, 3
      %vm1146 = vcmp.lt.s32.totalorder %v1124, 4
      %v1147 = vsel %vm1143, %v1127, %v1130
      %v1148 = vsel %vm1146, %v1136, 2102212464
      %v1149 = vsel %vm1145, %v1133, %v1148
      %v1150 = vsel %vm1144, %v1147, %v1149
      %v1151 = vsel %vm1143, %v1130, %v1133
      %v1152 = vsel %vm1146, %v1139, 920167782
      %v1153 = vsel %vm1145, %v1136, %v1152
      %v1154 = vsel %vm1144, %v1151, %v1153
      %v1155 = vsel %vm1143, %v1133, %v1136
      %v1156 = vsel %vm1146, %v1142, 1326507024
      %v1157 = vsel %vm1145, %v1139, %v1156
      %v1158 = vsel %vm1144, %v1155, %v1157
      %v1159 = vshll.u32 %v1119, 8
      %v1160 = vmul.u32.u64.compose %v1159, %v1158
      %v1161 = vextract.low.u32 %v1160
      %v1162 = vextract.high.u32 %v1160
      %v1163 = vmul.u32.u64.compose %v1159, %v1154
      %v1164 = vextract.low.u32 %v1163
      %v1165 = vextract.high.u32 %v1163
      %v1166 = vmul.u32 %v1159, %v1150
      %v1167 = vadd.s32 %v1162, %v1164
      %vm1168 = vc.u32 %v1162, %v1164
      %v1169 = vadd.s32 %v1165, 1
      %v1170 = vsel %vm1168, %v1169, %v1165
      %v1171 = vadd.s32 %v1166, %v1170
      %v1172 = vadd.s32 %v1171, 536870912
      %v1173 = vshrl.u32 %v1172, 30
      %v1174 = vshll.u32 %v1173, 30
      %v1175 = vsub.s32 %v1171, %v1174
      %vm1176 = vcmp.lt.s32.totalorder %v1175, 0
      %v1177 = vsub.s32 0, %v1175
      %v1178 = vsel %vm1176, %v1177, %v1175
      %v1179 = vclz %v1178
      %v1180 = vsub.s32 %v1179, 2
      %vm1181 = vcmp.gt.s32.totalorder 0, %v1180
      %v1182 = vsel %vm1181, 0, %v1180
      %v1183 = vsub.s32 32, %v1182
      %v1184 = vshll.u32 %v1175, %v1182
      %v1185 = vshrl.u32 %v1167, %v1183
      %v1186 = vor.u32 %v1184, %v1185
      %v1187 = vsub.s32 4294967266, %v1182
      %v1188 = vadd.s32 %v1187, 127
      %v1189 = vshll.u32 %v1188, 23
      %v1190 = vor.u32 4788187, %v1189
      %v1191 = vand.u32 2147483647, %v1190
      %v1193 = vcvt.s32.f32 %v1186
      %v1194 = vmul.f32 %v1193, %v1191
      %v1195 = vxor.u32 %v1194, 2147483648
      %v1196 = vsel %vm1113, %v1195, %v1194
      %v1197 = vsub.s32 4, %v1173
      %v1198 = vsel %vm1113, %v1197, %v1173
      %v1199 = vsel %vm1112, %v757, %v1196
      %v1200 = vsel %vm1112, 0, %v1198
      %v1201 = vcosq.f32.pop %v1199
      %v1202 = vsinq.f32.pop %v1199
      %vm1203 = vweird.f32 %v757
      %v1204 = vand.u32 %v1200, 3
      %vm1205 = vcmp.lt.s32.totalorder %v1204, 2
      %vm1206 = vcmp.eq.s32.totalorder %v1204, 0
      %v1207 = vxor.u32 %v1202, 2147483648
      %v1208 = vsel %vm1206, %v1201, %v1207
      %vm1209 = vcmp.eq.s32.totalorder %v1204, 2
      %v1210 = vxor.u32 %v1201, 2147483648
      %v1211 = vsel %vm1209, %v1210, %v1202
      %v1212 = vsel %vm1205, %v1208, %v1211
      %v1213 = vsel %vm1203, nan, %v1212
      %v1214 = vand.u32 2147483647, %v762
      %vm1215 = vcmp.le.f32.partialorder %v1214, 0.7853982
      %vm1216 = vcmp.lt.s32.totalorder %v762, 0
      %v1217 = vand.u32 %v762, 2139095040
      %v1218 = vshrl.u32 %v1217, 23
      %v1219 = vsub.s32 %v1218, 127
      %v1220 = vand.u32 2147483647, %v762
      %v1221 = vand.u32 %v1220, 8388607
      %v1222 = vor.u32 %v1221, 8388608
      %v1223 = vsub.s32 0, %v1222
      %v1224 = vadd.s32 %v1219, 1
      %vm1225 = vcmp.gt.s32.totalorder %v1224, 0
      %v1226 = vsel %vm1225, %v1224, 0
      %v1227 = vshrl.u32 %v1226, 5
      %v1228 = vand.u32 %v1226, 31
      %v1229 = vsub.s32 32, %v1228
      %v1230 = vshrl.u32 683565275, %v1229
      %v1231 = vshll.u32 683565275, %v1228
      %v1232 = vshrl.u32 2475754826, %v1229
      %v1233 = vor.u32 %v1231, %v1232
      %v1234 = vshll.u32 2475754826, %v1228
      %v1235 = vshrl.u32 2131351028, %v1229
      %v1236 = vor.u32 %v1234, %v1235
      %v1237 = vshll.u32 2131351028, %v1228
      %v1238 = vshrl.u32 2102212464, %v1229
      %v1239 = vor.u32 %v1237, %v1238
      %v1240 = vshll.u32 2102212464, %v1228
      %v1241 = vshrl.u32 920167782, %v1229
      %v1242 = vor.u32 %v1240, %v1241
      %v1243 = vshll.u32 920167782, %v1228
      %v1244 = vshrl.u32 1326507024, %v1229
      %v1245 = vor.u32 %v1243, %v1244
      %vm1246 = vcmp.lt.s32.totalorder %v1227, 1
      %vm1247 = vcmp.lt.s32.totalorder %v1227, 2
      %vm1248 = vcmp.lt.s32.totalorder %v1227, 3
      %vm1249 = vcmp.lt.s32.totalorder %v1227, 4
      %v1250 = vsel %vm1246, %v1230, %v1233
      %v1251 = vsel %vm1249, %v1239, 2102212464
      %v1252 = vsel %vm1248, %v1236, %v1251
      %v1253 = vsel %vm1247, %v1250, %v1252
      %v1254 = vsel %vm1246, %v1233, %v1236
      %v1255 = vsel %vm1249, %v1242, 920167782
      %v1256 = vsel %vm1248, %v1239, %v1255
      %v1257 = vsel %vm1247, %v1254, %v1256
      %v1258 = vsel %vm1246, %v1236, %v1239
      %v1259 = vsel %vm1249, %v1245, 1326507024
      %v1260 = vsel %vm1248, %v1242, %v1259
      %v1261 = vsel %vm1247, %v1258, %v1260
      %v1262 = vshll.u32 %v1222, 8
      %v1263 = vmul.u32.u64.compose %v1262, %v1261
      %v1264 = vextract.low.u32 %v1263
      %v1265 = vextract.high.u32 %v1263
      %v1266 = vmul.u32.u64.compose %v1262, %v1257
      %v1267 = vextract.low.u32 %v1266
      %v1268 = vextract.high.u32 %v1266
      %v1269 = vmul.u32 %v1262, %v1253
      %v1270 = vadd.s32 %v1265, %v1267
      %vm1271 = vc.u32 %v1265, %v1267
      %v1272 = vadd.s32 %v1268, 1
      %v1273 = vsel %vm1271, %v1272, %v1268
      %v1274 = vadd.s32 %v1269, %v1273
      %v1275 = vadd.s32 %v1274, 536870912
      %v1276 = vshrl.u32 %v1275, 30
      %v1277 = vshll.u32 %v1276, 30
      %v1278 = vsub.s32 %v1274, %v1277
      %vm1279 = vcmp.lt.s32.totalorder %v1278, 0
      %v1280 = vsub.s32 0, %v1278
      %v1281 = vsel %vm1279, %v1280, %v1278
      %v1282 = vclz %v1281
      %v1283 = vsub.s32 %v1282, 2
      %vm1284 = vcmp.gt.s32.totalorder 0, %v1283
      %v1285 = vsel %vm1284, 0, %v1283
      %v1286 = vsub.s32 32, %v1285
      %v1287 = vshll.u32 %v1278, %v1285
      %v1288 = vshrl.u32 %v1270, %v1286
      %v1289 = vor.u32 %v1287, %v1288
      %v1290 = vsub.s32 4294967266, %v1285
      %v1291 = vadd.s32 %v1290, 127
      %v1292 = vshll.u32 %v1291, 23
      %v1293 = vor.u32 4788187, %v1292
      %v1294 = vand.u32 2147483647, %v1293
      %v1296 = vcvt.s32.f32 %v1289
      %v1297 = vmul.f32 %v1296, %v1294
      %v1298 = vxor.u32 %v1297, 2147483648
      %v1299 = vsel %vm1216, %v1298, %v1297
      %v1300 = vsub.s32 4, %v1276
      %v1301 = vsel %vm1216, %v1300, %v1276
      %v1302 = vsel %vm1215, %v762, %v1299
      %v1303 = vsel %vm1215, 0, %v1301
      %v1304 = vcosq.f32.pop %v1302
      %v1305 = vsinq.f32.pop %v1302
      %vm1306 = vweird.f32 %v762
      %v1307 = vand.u32 %v1303, 3
      %vm1308 = vcmp.lt.s32.totalorder %v1307, 2
      %vm1309 = vcmp.eq.s32.totalorder %v1307, 0
      %v1310 = vxor.u32 %v1305, 2147483648
      %v1311 = vsel %vm1309, %v1304, %v1310
      %vm1312 = vcmp.eq.s32.totalorder %v1307, 2
      %v1313 = vxor.u32 %v1304, 2147483648
      %v1314 = vsel %vm1312, %v1313, %v1305
      %v1315 = vsel %vm1308, %v1311, %v1314
      %v1316 = vsel %vm1306, nan, %v1315
      %v1317 = vand.u32 2147483647, %v767
      %vm1318 = vcmp.le.f32.partialorder %v1317, 0.7853982
      %vm1319 = vcmp.lt.s32.totalorder %v767, 0
      %v1320 = vand.u32 %v767, 2139095040
      %v1321 = vshrl.u32 %v1320, 23
      %v1322 = vsub.s32 %v1321, 127
      %v1323 = vand.u32 2147483647, %v767
      %v1324 = vand.u32 %v1323, 8388607
      %v1325 = vor.u32 %v1324, 8388608
      %v1326 = vsub.s32 0, %v1325
      %v1327 = vadd.s32 %v1322, 1
      %vm1328 = vcmp.gt.s32.totalorder %v1327, 0
      %v1329 = vsel %vm1328, %v1327, 0
      %v1330 = vshrl.u32 %v1329, 5
      %v1331 = vand.u32 %v1329, 31
      %v1332 = vsub.s32 32, %v1331
      %v1333 = vshrl.u32 683565275, %v1332
      %v1334 = vshll.u32 683565275, %v1331
      %v1335 = vshrl.u32 2475754826, %v1332
      %v1336 = vor.u32 %v1334, %v1335
      %v1337 = vshll.u32 2475754826, %v1331
      %v1338 = vshrl.u32 2131351028, %v1332
      %v1339 = vor.u32 %v1337, %v1338
      %v1340 = vshll.u32 2131351028, %v1331
      %v1341 = vshrl.u32 2102212464, %v1332
      %v1342 = vor.u32 %v1340, %v1341
      %v1343 = vshll.u32 2102212464, %v1331
      %v1344 = vshrl.u32 920167782, %v1332
      %v1345 = vor.u32 %v1343, %v1344
      %v1346 = vshll.u32 920167782, %v1331
      %v1347 = vshrl.u32 1326507024, %v1332
      %v1348 = vor.u32 %v1346, %v1347
      %vm1349 = vcmp.lt.s32.totalorder %v1330, 1
      %vm1350 = vcmp.lt.s32.totalorder %v1330, 2
      %vm1351 = vcmp.lt.s32.totalorder %v1330, 3
      %vm1352 = vcmp.lt.s32.totalorder %v1330, 4
      %v1353 = vsel %vm1349, %v1333, %v1336
      %v1354 = vsel %vm1352, %v1342, 2102212464
      %v1355 = vsel %vm1351, %v1339, %v1354
      %v1356 = vsel %vm1350, %v1353, %v1355
      %v1357 = vsel %vm1349, %v1336, %v1339
      %v1358 = vsel %vm1352, %v1345, 920167782
      %v1359 = vsel %vm1351, %v1342, %v1358
      %v1360 = vsel %vm1350, %v1357, %v1359
      %v1361 = vsel %vm1349, %v1339, %v1342
      %v1362 = vsel %vm1352, %v1348, 1326507024
      %v1363 = vsel %vm1351, %v1345, %v1362
      %v1364 = vsel %vm1350, %v1361, %v1363
      %v1365 = vshll.u32 %v1325, 8
      %v1366 = vmul.u32.u64.compose %v1365, %v1364
      %v1367 = vextract.low.u32 %v1366
      %v1368 = vextract.high.u32 %v1366
      %v1369 = vmul.u32.u64.compose %v1365, %v1360
      %v1370 = vextract.low.u32 %v1369
      %v1371 = vextract.high.u32 %v1369
      %v1372 = vmul.u32 %v1365, %v1356
      %v1373 = vadd.s32 %v1368, %v1370
      %vm1374 = vc.u32 %v1368, %v1370
      %v1375 = vadd.s32 %v1371, 1
      %v1376 = vsel %vm1374, %v1375, %v1371
      %v1377 = vadd.s32 %v1372, %v1376
      %v1378 = vadd.s32 %v1377, 536870912
      %v1379 = vshrl.u32 %v1378, 30
      %v1380 = vshll.u32 %v1379, 30
      %v1381 = vsub.s32 %v1377, %v1380
      %vm1382 = vcmp.lt.s32.totalorder %v1381, 0
      %v1383 = vsub.s32 0, %v1381
      %v1384 = vsel %vm1382, %v1383, %v1381
      %v1385 = vclz %v1384
      %v1386 = vsub.s32 %v1385, 2
      %vm1387 = vcmp.gt.s32.totalorder 0, %v1386
      %v1388 = vsel %vm1387, 0, %v1386
      %v1389 = vsub.s32 32, %v1388
      %v1390 = vshll.u32 %v1381, %v1388
      %v1391 = vshrl.u32 %v1373, %v1389
      %v1392 = vor.u32 %v1390, %v1391
      %v1393 = vsub.s32 4294967266, %v1388
      %v1394 = vadd.s32 %v1393, 127
      %v1395 = vshll.u32 %v1394, 23
      %v1396 = vor.u32 4788187, %v1395
      %v1397 = vand.u32 2147483647, %v1396
      %v1399 = vcvt.s32.f32 %v1392
      %v1400 = vmul.f32 %v1399, %v1397
      %v1401 = vxor.u32 %v1400, 2147483648
      %v1402 = vsel %vm1319, %v1401, %v1400
      %v1403 = vsub.s32 4, %v1379
      %v1404 = vsel %vm1319, %v1403, %v1379
      %v1405 = vsel %vm1318, %v767, %v1402
      %v1406 = vsel %vm1318, 0, %v1404
      %v1407 = vcosq.f32.pop %v1405
      %v1408 = vsinq.f32.pop %v1405
      %vm1409 = vweird.f32 %v767
      %v1410 = vand.u32 %v1406, 3
      %vm1411 = vcmp.lt.s32.totalorder %v1410, 2
      %vm1412 = vcmp.eq.s32.totalorder %v1410, 0
      %v1413 = vxor.u32 %v1408, 2147483648
      %v1414 = vsel %vm1412, %v1407, %v1413
      %vm1415 = vcmp.eq.s32.totalorder %v1410, 2
      %v1416 = vxor.u32 %v1407, 2147483648
      %v1417 = vsel %vm1415, %v1416, %v1408
      %v1418 = vsel %vm1411, %v1414, %v1417
      %v1419 = vsel %vm1409, nan, %v1418
      %v1420 = vand.u32 2147483647, %v772
      %vm1421 = vcmp.le.f32.partialorder %v1420, 0.7853982
      %vm1422 = vcmp.lt.s32.totalorder %v772, 0
      %v1423 = vand.u32 %v772, 2139095040
      %v1424 = vshrl.u32 %v1423, 23
      %v1425 = vsub.s32 %v1424, 127
      %v1426 = vand.u32 2147483647, %v772
      %v1427 = vand.u32 %v1426, 8388607
      %v1428 = vor.u32 %v1427, 8388608
      %v1429 = vsub.s32 0, %v1428
      %v1430 = vadd.s32 %v1425, 1
      %vm1431 = vcmp.gt.s32.totalorder %v1430, 0
      %v1432 = vsel %vm1431, %v1430, 0
      %v1433 = vshrl.u32 %v1432, 5
      %v1434 = vand.u32 %v1432, 31
      %v1435 = vsub.s32 32, %v1434
      %v1436 = vshrl.u32 683565275, %v1435
      %v1437 = vshll.u32 683565275, %v1434
      %v1438 = vshrl.u32 2475754826, %v1435
      %v1439 = vor.u32 %v1437, %v1438
      %v1440 = vshll.u32 2475754826, %v1434
      %v1441 = vshrl.u32 2131351028, %v1435
      %v1442 = vor.u32 %v1440, %v1441
      %v1443 = vshll.u32 2131351028, %v1434
      %v1444 = vshrl.u32 2102212464, %v1435
      %v1445 = vor.u32 %v1443, %v1444
      %v1446 = vshll.u32 2102212464, %v1434
      %v1447 = vshrl.u32 920167782, %v1435
      %v1448 = vor.u32 %v1446, %v1447
      %v1449 = vshll.u32 920167782, %v1434
      %v1450 = vshrl.u32 1326507024, %v1435
      %v1451 = vor.u32 %v1449, %v1450
      %vm1452 = vcmp.lt.s32.totalorder %v1433, 1
      %vm1453 = vcmp.lt.s32.totalorder %v1433, 2
      %vm1454 = vcmp.lt.s32.totalorder %v1433, 3
      %vm1455 = vcmp.lt.s32.totalorder %v1433, 4
      %v1456 = vsel %vm1452, %v1436, %v1439
      %v1457 = vsel %vm1455, %v1445, 2102212464
      %v1458 = vsel %vm1454, %v1442, %v1457
      %v1459 = vsel %vm1453, %v1456, %v1458
      %v1460 = vsel %vm1452, %v1439, %v1442
      %v1461 = vsel %vm1455, %v1448, 920167782
      %v1462 = vsel %vm1454, %v1445, %v1461
      %v1463 = vsel %vm1453, %v1460, %v1462
      %v1464 = vsel %vm1452, %v1442, %v1445
      %v1465 = vsel %vm1455, %v1451, 1326507024
      %v1466 = vsel %vm1454, %v1448, %v1465
      %v1467 = vsel %vm1453, %v1464, %v1466
      %v1468 = vshll.u32 %v1428, 8
      %v1469 = vmul.u32.u64.compose %v1468, %v1467
      %v1470 = vextract.low.u32 %v1469
      %v1471 = vextract.high.u32 %v1469
      %v1472 = vmul.u32.u64.compose %v1468, %v1463
      %v1473 = vextract.low.u32 %v1472
      %v1474 = vextract.high.u32 %v1472
      %v1475 = vmul.u32 %v1468, %v1459
      %v1476 = vadd.s32 %v1471, %v1473
      %vm1477 = vc.u32 %v1471, %v1473
      %v1478 = vadd.s32 %v1474, 1
      %v1479 = vsel %vm1477, %v1478, %v1474
      %v1480 = vadd.s32 %v1475, %v1479
      %v1481 = vadd.s32 %v1480, 536870912
      %v1482 = vshrl.u32 %v1481, 30
      %v1483 = vshll.u32 %v1482, 30
      %v1484 = vsub.s32 %v1480, %v1483
      %vm1485 = vcmp.lt.s32.totalorder %v1484, 0
      %v1486 = vsub.s32 0, %v1484
      %v1487 = vsel %vm1485, %v1486, %v1484
      %v1488 = vclz %v1487
      %v1489 = vsub.s32 %v1488, 2
      %vm1490 = vcmp.gt.s32.totalorder 0, %v1489
      %v1491 = vsel %vm1490, 0, %v1489
      %v1492 = vsub.s32 32, %v1491
      %v1493 = vshll.u32 %v1484, %v1491
      %v1494 = vshrl.u32 %v1476, %v1492
      %v1495 = vor.u32 %v1493, %v1494
      %v1496 = vsub.s32 4294967266, %v1491
      %v1497 = vadd.s32 %v1496, 127
      %v1498 = vshll.u32 %v1497, 23
      %v1499 = vor.u32 4788187, %v1498
      %v1500 = vand.u32 2147483647, %v1499
      %v1502 = vcvt.s32.f32 %v1495
      %v1503 = vmul.f32 %v1502, %v1500
      %v1504 = vxor.u32 %v1503, 2147483648
      %v1505 = vsel %vm1422, %v1504, %v1503
      %v1506 = vsub.s32 4, %v1482
      %v1507 = vsel %vm1422, %v1506, %v1482
      %v1508 = vsel %vm1421, %v772, %v1505
      %v1509 = vsel %vm1421, 0, %v1507
      %v1510 = vcosq.f32.pop %v1508
      %v1511 = vsinq.f32.pop %v1508
      %vm1512 = vweird.f32 %v772
      %v1513 = vand.u32 %v1509, 3
      %vm1514 = vcmp.lt.s32.totalorder %v1513, 2
      %vm1515 = vcmp.eq.s32.totalorder %v1513, 0
      %v1516 = vxor.u32 %v1511, 2147483648
      %v1517 = vsel %vm1515, %v1510, %v1516
      %vm1518 = vcmp.eq.s32.totalorder %v1513, 2
      %v1519 = vxor.u32 %v1510, 2147483648
      %v1520 = vsel %vm1518, %v1519, %v1511
      %v1521 = vsel %vm1514, %v1517, %v1520
      %v1522 = vsel %vm1512, nan, %v1521
      %v1523 = vand.u32 2147483647, %v777
      %vm1524 = vcmp.le.f32.partialorder %v1523, 0.7853982
      %vm1525 = vcmp.lt.s32.totalorder %v777, 0
      %v1526 = vand.u32 %v777, 2139095040
      %v1527 = vshrl.u32 %v1526, 23
      %v1528 = vsub.s32 %v1527, 127
      %v1529 = vand.u32 2147483647, %v777
      %v1530 = vand.u32 %v1529, 8388607
      %v1531 = vor.u32 %v1530, 8388608
      %v1532 = vsub.s32 0, %v1531
      %v1533 = vadd.s32 %v1528, 1
      %vm1534 = vcmp.gt.s32.totalorder %v1533, 0
      %v1535 = vsel %vm1534, %v1533, 0
      %v1536 = vshrl.u32 %v1535, 5
      %v1537 = vand.u32 %v1535, 31
      %v1538 = vsub.s32 32, %v1537
      %v1539 = vshrl.u32 683565275, %v1538
      %v1540 = vshll.u32 683565275, %v1537
      %v1541 = vshrl.u32 2475754826, %v1538
      %v1542 = vor.u32 %v1540, %v1541
      %v1543 = vshll.u32 2475754826, %v1537
      %v1544 = vshrl.u32 2131351028, %v1538
      %v1545 = vor.u32 %v1543, %v1544
      %v1546 = vshll.u32 2131351028, %v1537
      %v1547 = vshrl.u32 2102212464, %v1538
      %v1548 = vor.u32 %v1546, %v1547
      %v1549 = vshll.u32 2102212464, %v1537
      %v1550 = vshrl.u32 920167782, %v1538
      %v1551 = vor.u32 %v1549, %v1550
      %v1552 = vshll.u32 920167782, %v1537
      %v1553 = vshrl.u32 1326507024, %v1538
      %v1554 = vor.u32 %v1552, %v1553
      %vm1555 = vcmp.lt.s32.totalorder %v1536, 1
      %vm1556 = vcmp.lt.s32.totalorder %v1536, 2
      %vm1557 = vcmp.lt.s32.totalorder %v1536, 3
      %vm1558 = vcmp.lt.s32.totalorder %v1536, 4
      %v1559 = vsel %vm1555, %v1539, %v1542
      %v1560 = vsel %vm1558, %v1548, 2102212464
      %v1561 = vsel %vm1557, %v1545, %v1560
      %v1562 = vsel %vm1556, %v1559, %v1561
      %v1563 = vsel %vm1555, %v1542, %v1545
      %v1564 = vsel %vm1558, %v1551, 920167782
      %v1565 = vsel %vm1557, %v1548, %v1564
      %v1566 = vsel %vm1556, %v1563, %v1565
      %v1567 = vsel %vm1555, %v1545, %v1548
      %v1568 = vsel %vm1558, %v1554, 1326507024
      %v1569 = vsel %vm1557, %v1551, %v1568
      %v1570 = vsel %vm1556, %v1567, %v1569
      %v1571 = vshll.u32 %v1531, 8
      %v1572 = vmul.u32.u64.compose %v1571, %v1570
      %v1573 = vextract.low.u32 %v1572
      %v1574 = vextract.high.u32 %v1572
      %v1575 = vmul.u32.u64.compose %v1571, %v1566
      %v1576 = vextract.low.u32 %v1575
      %v1577 = vextract.high.u32 %v1575
      %v1578 = vmul.u32 %v1571, %v1562
      %v1579 = vadd.s32 %v1574, %v1576
      %vm1580 = vc.u32 %v1574, %v1576
      %v1581 = vadd.s32 %v1577, 1
      %v1582 = vsel %vm1580, %v1581, %v1577
      %v1583 = vadd.s32 %v1578, %v1582
      %v1584 = vadd.s32 %v1583, 536870912
      %v1585 = vshrl.u32 %v1584, 30
      %v1586 = vshll.u32 %v1585, 30
      %v1587 = vsub.s32 %v1583, %v1586
      %vm1588 = vcmp.lt.s32.totalorder %v1587, 0
      %v1589 = vsub.s32 0, %v1587
      %v1590 = vsel %vm1588, %v1589, %v1587
      %v1591 = vclz %v1590
      %v1592 = vsub.s32 %v1591, 2
      %vm1593 = vcmp.gt.s32.totalorder 0, %v1592
      %v1594 = vsel %vm1593, 0, %v1592
      %v1595 = vsub.s32 32, %v1594
      %v1596 = vshll.u32 %v1587, %v1594
      %v1597 = vshrl.u32 %v1579, %v1595
      %v1598 = vor.u32 %v1596, %v1597
      %v1599 = vsub.s32 4294967266, %v1594
      %v1600 = vadd.s32 %v1599, 127
      %v1601 = vshll.u32 %v1600, 23
      %v1602 = vor.u32 4788187, %v1601
      %v1603 = vand.u32 2147483647, %v1602
      %v1605 = vcvt.s32.f32 %v1598
      %v1606 = vmul.f32 %v1605, %v1603
      %v1607 = vxor.u32 %v1606, 2147483648
      %v1608 = vsel %vm1525, %v1607, %v1606
      %v1609 = vsub.s32 4, %v1585
      %v1610 = vsel %vm1525, %v1609, %v1585
      %v1611 = vsel %vm1524, %v777, %v1608
      %v1612 = vsel %vm1524, 0, %v1610
      %v1613 = vcosq.f32.pop %v1611
      %v1614 = vsinq.f32.pop %v1611
      %vm1615 = vweird.f32 %v777
      %v1616 = vand.u32 %v1612, 3
      %vm1617 = vcmp.lt.s32.totalorder %v1616, 2
      %vm1618 = vcmp.eq.s32.totalorder %v1616, 0
      %v1619 = vxor.u32 %v1614, 2147483648
      %v1620 = vsel %vm1618, %v1613, %v1619
      %vm1621 = vcmp.eq.s32.totalorder %v1616, 2
      %v1622 = vxor.u32 %v1613, 2147483648
      %v1623 = vsel %vm1621, %v1622, %v1614
      %v1624 = vsel %vm1617, %v1620, %v1623
      %v1625 = vsel %vm1615, nan, %v1624
      %v1626 = vand.u32 2147483647, %v782
      %vm1627 = vcmp.le.f32.partialorder %v1626, 0.7853982
      %vm1628 = vcmp.lt.s32.totalorder %v782, 0
      %v1629 = vand.u32 %v782, 2139095040
      %v1630 = vshrl.u32 %v1629, 23
      %v1631 = vsub.s32 %v1630, 127
      %v1632 = vand.u32 2147483647, %v782
      %v1633 = vand.u32 %v1632, 8388607
      %v1634 = vor.u32 %v1633, 8388608
      %v1635 = vsub.s32 0, %v1634
      %v1636 = vadd.s32 %v1631, 1
      %vm1637 = vcmp.gt.s32.totalorder %v1636, 0
      %v1638 = vsel %vm1637, %v1636, 0
      %v1639 = vshrl.u32 %v1638, 5
      %v1640 = vand.u32 %v1638, 31
      %v1641 = vsub.s32 32, %v1640
      %v1642 = vshrl.u32 683565275, %v1641
      %v1643 = vshll.u32 683565275, %v1640
      %v1644 = vshrl.u32 2475754826, %v1641
      %v1645 = vor.u32 %v1643, %v1644
      %v1646 = vshll.u32 2475754826, %v1640
      %v1647 = vshrl.u32 2131351028, %v1641
      %v1648 = vor.u32 %v1646, %v1647
      %v1649 = vshll.u32 2131351028, %v1640
      %v1650 = vshrl.u32 2102212464, %v1641
      %v1651 = vor.u32 %v1649, %v1650
      %v1652 = vshll.u32 2102212464, %v1640
      %v1653 = vshrl.u32 920167782, %v1641
      %v1654 = vor.u32 %v1652, %v1653
      %v1655 = vshll.u32 920167782, %v1640
      %v1656 = vshrl.u32 1326507024, %v1641
      %v1657 = vor.u32 %v1655, %v1656
      %vm1658 = vcmp.lt.s32.totalorder %v1639, 1
      %vm1659 = vcmp.lt.s32.totalorder %v1639, 2
      %vm1660 = vcmp.lt.s32.totalorder %v1639, 3
      %vm1661 = vcmp.lt.s32.totalorder %v1639, 4
      %v1662 = vsel %vm1658, %v1642, %v1645
      %v1663 = vsel %vm1661, %v1651, 2102212464
      %v1664 = vsel %vm1660, %v1648, %v1663
      %v1665 = vsel %vm1659, %v1662, %v1664
      %v1666 = vsel %vm1658, %v1645, %v1648
      %v1667 = vsel %vm1661, %v1654, 920167782
      %v1668 = vsel %vm1660, %v1651, %v1667
      %v1669 = vsel %vm1659, %v1666, %v1668
      %v1670 = vsel %vm1658, %v1648, %v1651
      %v1671 = vsel %vm1661, %v1657, 1326507024
      %v1672 = vsel %vm1660, %v1654, %v1671
      %v1673 = vsel %vm1659, %v1670, %v1672
      %v1674 = vshll.u32 %v1634, 8
      %v1675 = vmul.u32.u64.compose %v1674, %v1673
      %v1676 = vextract.low.u32 %v1675
      %v1677 = vextract.high.u32 %v1675
      %v1678 = vmul.u32.u64.compose %v1674, %v1669
      %v1679 = vextract.low.u32 %v1678
      %v1680 = vextract.high.u32 %v1678
      %v1681 = vmul.u32 %v1674, %v1665
      %v1682 = vadd.s32 %v1677, %v1679
      %vm1683 = vc.u32 %v1677, %v1679
      %v1684 = vadd.s32 %v1680, 1
      %v1685 = vsel %vm1683, %v1684, %v1680
      %v1686 = vadd.s32 %v1681, %v1685
      %v1687 = vadd.s32 %v1686, 536870912
      %v1688 = vshrl.u32 %v1687, 30
      %v1689 = vshll.u32 %v1688, 30
      %v1690 = vsub.s32 %v1686, %v1689
      %vm1691 = vcmp.lt.s32.totalorder %v1690, 0
      %v1692 = vsub.s32 0, %v1690
      %v1693 = vsel %vm1691, %v1692, %v1690
      %v1694 = vclz %v1693
      %v1695 = vsub.s32 %v1694, 2
      %vm1696 = vcmp.gt.s32.totalorder 0, %v1695
      %v1697 = vsel %vm1696, 0, %v1695
      %v1698 = vsub.s32 32, %v1697
      %v1699 = vshll.u32 %v1690, %v1697
      %v1700 = vshrl.u32 %v1682, %v1698
      %v1701 = vor.u32 %v1699, %v1700
      %v1702 = vsub.s32 4294967266, %v1697
      %v1703 = vadd.s32 %v1702, 127
      %v1704 = vshll.u32 %v1703, 23
      %v1705 = vor.u32 4788187, %v1704
      %v1706 = vand.u32 2147483647, %v1705
      %v1708 = vcvt.s32.f32 %v1701
      %v1709 = vmul.f32 %v1708, %v1706
      %v1710 = vxor.u32 %v1709, 2147483648
      %v1711 = vsel %vm1628, %v1710, %v1709
      %v1712 = vsub.s32 4, %v1688
      %v1713 = vsel %vm1628, %v1712, %v1688
      %v1714 = vsel %vm1627, %v782, %v1711
      %v1715 = vsel %vm1627, 0, %v1713
      %v1716 = vcosq.f32.pop %v1714
      %v1717 = vsinq.f32.pop %v1714
      %vm1718 = vweird.f32 %v782
      %v1719 = vand.u32 %v1715, 3
      %vm1720 = vcmp.lt.s32.totalorder %v1719, 2
      %vm1721 = vcmp.eq.s32.totalorder %v1719, 0
      %v1722 = vxor.u32 %v1717, 2147483648
      %v1723 = vsel %vm1721, %v1716, %v1722
      %vm1724 = vcmp.eq.s32.totalorder %v1719, 2
      %v1725 = vxor.u32 %v1716, 2147483648
      %v1726 = vsel %vm1724, %v1725, %v1717
      %v1727 = vsel %vm1720, %v1723, %v1726
      %v1728 = vsel %vm1718, nan, %v1727
      %v1729 = vand.u32 2147483647, %v787
      %vm1730 = vcmp.le.f32.partialorder %v1729, 0.7853982
      %vm1731 = vcmp.lt.s32.totalorder %v787, 0
      %v1732 = vand.u32 %v787, 2139095040
      %v1733 = vshrl.u32 %v1732, 23
      %v1734 = vsub.s32 %v1733, 127
      %v1735 = vand.u32 2147483647, %v787
      %v1736 = vand.u32 %v1735, 8388607
      %v1737 = vor.u32 %v1736, 8388608
      %v1738 = vsub.s32 0, %v1737
      %v1739 = vadd.s32 %v1734, 1
      %vm1740 = vcmp.gt.s32.totalorder %v1739, 0
      %v1741 = vsel %vm1740, %v1739, 0
      %v1742 = vshrl.u32 %v1741, 5
      %v1743 = vand.u32 %v1741, 31
      %v1744 = vsub.s32 32, %v1743
      %v1745 = vshrl.u32 683565275, %v1744
      %v1746 = vshll.u32 683565275, %v1743
      %v1747 = vshrl.u32 2475754826, %v1744
      %v1748 = vor.u32 %v1746, %v1747
      %v1749 = vshll.u32 2475754826, %v1743
      %v1750 = vshrl.u32 2131351028, %v1744
      %v1751 = vor.u32 %v1749, %v1750
      %v1752 = vshll.u32 2131351028, %v1743
      %v1753 = vshrl.u32 2102212464, %v1744
      %v1754 = vor.u32 %v1752, %v1753
      %v1755 = vshll.u32 2102212464, %v1743
      %v1756 = vshrl.u32 920167782, %v1744
      %v1757 = vor.u32 %v1755, %v1756
      %v1758 = vshll.u32 920167782, %v1743
      %v1759 = vshrl.u32 1326507024, %v1744
      %v1760 = vor.u32 %v1758, %v1759
      %vm1761 = vcmp.lt.s32.totalorder %v1742, 1
      %vm1762 = vcmp.lt.s32.totalorder %v1742, 2
      %vm1763 = vcmp.lt.s32.totalorder %v1742, 3
      %vm1764 = vcmp.lt.s32.totalorder %v1742, 4
      %v1765 = vsel %vm1761, %v1745, %v1748
      %v1766 = vsel %vm1764, %v1754, 2102212464
      %v1767 = vsel %vm1763, %v1751, %v1766
      %v1768 = vsel %vm1762, %v1765, %v1767
      %v1769 = vsel %vm1761, %v1748, %v1751
      %v1770 = vsel %vm1764, %v1757, 920167782
      %v1771 = vsel %vm1763, %v1754, %v1770
      %v1772 = vsel %vm1762, %v1769, %v1771
      %v1773 = vsel %vm1761, %v1751, %v1754
      %v1774 = vsel %vm1764, %v1760, 1326507024
      %v1775 = vsel %vm1763, %v1757, %v1774
      %v1776 = vsel %vm1762, %v1773, %v1775
      %v1777 = vshll.u32 %v1737, 8
      %v1778 = vmul.u32.u64.compose %v1777, %v1776
      %v1779 = vextract.low.u32 %v1778
      %v1780 = vextract.high.u32 %v1778
      %v1781 = vmul.u32.u64.compose %v1777, %v1772
      %v1782 = vextract.low.u32 %v1781
      %v1783 = vextract.high.u32 %v1781
      %v1784 = vmul.u32 %v1777, %v1768
      %v1785 = vadd.s32 %v1780, %v1782
      %vm1786 = vc.u32 %v1780, %v1782
      %v1787 = vadd.s32 %v1783, 1
      %v1788 = vsel %vm1786, %v1787, %v1783
      %v1789 = vadd.s32 %v1784, %v1788
      %v1790 = vadd.s32 %v1789, 536870912
      %v1791 = vshrl.u32 %v1790, 30
      %v1792 = vshll.u32 %v1791, 30
      %v1793 = vsub.s32 %v1789, %v1792
      %vm1794 = vcmp.lt.s32.totalorder %v1793, 0
      %v1795 = vsub.s32 0, %v1793
      %v1796 = vsel %vm1794, %v1795, %v1793
      %v1797 = vclz %v1796
      %v1798 = vsub.s32 %v1797, 2
      %vm1799 = vcmp.gt.s32.totalorder 0, %v1798
      %v1800 = vsel %vm1799, 0, %v1798
      %v1801 = vsub.s32 32, %v1800
      %v1802 = vshll.u32 %v1793, %v1800
      %v1803 = vshrl.u32 %v1785, %v1801
      %v1804 = vor.u32 %v1802, %v1803
      %v1805 = vsub.s32 4294967266, %v1800
      %v1806 = vadd.s32 %v1805, 127
      %v1807 = vshll.u32 %v1806, 23
      %v1808 = vor.u32 4788187, %v1807
      %v1809 = vand.u32 2147483647, %v1808
      %v1811 = vcvt.s32.f32 %v1804
      %v1812 = vmul.f32 %v1811, %v1809
      %v1813 = vxor.u32 %v1812, 2147483648
      %v1814 = vsel %vm1731, %v1813, %v1812
      %v1815 = vsub.s32 4, %v1791
      %v1816 = vsel %vm1731, %v1815, %v1791
      %v1817 = vsel %vm1730, %v787, %v1814
      %v1818 = vsel %vm1730, 0, %v1816
      %v1819 = vcosq.f32.pop %v1817
      %v1820 = vsinq.f32.pop %v1817
      %vm1821 = vweird.f32 %v787
      %v1822 = vand.u32 %v1818, 3
      %vm1823 = vcmp.lt.s32.totalorder %v1822, 2
      %vm1824 = vcmp.eq.s32.totalorder %v1822, 0
      %v1825 = vxor.u32 %v1820, 2147483648
      %v1826 = vsel %vm1824, %v1819, %v1825
      %vm1827 = vcmp.eq.s32.totalorder %v1822, 2
      %v1828 = vxor.u32 %v1819, 2147483648
      %v1829 = vsel %vm1827, %v1828, %v1820
      %v1830 = vsel %vm1823, %v1826, %v1829
      %v1831 = vsel %vm1821, nan, %v1830
      %v1832 = vand.u32 2147483647, %v792
      %vm1833 = vcmp.le.f32.partialorder %v1832, 0.7853982
      %vm1834 = vcmp.lt.s32.totalorder %v792, 0
      %v1835 = vand.u32 %v792, 2139095040
      %v1836 = vshrl.u32 %v1835, 23
      %v1837 = vsub.s32 %v1836, 127
      %v1838 = vand.u32 2147483647, %v792
      %v1839 = vand.u32 %v1838, 8388607
      %v1840 = vor.u32 %v1839, 8388608
      %v1841 = vsub.s32 0, %v1840
      %v1842 = vadd.s32 %v1837, 1
      %vm1843 = vcmp.gt.s32.totalorder %v1842, 0
      %v1844 = vsel %vm1843, %v1842, 0
      %v1845 = vshrl.u32 %v1844, 5
      %v1846 = vand.u32 %v1844, 31
      %v1847 = vsub.s32 32, %v1846
      %v1848 = vshrl.u32 683565275, %v1847
      %v1849 = vshll.u32 683565275, %v1846
      %v1850 = vshrl.u32 2475754826, %v1847
      %v1851 = vor.u32 %v1849, %v1850
      %v1852 = vshll.u32 2475754826, %v1846
      %v1853 = vshrl.u32 2131351028, %v1847
      %v1854 = vor.u32 %v1852, %v1853
      %v1855 = vshll.u32 2131351028, %v1846
      %v1856 = vshrl.u32 2102212464, %v1847
      %v1857 = vor.u32 %v1855, %v1856
      %v1858 = vshll.u32 2102212464, %v1846
      %v1859 = vshrl.u32 920167782, %v1847
      %v1860 = vor.u32 %v1858, %v1859
      %v1861 = vshll.u32 920167782, %v1846
      %v1862 = vshrl.u32 1326507024, %v1847
      %v1863 = vor.u32 %v1861, %v1862
      %vm1864 = vcmp.lt.s32.totalorder %v1845, 1
      %vm1865 = vcmp.lt.s32.totalorder %v1845, 2
      %vm1866 = vcmp.lt.s32.totalorder %v1845, 3
      %vm1867 = vcmp.lt.s32.totalorder %v1845, 4
      %v1868 = vsel %vm1864, %v1848, %v1851
      %v1869 = vsel %vm1867, %v1857, 2102212464
      %v1870 = vsel %vm1866, %v1854, %v1869
      %v1871 = vsel %vm1865, %v1868, %v1870
      %v1872 = vsel %vm1864, %v1851, %v1854
      %v1873 = vsel %vm1867, %v1860, 920167782
      %v1874 = vsel %vm1866, %v1857, %v1873
      %v1875 = vsel %vm1865, %v1872, %v1874
      %v1876 = vsel %vm1864, %v1854, %v1857
      %v1877 = vsel %vm1867, %v1863, 1326507024
      %v1878 = vsel %vm1866, %v1860, %v1877
      %v1879 = vsel %vm1865, %v1876, %v1878
      %v1880 = vshll.u32 %v1840, 8
      %v1881 = vmul.u32.u64.compose %v1880, %v1879
      %v1882 = vextract.low.u32 %v1881
      %v1883 = vextract.high.u32 %v1881
      %v1884 = vmul.u32.u64.compose %v1880, %v1875
      %v1885 = vextract.low.u32 %v1884
      %v1886 = vextract.high.u32 %v1884
      %v1887 = vmul.u32 %v1880, %v1871
      %v1888 = vadd.s32 %v1883, %v1885
      %vm1889 = vc.u32 %v1883, %v1885
      %v1890 = vadd.s32 %v1886, 1
      %v1891 = vsel %vm1889, %v1890, %v1886
      %v1892 = vadd.s32 %v1887, %v1891
      %v1893 = vadd.s32 %v1892, 536870912
      %v1894 = vshrl.u32 %v1893, 30
      %v1895 = vshll.u32 %v1894, 30
      %v1896 = vsub.s32 %v1892, %v1895
      %vm1897 = vcmp.lt.s32.totalorder %v1896, 0
      %v1898 = vsub.s32 0, %v1896
      %v1899 = vsel %vm1897, %v1898, %v1896
      %v1900 = vclz %v1899
      %v1901 = vsub.s32 %v1900, 2
      %vm1902 = vcmp.gt.s32.totalorder 0, %v1901
      %v1903 = vsel %vm1902, 0, %v1901
      %v1904 = vsub.s32 32, %v1903
      %v1905 = vshll.u32 %v1896, %v1903
      %v1906 = vshrl.u32 %v1888, %v1904
      %v1907 = vor.u32 %v1905, %v1906
      %v1908 = vsub.s32 4294967266, %v1903
      %v1909 = vadd.s32 %v1908, 127
      %v1910 = vshll.u32 %v1909, 23
      %v1911 = vor.u32 4788187, %v1910
      %v1912 = vand.u32 2147483647, %v1911
      %v1914 = vcvt.s32.f32 %v1907
      %v1915 = vmul.f32 %v1914, %v1912
      %v1916 = vxor.u32 %v1915, 2147483648
      %v1917 = vsel %vm1834, %v1916, %v1915
      %v1918 = vsub.s32 4, %v1894
      %v1919 = vsel %vm1834, %v1918, %v1894
      %v1920 = vsel %vm1833, %v792, %v1917
      %v1921 = vsel %vm1833, 0, %v1919
      %v1922 = vcosq.f32.pop %v1920
      %v1923 = vsinq.f32.pop %v1920
      %vm1924 = vweird.f32 %v792
      %v1925 = vand.u32 %v1921, 3
      %vm1926 = vcmp.lt.s32.totalorder %v1925, 2
      %vm1927 = vcmp.eq.s32.totalorder %v1925, 0
      %v1928 = vxor.u32 %v1923, 2147483648
      %v1929 = vsel %vm1927, %v1922, %v1928
      %vm1930 = vcmp.eq.s32.totalorder %v1925, 2
      %v1931 = vxor.u32 %v1922, 2147483648
      %v1932 = vsel %vm1930, %v1931, %v1923
      %v1933 = vsel %vm1926, %v1929, %v1932
      %v1934 = vsel %vm1924, nan, %v1933
      %v1935 = vand.u32 2147483647, %v797
      %vm1936 = vcmp.le.f32.partialorder %v1935, 0.7853982
      %vm1937 = vcmp.lt.s32.totalorder %v797, 0
      %v1938 = vand.u32 %v797, 2139095040
      %v1939 = vshrl.u32 %v1938, 23
      %v1940 = vsub.s32 %v1939, 127
      %v1941 = vand.u32 2147483647, %v797
      %v1942 = vand.u32 %v1941, 8388607
      %v1943 = vor.u32 %v1942, 8388608
      %v1944 = vsub.s32 0, %v1943
      %v1945 = vadd.s32 %v1940, 1
      %vm1946 = vcmp.gt.s32.totalorder %v1945, 0
      %v1947 = vsel %vm1946, %v1945, 0
      %v1948 = vshrl.u32 %v1947, 5
      %v1949 = vand.u32 %v1947, 31
      %v1950 = vsub.s32 32, %v1949
      %v1951 = vshrl.u32 683565275, %v1950
      %v1952 = vshll.u32 683565275, %v1949
      %v1953 = vshrl.u32 2475754826, %v1950
      %v1954 = vor.u32 %v1952, %v1953
      %v1955 = vshll.u32 2475754826, %v1949
      %v1956 = vshrl.u32 2131351028, %v1950
      %v1957 = vor.u32 %v1955, %v1956
      %v1958 = vshll.u32 2131351028, %v1949
      %v1959 = vshrl.u32 2102212464, %v1950
      %v1960 = vor.u32 %v1958, %v1959
      %v1961 = vshll.u32 2102212464, %v1949
      %v1962 = vshrl.u32 920167782, %v1950
      %v1963 = vor.u32 %v1961, %v1962
      %v1964 = vshll.u32 920167782, %v1949
      %v1965 = vshrl.u32 1326507024, %v1950
      %v1966 = vor.u32 %v1964, %v1965
      %vm1967 = vcmp.lt.s32.totalorder %v1948, 1
      %vm1968 = vcmp.lt.s32.totalorder %v1948, 2
      %vm1969 = vcmp.lt.s32.totalorder %v1948, 3
      %vm1970 = vcmp.lt.s32.totalorder %v1948, 4
      %v1971 = vsel %vm1967, %v1951, %v1954
      %v1972 = vsel %vm1970, %v1960, 2102212464
      %v1973 = vsel %vm1969, %v1957, %v1972
      %v1974 = vsel %vm1968, %v1971, %v1973
      %v1975 = vsel %vm1967, %v1954, %v1957
      %v1976 = vsel %vm1970, %v1963, 920167782
      %v1977 = vsel %vm1969, %v1960, %v1976
      %v1978 = vsel %vm1968, %v1975, %v1977
      %v1979 = vsel %vm1967, %v1957, %v1960
      %v1980 = vsel %vm1970, %v1966, 1326507024
      %v1981 = vsel %vm1969, %v1963, %v1980
      %v1982 = vsel %vm1968, %v1979, %v1981
      %v1983 = vshll.u32 %v1943, 8
      %v1984 = vmul.u32.u64.compose %v1983, %v1982
      %v1985 = vextract.low.u32 %v1984
      %v1986 = vextract.high.u32 %v1984
      %v1987 = vmul.u32.u64.compose %v1983, %v1978
      %v1988 = vextract.low.u32 %v1987
      %v1989 = vextract.high.u32 %v1987
      %v1990 = vmul.u32 %v1983, %v1974
      %v1991 = vadd.s32 %v1986, %v1988
      %vm1992 = vc.u32 %v1986, %v1988
      %v1993 = vadd.s32 %v1989, 1
      %v1994 = vsel %vm1992, %v1993, %v1989
      %v1995 = vadd.s32 %v1990, %v1994
      %v1996 = vadd.s32 %v1995, 536870912
      %v1997 = vshrl.u32 %v1996, 30
      %v1998 = vshll.u32 %v1997, 30
      %v1999 = vsub.s32 %v1995, %v1998
      %vm2000 = vcmp.lt.s32.totalorder %v1999, 0
      %v2001 = vsub.s32 0, %v1999
      %v2002 = vsel %vm2000, %v2001, %v1999
      %v2003 = vclz %v2002
      %v2004 = vsub.s32 %v2003, 2
      %vm2005 = vcmp.gt.s32.totalorder 0, %v2004
      %v2006 = vsel %vm2005, 0, %v2004
      %v2007 = vsub.s32 32, %v2006
      %v2008 = vshll.u32 %v1999, %v2006
      %v2009 = vshrl.u32 %v1991, %v2007
      %v2010 = vor.u32 %v2008, %v2009
      %v2011 = vsub.s32 4294967266, %v2006
      %v2012 = vadd.s32 %v2011, 127
      %v2013 = vshll.u32 %v2012, 23
      %v2014 = vor.u32 4788187, %v2013
      %v2015 = vand.u32 2147483647, %v2014
      %v2017 = vcvt.s32.f32 %v2010
      %v2018 = vmul.f32 %v2017, %v2015
      %v2019 = vxor.u32 %v2018, 2147483648
      %v2020 = vsel %vm1937, %v2019, %v2018
      %v2021 = vsub.s32 4, %v1997
      %v2022 = vsel %vm1937, %v2021, %v1997
      %v2023 = vsel %vm1936, %v797, %v2020
      %v2024 = vsel %vm1936, 0, %v2022
      %v2025 = vcosq.f32.pop %v2023
      %v2026 = vsinq.f32.pop %v2023
      %vm2027 = vweird.f32 %v797
      %v2028 = vand.u32 %v2024, 3
      %vm2029 = vcmp.lt.s32.totalorder %v2028, 2
      %vm2030 = vcmp.eq.s32.totalorder %v2028, 0
      %v2031 = vxor.u32 %v2026, 2147483648
      %v2032 = vsel %vm2030, %v2025, %v2031
      %vm2033 = vcmp.eq.s32.totalorder %v2028, 2
      %v2034 = vxor.u32 %v2025, 2147483648
      %v2035 = vsel %vm2033, %v2034, %v2026
      %v2036 = vsel %vm2029, %v2032, %v2035
      %v2037 = vsel %vm2027, nan, %v2036
      %v2038 = vand.u32 2147483647, %v802
      %vm2039 = vcmp.le.f32.partialorder %v2038, 0.7853982
      %vm2040 = vcmp.lt.s32.totalorder %v802, 0
      %v2041 = vand.u32 %v802, 2139095040
      %v2042 = vshrl.u32 %v2041, 23
      %v2043 = vsub.s32 %v2042, 127
      %v2044 = vand.u32 2147483647, %v802
      %v2045 = vand.u32 %v2044, 8388607
      %v2046 = vor.u32 %v2045, 8388608
      %v2047 = vsub.s32 0, %v2046
      %v2048 = vadd.s32 %v2043, 1
      %vm2049 = vcmp.gt.s32.totalorder %v2048, 0
      %v2050 = vsel %vm2049, %v2048, 0
      %v2051 = vshrl.u32 %v2050, 5
      %v2052 = vand.u32 %v2050, 31
      %v2053 = vsub.s32 32, %v2052
      %v2054 = vshrl.u32 683565275, %v2053
      %v2055 = vshll.u32 683565275, %v2052
      %v2056 = vshrl.u32 2475754826, %v2053
      %v2057 = vor.u32 %v2055, %v2056
      %v2058 = vshll.u32 2475754826, %v2052
      %v2059 = vshrl.u32 2131351028, %v2053
      %v2060 = vor.u32 %v2058, %v2059
      %v2061 = vshll.u32 2131351028, %v2052
      %v2062 = vshrl.u32 2102212464, %v2053
      %v2063 = vor.u32 %v2061, %v2062
      %v2064 = vshll.u32 2102212464, %v2052
      %v2065 = vshrl.u32 920167782, %v2053
      %v2066 = vor.u32 %v2064, %v2065
      %v2067 = vshll.u32 920167782, %v2052
      %v2068 = vshrl.u32 1326507024, %v2053
      %v2069 = vor.u32 %v2067, %v2068
      %vm2070 = vcmp.lt.s32.totalorder %v2051, 1
      %vm2071 = vcmp.lt.s32.totalorder %v2051, 2
      %vm2072 = vcmp.lt.s32.totalorder %v2051, 3
      %vm2073 = vcmp.lt.s32.totalorder %v2051, 4
      %v2074 = vsel %vm2070, %v2054, %v2057
      %v2075 = vsel %vm2073, %v2063, 2102212464
      %v2076 = vsel %vm2072, %v2060, %v2075
      %v2077 = vsel %vm2071, %v2074, %v2076
      %v2078 = vsel %vm2070, %v2057, %v2060
      %v2079 = vsel %vm2073, %v2066, 920167782
      %v2080 = vsel %vm2072, %v2063, %v2079
      %v2081 = vsel %vm2071, %v2078, %v2080
      %v2082 = vsel %vm2070, %v2060, %v2063
      %v2083 = vsel %vm2073, %v2069, 1326507024
      %v2084 = vsel %vm2072, %v2066, %v2083
      %v2085 = vsel %vm2071, %v2082, %v2084
      %v2086 = vshll.u32 %v2046, 8
      %v2087 = vmul.u32.u64.compose %v2086, %v2085
      %v2088 = vextract.low.u32 %v2087
      %v2089 = vextract.high.u32 %v2087
      %v2090 = vmul.u32.u64.compose %v2086, %v2081
      %v2091 = vextract.low.u32 %v2090
      %v2092 = vextract.high.u32 %v2090
      %v2093 = vmul.u32 %v2086, %v2077
      %v2094 = vadd.s32 %v2089, %v2091
      %vm2095 = vc.u32 %v2089, %v2091
      %v2096 = vadd.s32 %v2092, 1
      %v2097 = vsel %vm2095, %v2096, %v2092
      %v2098 = vadd.s32 %v2093, %v2097
      %v2099 = vadd.s32 %v2098, 536870912
      %v2100 = vshrl.u32 %v2099, 30
      %v2101 = vshll.u32 %v2100, 30
      %v2102 = vsub.s32 %v2098, %v2101
      %vm2103 = vcmp.lt.s32.totalorder %v2102, 0
      %v2104 = vsub.s32 0, %v2102
      %v2105 = vsel %vm2103, %v2104, %v2102
      %v2106 = vclz %v2105
      %v2107 = vsub.s32 %v2106, 2
      %vm2108 = vcmp.gt.s32.totalorder 0, %v2107
      %v2109 = vsel %vm2108, 0, %v2107
      %v2110 = vsub.s32 32, %v2109
      %v2111 = vshll.u32 %v2102, %v2109
      %v2112 = vshrl.u32 %v2094, %v2110
      %v2113 = vor.u32 %v2111, %v2112
      %v2114 = vsub.s32 4294967266, %v2109
      %v2115 = vadd.s32 %v2114, 127
      %v2116 = vshll.u32 %v2115, 23
      %v2117 = vor.u32 4788187, %v2116
      %v2118 = vand.u32 2147483647, %v2117
      %v2120 = vcvt.s32.f32 %v2113
      %v2121 = vmul.f32 %v2120, %v2118
      %v2122 = vxor.u32 %v2121, 2147483648
      %v2123 = vsel %vm2040, %v2122, %v2121
      %v2124 = vsub.s32 4, %v2100
      %v2125 = vsel %vm2040, %v2124, %v2100
      %v2126 = vsel %vm2039, %v802, %v2123
      %v2127 = vsel %vm2039, 0, %v2125
      %v2128 = vcosq.f32.pop %v2126
      %v2129 = vsinq.f32.pop %v2126
      %vm2130 = vweird.f32 %v802
      %v2131 = vand.u32 %v2127, 3
      %vm2132 = vcmp.lt.s32.totalorder %v2131, 2
      %vm2133 = vcmp.eq.s32.totalorder %v2131, 0
      %v2134 = vxor.u32 %v2129, 2147483648
      %v2135 = vsel %vm2133, %v2128, %v2134
      %vm2136 = vcmp.eq.s32.totalorder %v2131, 2
      %v2137 = vxor.u32 %v2128, 2147483648
      %v2138 = vsel %vm2136, %v2137, %v2129
      %v2139 = vsel %vm2132, %v2135, %v2138
      %v2140 = vsel %vm2130, nan, %v2139
      %v2141 = vand.u32 2147483647, %v807
      %vm2142 = vcmp.le.f32.partialorder %v2141, 0.7853982
      %vm2143 = vcmp.lt.s32.totalorder %v807, 0
      %v2144 = vand.u32 %v807, 2139095040
      %v2145 = vshrl.u32 %v2144, 23
      %v2146 = vsub.s32 %v2145, 127
      %v2147 = vand.u32 2147483647, %v807
      %v2148 = vand.u32 %v2147, 8388607
      %v2149 = vor.u32 %v2148, 8388608
      %v2150 = vsub.s32 0, %v2149
      %v2151 = vadd.s32 %v2146, 1
      %vm2152 = vcmp.gt.s32.totalorder %v2151, 0
      %v2153 = vsel %vm2152, %v2151, 0
      %v2154 = vshrl.u32 %v2153, 5
      %v2155 = vand.u32 %v2153, 31
      %v2156 = vsub.s32 32, %v2155
      %v2157 = vshrl.u32 683565275, %v2156
      %v2158 = vshll.u32 683565275, %v2155
      %v2159 = vshrl.u32 2475754826, %v2156
      %v2160 = vor.u32 %v2158, %v2159
      %v2161 = vshll.u32 2475754826, %v2155
      %v2162 = vshrl.u32 2131351028, %v2156
      %v2163 = vor.u32 %v2161, %v2162
      %v2164 = vshll.u32 2131351028, %v2155
      %v2165 = vshrl.u32 2102212464, %v2156
      %v2166 = vor.u32 %v2164, %v2165
      %v2167 = vshll.u32 2102212464, %v2155
      %v2168 = vshrl.u32 920167782, %v2156
      %v2169 = vor.u32 %v2167, %v2168
      %v2170 = vshll.u32 920167782, %v2155
      %v2171 = vshrl.u32 1326507024, %v2156
      %v2172 = vor.u32 %v2170, %v2171
      %vm2173 = vcmp.lt.s32.totalorder %v2154, 1
      %vm2174 = vcmp.lt.s32.totalorder %v2154, 2
      %vm2175 = vcmp.lt.s32.totalorder %v2154, 3
      %vm2176 = vcmp.lt.s32.totalorder %v2154, 4
      %v2177 = vsel %vm2173, %v2157, %v2160
      %v2178 = vsel %vm2176, %v2166, 2102212464
      %v2179 = vsel %vm2175, %v2163, %v2178
      %v2180 = vsel %vm2174, %v2177, %v2179
      %v2181 = vsel %vm2173, %v2160, %v2163
      %v2182 = vsel %vm2176, %v2169, 920167782
      %v2183 = vsel %vm2175, %v2166, %v2182
      %v2184 = vsel %vm2174, %v2181, %v2183
      %v2185 = vsel %vm2173, %v2163, %v2166
      %v2186 = vsel %vm2176, %v2172, 1326507024
      %v2187 = vsel %vm2175, %v2169, %v2186
      %v2188 = vsel %vm2174, %v2185, %v2187
      %v2189 = vshll.u32 %v2149, 8
      %v2190 = vmul.u32.u64.compose %v2189, %v2188
      %v2191 = vextract.low.u32 %v2190
      %v2192 = vextract.high.u32 %v2190
      %v2193 = vmul.u32.u64.compose %v2189, %v2184
      %v2194 = vextract.low.u32 %v2193
      %v2195 = vextract.high.u32 %v2193
      %v2196 = vmul.u32 %v2189, %v2180
      %v2197 = vadd.s32 %v2192, %v2194
      %vm2198 = vc.u32 %v2192, %v2194
      %v2199 = vadd.s32 %v2195, 1
      %v2200 = vsel %vm2198, %v2199, %v2195
      %v2201 = vadd.s32 %v2196, %v2200
      %v2202 = vadd.s32 %v2201, 536870912
      %v2203 = vshrl.u32 %v2202, 30
      %v2204 = vshll.u32 %v2203, 30
      %v2205 = vsub.s32 %v2201, %v2204
      %vm2206 = vcmp.lt.s32.totalorder %v2205, 0
      %v2207 = vsub.s32 0, %v2205
      %v2208 = vsel %vm2206, %v2207, %v2205
      %v2209 = vclz %v2208
      %v2210 = vsub.s32 %v2209, 2
      %vm2211 = vcmp.gt.s32.totalorder 0, %v2210
      %v2212 = vsel %vm2211, 0, %v2210
      %v2213 = vsub.s32 32, %v2212
      %v2214 = vshll.u32 %v2205, %v2212
      %v2215 = vshrl.u32 %v2197, %v2213
      %v2216 = vor.u32 %v2214, %v2215
      %v2217 = vsub.s32 4294967266, %v2212
      %v2218 = vadd.s32 %v2217, 127
      %v2219 = vshll.u32 %v2218, 23
      %v2220 = vor.u32 4788187, %v2219
      %v2221 = vand.u32 2147483647, %v2220
      %v2223 = vcvt.s32.f32 %v2216
      %v2224 = vmul.f32 %v2223, %v2221
      %v2225 = vxor.u32 %v2224, 2147483648
      %v2226 = vsel %vm2143, %v2225, %v2224
      %v2227 = vsub.s32 4, %v2203
      %v2228 = vsel %vm2143, %v2227, %v2203
      %v2229 = vsel %vm2142, %v807, %v2226
      %v2230 = vsel %vm2142, 0, %v2228
      %v2231 = vcosq.f32.pop %v2229
      %v2232 = vsinq.f32.pop %v2229
      %vm2233 = vweird.f32 %v807
      %v2234 = vand.u32 %v2230, 3
      %vm2235 = vcmp.lt.s32.totalorder %v2234, 2
      %vm2236 = vcmp.eq.s32.totalorder %v2234, 0
      %v2237 = vxor.u32 %v2232, 2147483648
      %v2238 = vsel %vm2236, %v2231, %v2237
      %vm2239 = vcmp.eq.s32.totalorder %v2234, 2
      %v2240 = vxor.u32 %v2231, 2147483648
      %v2241 = vsel %vm2239, %v2240, %v2232
      %v2242 = vsel %vm2235, %v2238, %v2241
      %v2243 = vsel %vm2233, nan, %v2242
      %v2244 = vand.u32 2147483647, %v812
      %vm2245 = vcmp.le.f32.partialorder %v2244, 0.7853982
      %vm2246 = vcmp.lt.s32.totalorder %v812, 0
      %v2247 = vand.u32 %v812, 2139095040
      %v2248 = vshrl.u32 %v2247, 23
      %v2249 = vsub.s32 %v2248, 127
      %v2250 = vand.u32 2147483647, %v812
      %v2251 = vand.u32 %v2250, 8388607
      %v2252 = vor.u32 %v2251, 8388608
      %v2253 = vsub.s32 0, %v2252
      %v2254 = vadd.s32 %v2249, 1
      %vm2255 = vcmp.gt.s32.totalorder %v2254, 0
      %v2256 = vsel %vm2255, %v2254, 0
      %v2257 = vshrl.u32 %v2256, 5
      %v2258 = vand.u32 %v2256, 31
      %v2259 = vsub.s32 32, %v2258
      %v2260 = vshrl.u32 683565275, %v2259
      %v2261 = vshll.u32 683565275, %v2258
      %v2262 = vshrl.u32 2475754826, %v2259
      %v2263 = vor.u32 %v2261, %v2262
      %v2264 = vshll.u32 2475754826, %v2258
      %v2265 = vshrl.u32 2131351028, %v2259
      %v2266 = vor.u32 %v2264, %v2265
      %v2267 = vshll.u32 2131351028, %v2258
      %v2268 = vshrl.u32 2102212464, %v2259
      %v2269 = vor.u32 %v2267, %v2268
      %v2270 = vshll.u32 2102212464, %v2258
      %v2271 = vshrl.u32 920167782, %v2259
      %v2272 = vor.u32 %v2270, %v2271
      %v2273 = vshll.u32 920167782, %v2258
      %v2274 = vshrl.u32 1326507024, %v2259
      %v2275 = vor.u32 %v2273, %v2274
      %vm2276 = vcmp.lt.s32.totalorder %v2257, 1
      %vm2277 = vcmp.lt.s32.totalorder %v2257, 2
      %vm2278 = vcmp.lt.s32.totalorder %v2257, 3
      %vm2279 = vcmp.lt.s32.totalorder %v2257, 4
      %v2280 = vsel %vm2276, %v2260, %v2263
      %v2281 = vsel %vm2279, %v2269, 2102212464
      %v2282 = vsel %vm2278, %v2266, %v2281
      %v2283 = vsel %vm2277, %v2280, %v2282
      %v2284 = vsel %vm2276, %v2263, %v2266
      %v2285 = vsel %vm2279, %v2272, 920167782
      %v2286 = vsel %vm2278, %v2269, %v2285
      %v2287 = vsel %vm2277, %v2284, %v2286
      %v2288 = vsel %vm2276, %v2266, %v2269
      %v2289 = vsel %vm2279, %v2275, 1326507024
      %v2290 = vsel %vm2278, %v2272, %v2289
      %v2291 = vsel %vm2277, %v2288, %v2290
      %v2292 = vshll.u32 %v2252, 8
      %v2293 = vmul.u32.u64.compose %v2292, %v2291
      %v2294 = vextract.low.u32 %v2293
      %v2295 = vextract.high.u32 %v2293
      %v2296 = vmul.u32.u64.compose %v2292, %v2287
      %v2297 = vextract.low.u32 %v2296
      %v2298 = vextract.high.u32 %v2296
      %v2299 = vmul.u32 %v2292, %v2283
      %v2300 = vadd.s32 %v2295, %v2297
      %vm2301 = vc.u32 %v2295, %v2297
      %v2302 = vadd.s32 %v2298, 1
      %v2303 = vsel %vm2301, %v2302, %v2298
      %v2304 = vadd.s32 %v2299, %v2303
      %v2305 = vadd.s32 %v2304, 536870912
      %v2306 = vshrl.u32 %v2305, 30
      %v2307 = vshll.u32 %v2306, 30
      %v2308 = vsub.s32 %v2304, %v2307
      %vm2309 = vcmp.lt.s32.totalorder %v2308, 0
      %v2310 = vsub.s32 0, %v2308
      %v2311 = vsel %vm2309, %v2310, %v2308
      %v2312 = vclz %v2311
      %v2313 = vsub.s32 %v2312, 2
      %vm2314 = vcmp.gt.s32.totalorder 0, %v2313
      %v2315 = vsel %vm2314, 0, %v2313
      %v2316 = vsub.s32 32, %v2315
      %v2317 = vshll.u32 %v2308, %v2315
      %v2318 = vshrl.u32 %v2300, %v2316
      %v2319 = vor.u32 %v2317, %v2318
      %v2320 = vsub.s32 4294967266, %v2315
      %v2321 = vadd.s32 %v2320, 127
      %v2322 = vshll.u32 %v2321, 23
      %v2323 = vor.u32 4788187, %v2322
      %v2324 = vand.u32 2147483647, %v2323
      %v2326 = vcvt.s32.f32 %v2319
      %v2327 = vmul.f32 %v2326, %v2324
      %v2328 = vxor.u32 %v2327, 2147483648
      %v2329 = vsel %vm2246, %v2328, %v2327
      %v2330 = vsub.s32 4, %v2306
      %v2331 = vsel %vm2246, %v2330, %v2306
      %v2332 = vsel %vm2245, %v812, %v2329
      %v2333 = vsel %vm2245, 0, %v2331
      %v2334 = vcosq.f32.pop %v2332
      %v2335 = vsinq.f32.pop %v2332
      %vm2336 = vweird.f32 %v812
      %v2337 = vand.u32 %v2333, 3
      %vm2338 = vcmp.lt.s32.totalorder %v2337, 2
      %vm2339 = vcmp.eq.s32.totalorder %v2337, 0
      %v2340 = vxor.u32 %v2335, 2147483648
      %v2341 = vsel %vm2339, %v2334, %v2340
      %vm2342 = vcmp.eq.s32.totalorder %v2337, 2
      %v2343 = vxor.u32 %v2334, 2147483648
      %v2344 = vsel %vm2342, %v2343, %v2335
      %v2345 = vsel %vm2338, %v2341, %v2344
      %v2346 = vsel %vm2336, nan, %v2345
      %v2347 = vand.u32 2147483647, %v817
      %vm2348 = vcmp.le.f32.partialorder %v2347, 0.7853982
      %vm2349 = vcmp.lt.s32.totalorder %v817, 0
      %v2350 = vand.u32 %v817, 2139095040
      %v2351 = vshrl.u32 %v2350, 23
      %v2352 = vsub.s32 %v2351, 127
      %v2353 = vand.u32 2147483647, %v817
      %v2354 = vand.u32 %v2353, 8388607
      %v2355 = vor.u32 %v2354, 8388608
      %v2356 = vsub.s32 0, %v2355
      %v2357 = vadd.s32 %v2352, 1
      %vm2358 = vcmp.gt.s32.totalorder %v2357, 0
      %v2359 = vsel %vm2358, %v2357, 0
      %v2360 = vshrl.u32 %v2359, 5
      %v2361 = vand.u32 %v2359, 31
      %v2362 = vsub.s32 32, %v2361
      %v2363 = vshrl.u32 683565275, %v2362
      %v2364 = vshll.u32 683565275, %v2361
      %v2365 = vshrl.u32 2475754826, %v2362
      %v2366 = vor.u32 %v2364, %v2365
      %v2367 = vshll.u32 2475754826, %v2361
      %v2368 = vshrl.u32 2131351028, %v2362
      %v2369 = vor.u32 %v2367, %v2368
      %v2370 = vshll.u32 2131351028, %v2361
      %v2371 = vshrl.u32 2102212464, %v2362
      %v2372 = vor.u32 %v2370, %v2371
      %v2373 = vshll.u32 2102212464, %v2361
      %v2374 = vshrl.u32 920167782, %v2362
      %v2375 = vor.u32 %v2373, %v2374
      %v2376 = vshll.u32 920167782, %v2361
      %v2377 = vshrl.u32 1326507024, %v2362
      %v2378 = vor.u32 %v2376, %v2377
      %vm2379 = vcmp.lt.s32.totalorder %v2360, 1
      %vm2380 = vcmp.lt.s32.totalorder %v2360, 2
      %vm2381 = vcmp.lt.s32.totalorder %v2360, 3
      %vm2382 = vcmp.lt.s32.totalorder %v2360, 4
      %v2383 = vsel %vm2379, %v2363, %v2366
      %v2384 = vsel %vm2382, %v2372, 2102212464
      %v2385 = vsel %vm2381, %v2369, %v2384
      %v2386 = vsel %vm2380, %v2383, %v2385
      %v2387 = vsel %vm2379, %v2366, %v2369
      %v2388 = vsel %vm2382, %v2375, 920167782
      %v2389 = vsel %vm2381, %v2372, %v2388
      %v2390 = vsel %vm2380, %v2387, %v2389
      %v2391 = vsel %vm2379, %v2369, %v2372
      %v2392 = vsel %vm2382, %v2378, 1326507024
      %v2393 = vsel %vm2381, %v2375, %v2392
      %v2394 = vsel %vm2380, %v2391, %v2393
      %v2395 = vshll.u32 %v2355, 8
      %v2396 = vmul.u32.u64.compose %v2395, %v2394
      %v2397 = vextract.low.u32 %v2396
      %v2398 = vextract.high.u32 %v2396
      %v2399 = vmul.u32.u64.compose %v2395, %v2390
      %v2400 = vextract.low.u32 %v2399
      %v2401 = vextract.high.u32 %v2399
      %v2402 = vmul.u32 %v2395, %v2386
      %v2403 = vadd.s32 %v2398, %v2400
      %vm2404 = vc.u32 %v2398, %v2400
      %v2405 = vadd.s32 %v2401, 1
      %v2406 = vsel %vm2404, %v2405, %v2401
      %v2407 = vadd.s32 %v2402, %v2406
      %v2408 = vadd.s32 %v2407, 536870912
      %v2409 = vshrl.u32 %v2408, 30
      %v2410 = vshll.u32 %v2409, 30
      %v2411 = vsub.s32 %v2407, %v2410
      %vm2412 = vcmp.lt.s32.totalorder %v2411, 0
      %v2413 = vsub.s32 0, %v2411
      %v2414 = vsel %vm2412, %v2413, %v2411
      %v2415 = vclz %v2414
      %v2416 = vsub.s32 %v2415, 2
      %vm2417 = vcmp.gt.s32.totalorder 0, %v2416
      %v2418 = vsel %vm2417, 0, %v2416
      %v2419 = vsub.s32 32, %v2418
      %v2420 = vshll.u32 %v2411, %v2418
      %v2421 = vshrl.u32 %v2403, %v2419
      %v2422 = vor.u32 %v2420, %v2421
      %v2423 = vsub.s32 4294967266, %v2418
      %v2424 = vadd.s32 %v2423, 127
      %v2425 = vshll.u32 %v2424, 23
      %v2426 = vor.u32 4788187, %v2425
      %v2427 = vand.u32 2147483647, %v2426
      %v2429 = vcvt.s32.f32 %v2422
      %v2430 = vmul.f32 %v2429, %v2427
      %v2431 = vxor.u32 %v2430, 2147483648
      %v2432 = vsel %vm2349, %v2431, %v2430
      %v2433 = vsub.s32 4, %v2409
      %v2434 = vsel %vm2349, %v2433, %v2409
      %v2435 = vsel %vm2348, %v817, %v2432
      %v2436 = vsel %vm2348, 0, %v2434
      %v2437 = vcosq.f32.pop %v2435
      %v2438 = vsinq.f32.pop %v2435
      %vm2439 = vweird.f32 %v817
      %v2440 = vand.u32 %v2436, 3
      %vm2441 = vcmp.lt.s32.totalorder %v2440, 2
      %vm2442 = vcmp.eq.s32.totalorder %v2440, 0
      %v2443 = vxor.u32 %v2438, 2147483648
      %v2444 = vsel %vm2442, %v2437, %v2443
      %vm2445 = vcmp.eq.s32.totalorder %v2440, 2
      %v2446 = vxor.u32 %v2437, 2147483648
      %v2447 = vsel %vm2445, %v2446, %v2438
      %v2448 = vsel %vm2441, %v2444, %v2447
      %v2449 = vsel %vm2439, nan, %v2448
      %v2450 = vand.u32 2147483647, %v822
      %vm2451 = vcmp.le.f32.partialorder %v2450, 0.7853982
      %vm2452 = vcmp.lt.s32.totalorder %v822, 0
      %v2453 = vand.u32 %v822, 2139095040
      %v2454 = vshrl.u32 %v2453, 23
      %v2455 = vsub.s32 %v2454, 127
      %v2456 = vand.u32 2147483647, %v822
      %v2457 = vand.u32 %v2456, 8388607
      %v2458 = vor.u32 %v2457, 8388608
      %v2459 = vsub.s32 0, %v2458
      %v2460 = vadd.s32 %v2455, 1
      %vm2461 = vcmp.gt.s32.totalorder %v2460, 0
      %v2462 = vsel %vm2461, %v2460, 0
      %v2463 = vshrl.u32 %v2462, 5
      %v2464 = vand.u32 %v2462, 31
      %v2465 = vsub.s32 32, %v2464
      %v2466 = vshrl.u32 683565275, %v2465
      %v2467 = vshll.u32 683565275, %v2464
      %v2468 = vshrl.u32 2475754826, %v2465
      %v2469 = vor.u32 %v2467, %v2468
      %v2470 = vshll.u32 2475754826, %v2464
      %v2471 = vshrl.u32 2131351028, %v2465
      %v2472 = vor.u32 %v2470, %v2471
      %v2473 = vshll.u32 2131351028, %v2464
      %v2474 = vshrl.u32 2102212464, %v2465
      %v2475 = vor.u32 %v2473, %v2474
      %v2476 = vshll.u32 2102212464, %v2464
      %v2477 = vshrl.u32 920167782, %v2465
      %v2478 = vor.u32 %v2476, %v2477
      %v2479 = vshll.u32 920167782, %v2464
      %v2480 = vshrl.u32 1326507024, %v2465
      %v2481 = vor.u32 %v2479, %v2480
      %vm2482 = vcmp.lt.s32.totalorder %v2463, 1
      %vm2483 = vcmp.lt.s32.totalorder %v2463, 2
      %vm2484 = vcmp.lt.s32.totalorder %v2463, 3
      %vm2485 = vcmp.lt.s32.totalorder %v2463, 4
      %v2486 = vsel %vm2482, %v2466, %v2469
      %v2487 = vsel %vm2485, %v2475, 2102212464
      %v2488 = vsel %vm2484, %v2472, %v2487
      %v2489 = vsel %vm2483, %v2486, %v2488
      %v2490 = vsel %vm2482, %v2469, %v2472
      %v2491 = vsel %vm2485, %v2478, 920167782
      %v2492 = vsel %vm2484, %v2475, %v2491
      %v2493 = vsel %vm2483, %v2490, %v2492
      %v2494 = vsel %vm2482, %v2472, %v2475
      %v2495 = vsel %vm2485, %v2481, 1326507024
      %v2496 = vsel %vm2484, %v2478, %v2495
      %v2497 = vsel %vm2483, %v2494, %v2496
      %v2498 = vshll.u32 %v2458, 8
      %v2499 = vmul.u32.u64.compose %v2498, %v2497
      %v2500 = vextract.low.u32 %v2499
      %v2501 = vextract.high.u32 %v2499
      %v2502 = vmul.u32.u64.compose %v2498, %v2493
      %v2503 = vextract.low.u32 %v2502
      %v2504 = vextract.high.u32 %v2502
      %v2505 = vmul.u32 %v2498, %v2489
      %v2506 = vadd.s32 %v2501, %v2503
      %vm2507 = vc.u32 %v2501, %v2503
      %v2508 = vadd.s32 %v2504, 1
      %v2509 = vsel %vm2507, %v2508, %v2504
      %v2510 = vadd.s32 %v2505, %v2509
      %v2511 = vadd.s32 %v2510, 536870912
      %v2512 = vshrl.u32 %v2511, 30
      %v2513 = vshll.u32 %v2512, 30
      %v2514 = vsub.s32 %v2510, %v2513
      %vm2515 = vcmp.lt.s32.totalorder %v2514, 0
      %v2516 = vsub.s32 0, %v2514
      %v2517 = vsel %vm2515, %v2516, %v2514
      %v2518 = vclz %v2517
      %v2519 = vsub.s32 %v2518, 2
      %vm2520 = vcmp.gt.s32.totalorder 0, %v2519
      %v2521 = vsel %vm2520, 0, %v2519
      %v2522 = vsub.s32 32, %v2521
      %v2523 = vshll.u32 %v2514, %v2521
      %v2524 = vshrl.u32 %v2506, %v2522
      %v2525 = vor.u32 %v2523, %v2524
      %v2526 = vsub.s32 4294967266, %v2521
      %v2527 = vadd.s32 %v2526, 127
      %v2528 = vshll.u32 %v2527, 23
      %v2529 = vor.u32 4788187, %v2528
      %v2530 = vand.u32 2147483647, %v2529
      %v2532 = vcvt.s32.f32 %v2525
      %v2533 = vmul.f32 %v2532, %v2530
      %v2534 = vxor.u32 %v2533, 2147483648
      %v2535 = vsel %vm2452, %v2534, %v2533
      %v2536 = vsub.s32 4, %v2512
      %v2537 = vsel %vm2452, %v2536, %v2512
      %v2538 = vsel %vm2451, %v822, %v2535
      %v2539 = vsel %vm2451, 0, %v2537
      %v2540 = vcosq.f32.pop %v2538
      %v2541 = vsinq.f32.pop %v2538
      %vm2542 = vweird.f32 %v822
      %v2543 = vand.u32 %v2539, 3
      %vm2544 = vcmp.lt.s32.totalorder %v2543, 2
      %vm2545 = vcmp.eq.s32.totalorder %v2543, 0
      %v2546 = vxor.u32 %v2541, 2147483648
      %v2547 = vsel %vm2545, %v2540, %v2546
      %vm2548 = vcmp.eq.s32.totalorder %v2543, 2
      %v2549 = vxor.u32 %v2540, 2147483648
      %v2550 = vsel %vm2548, %v2549, %v2541
      %v2551 = vsel %vm2544, %v2547, %v2550
      %v2552 = vsel %vm2542, nan, %v2551
      %v2553 = vand.u32 2147483647, %v827
      %vm2554 = vcmp.le.f32.partialorder %v2553, 0.7853982
      %vm2555 = vcmp.lt.s32.totalorder %v827, 0
      %v2556 = vand.u32 %v827, 2139095040
      %v2557 = vshrl.u32 %v2556, 23
      %v2558 = vsub.s32 %v2557, 127
      %v2559 = vand.u32 2147483647, %v827
      %v2560 = vand.u32 %v2559, 8388607
      %v2561 = vor.u32 %v2560, 8388608
      %v2562 = vsub.s32 0, %v2561
      %v2563 = vadd.s32 %v2558, 1
      %vm2564 = vcmp.gt.s32.totalorder %v2563, 0
      %v2565 = vsel %vm2564, %v2563, 0
      %v2566 = vshrl.u32 %v2565, 5
      %v2567 = vand.u32 %v2565, 31
      %v2568 = vsub.s32 32, %v2567
      %v2569 = vshrl.u32 683565275, %v2568
      %v2570 = vshll.u32 683565275, %v2567
      %v2571 = vshrl.u32 2475754826, %v2568
      %v2572 = vor.u32 %v2570, %v2571
      %v2573 = vshll.u32 2475754826, %v2567
      %v2574 = vshrl.u32 2131351028, %v2568
      %v2575 = vor.u32 %v2573, %v2574
      %v2576 = vshll.u32 2131351028, %v2567
      %v2577 = vshrl.u32 2102212464, %v2568
      %v2578 = vor.u32 %v2576, %v2577
      %v2579 = vshll.u32 2102212464, %v2567
      %v2580 = vshrl.u32 920167782, %v2568
      %v2581 = vor.u32 %v2579, %v2580
      %v2582 = vshll.u32 920167782, %v2567
      %v2583 = vshrl.u32 1326507024, %v2568
      %v2584 = vor.u32 %v2582, %v2583
      %vm2585 = vcmp.lt.s32.totalorder %v2566, 1
      %vm2586 = vcmp.lt.s32.totalorder %v2566, 2
      %vm2587 = vcmp.lt.s32.totalorder %v2566, 3
      %vm2588 = vcmp.lt.s32.totalorder %v2566, 4
      %v2589 = vsel %vm2585, %v2569, %v2572
      %v2590 = vsel %vm2588, %v2578, 2102212464
      %v2591 = vsel %vm2587, %v2575, %v2590
      %v2592 = vsel %vm2586, %v2589, %v2591
      %v2593 = vsel %vm2585, %v2572, %v2575
      %v2594 = vsel %vm2588, %v2581, 920167782
      %v2595 = vsel %vm2587, %v2578, %v2594
      %v2596 = vsel %vm2586, %v2593, %v2595
      %v2597 = vsel %vm2585, %v2575, %v2578
      %v2598 = vsel %vm2588, %v2584, 1326507024
      %v2599 = vsel %vm2587, %v2581, %v2598
      %v2600 = vsel %vm2586, %v2597, %v2599
      %v2601 = vshll.u32 %v2561, 8
      %v2602 = vmul.u32.u64.compose %v2601, %v2600
      %v2603 = vextract.low.u32 %v2602
      %v2604 = vextract.high.u32 %v2602
      %v2605 = vmul.u32.u64.compose %v2601, %v2596
      %v2606 = vextract.low.u32 %v2605
      %v2607 = vextract.high.u32 %v2605
      %v2608 = vmul.u32 %v2601, %v2592
      %v2609 = vadd.s32 %v2604, %v2606
      %vm2610 = vc.u32 %v2604, %v2606
      %v2611 = vadd.s32 %v2607, 1
      %v2612 = vsel %vm2610, %v2611, %v2607
      %v2613 = vadd.s32 %v2608, %v2612
      %v2614 = vadd.s32 %v2613, 536870912
      %v2615 = vshrl.u32 %v2614, 30
      %v2616 = vshll.u32 %v2615, 30
      %v2617 = vsub.s32 %v2613, %v2616
      %vm2618 = vcmp.lt.s32.totalorder %v2617, 0
      %v2619 = vsub.s32 0, %v2617
      %v2620 = vsel %vm2618, %v2619, %v2617
      %v2621 = vclz %v2620
      %v2622 = vsub.s32 %v2621, 2
      %vm2623 = vcmp.gt.s32.totalorder 0, %v2622
      %v2624 = vsel %vm2623, 0, %v2622
      %v2625 = vsub.s32 32, %v2624
      %v2626 = vshll.u32 %v2617, %v2624
      %v2627 = vshrl.u32 %v2609, %v2625
      %v2628 = vor.u32 %v2626, %v2627
      %v2629 = vsub.s32 4294967266, %v2624
      %v2630 = vadd.s32 %v2629, 127
      %v2631 = vshll.u32 %v2630, 23
      %v2632 = vor.u32 4788187, %v2631
      %v2633 = vand.u32 2147483647, %v2632
      %v2635 = vcvt.s32.f32 %v2628
      %v2636 = vmul.f32 %v2635, %v2633
      %v2637 = vxor.u32 %v2636, 2147483648
      %v2638 = vsel %vm2555, %v2637, %v2636
      %v2639 = vsub.s32 4, %v2615
      %v2640 = vsel %vm2555, %v2639, %v2615
      %v2641 = vsel %vm2554, %v827, %v2638
      %v2642 = vsel %vm2554, 0, %v2640
      %v2643 = vcosq.f32.pop %v2641
      %v2644 = vsinq.f32.pop %v2641
      %vm2645 = vweird.f32 %v827
      %v2646 = vand.u32 %v2642, 3
      %vm2647 = vcmp.lt.s32.totalorder %v2646, 2
      %vm2648 = vcmp.eq.s32.totalorder %v2646, 0
      %v2649 = vxor.u32 %v2644, 2147483648
      %v2650 = vsel %vm2648, %v2643, %v2649
      %vm2651 = vcmp.eq.s32.totalorder %v2646, 2
      %v2652 = vxor.u32 %v2643, 2147483648
      %v2653 = vsel %vm2651, %v2652, %v2644
      %v2654 = vsel %vm2647, %v2650, %v2653
      %v2655 = vsel %vm2645, nan, %v2654
      %v2656 = vand.u32 2147483647, %v832
      %vm2657 = vcmp.le.f32.partialorder %v2656, 0.7853982
      %vm2658 = vcmp.lt.s32.totalorder %v832, 0
      %v2659 = vand.u32 %v832, 2139095040
      %v2660 = vshrl.u32 %v2659, 23
      %v2661 = vsub.s32 %v2660, 127
      %v2662 = vand.u32 2147483647, %v832
      %v2663 = vand.u32 %v2662, 8388607
      %v2664 = vor.u32 %v2663, 8388608
      %v2665 = vsub.s32 0, %v2664
      %v2666 = vadd.s32 %v2661, 1
      %vm2667 = vcmp.gt.s32.totalorder %v2666, 0
      %v2668 = vsel %vm2667, %v2666, 0
      %v2669 = vshrl.u32 %v2668, 5
      %v2670 = vand.u32 %v2668, 31
      %v2671 = vsub.s32 32, %v2670
      %v2672 = vshrl.u32 683565275, %v2671
      %v2673 = vshll.u32 683565275, %v2670
      %v2674 = vshrl.u32 2475754826, %v2671
      %v2675 = vor.u32 %v2673, %v2674
      %v2676 = vshll.u32 2475754826, %v2670
      %v2677 = vshrl.u32 2131351028, %v2671
      %v2678 = vor.u32 %v2676, %v2677
      %v2679 = vshll.u32 2131351028, %v2670
      %v2680 = vshrl.u32 2102212464, %v2671
      %v2681 = vor.u32 %v2679, %v2680
      %v2682 = vshll.u32 2102212464, %v2670
      %v2683 = vshrl.u32 920167782, %v2671
      %v2684 = vor.u32 %v2682, %v2683
      %v2685 = vshll.u32 920167782, %v2670
      %v2686 = vshrl.u32 1326507024, %v2671
      %v2687 = vor.u32 %v2685, %v2686
      %vm2688 = vcmp.lt.s32.totalorder %v2669, 1
      %vm2689 = vcmp.lt.s32.totalorder %v2669, 2
      %vm2690 = vcmp.lt.s32.totalorder %v2669, 3
      %vm2691 = vcmp.lt.s32.totalorder %v2669, 4
      %v2692 = vsel %vm2688, %v2672, %v2675
      %v2693 = vsel %vm2691, %v2681, 2102212464
      %v2694 = vsel %vm2690, %v2678, %v2693
      %v2695 = vsel %vm2689, %v2692, %v2694
      %v2696 = vsel %vm2688, %v2675, %v2678
      %v2697 = vsel %vm2691, %v2684, 920167782
      %v2698 = vsel %vm2690, %v2681, %v2697
      %v2699 = vsel %vm2689, %v2696, %v2698
      %v2700 = vsel %vm2688, %v2678, %v2681
      %v2701 = vsel %vm2691, %v2687, 1326507024
      %v2702 = vsel %vm2690, %v2684, %v2701
      %v2703 = vsel %vm2689, %v2700, %v2702
      %v2704 = vshll.u32 %v2664, 8
      %v2705 = vmul.u32.u64.compose %v2704, %v2703
      %v2706 = vextract.low.u32 %v2705
      %v2707 = vextract.high.u32 %v2705
      %v2708 = vmul.u32.u64.compose %v2704, %v2699
      %v2709 = vextract.low.u32 %v2708
      %v2710 = vextract.high.u32 %v2708
      %v2711 = vmul.u32 %v2704, %v2695
      %v2712 = vadd.s32 %v2707, %v2709
      %vm2713 = vc.u32 %v2707, %v2709
      %v2714 = vadd.s32 %v2710, 1
      %v2715 = vsel %vm2713, %v2714, %v2710
      %v2716 = vadd.s32 %v2711, %v2715
      %v2717 = vadd.s32 %v2716, 536870912
      %v2718 = vshrl.u32 %v2717, 30
      %v2719 = vshll.u32 %v2718, 30
      %v2720 = vsub.s32 %v2716, %v2719
      %vm2721 = vcmp.lt.s32.totalorder %v2720, 0
      %v2722 = vsub.s32 0, %v2720
      %v2723 = vsel %vm2721, %v2722, %v2720
      %v2724 = vclz %v2723
      %v2725 = vsub.s32 %v2724, 2
      %vm2726 = vcmp.gt.s32.totalorder 0, %v2725
      %v2727 = vsel %vm2726, 0, %v2725
      %v2728 = vsub.s32 32, %v2727
      %v2729 = vshll.u32 %v2720, %v2727
      %v2730 = vshrl.u32 %v2712, %v2728
      %v2731 = vor.u32 %v2729, %v2730
      %v2732 = vsub.s32 4294967266, %v2727
      %v2733 = vadd.s32 %v2732, 127
      %v2734 = vshll.u32 %v2733, 23
      %v2735 = vor.u32 4788187, %v2734
      %v2736 = vand.u32 2147483647, %v2735
      %v2738 = vcvt.s32.f32 %v2731
      %v2739 = vmul.f32 %v2738, %v2736
      %v2740 = vxor.u32 %v2739, 2147483648
      %v2741 = vsel %vm2658, %v2740, %v2739
      %v2742 = vsub.s32 4, %v2718
      %v2743 = vsel %vm2658, %v2742, %v2718
      %v2744 = vsel %vm2657, %v832, %v2741
      %v2745 = vsel %vm2657, 0, %v2743
      %v2746 = vcosq.f32.pop %v2744
      %v2747 = vsinq.f32.pop %v2744
      %vm2748 = vweird.f32 %v832
      %v2749 = vand.u32 %v2745, 3
      %vm2750 = vcmp.lt.s32.totalorder %v2749, 2
      %vm2751 = vcmp.eq.s32.totalorder %v2749, 0
      %v2752 = vxor.u32 %v2747, 2147483648
      %v2753 = vsel %vm2751, %v2746, %v2752
      %vm2754 = vcmp.eq.s32.totalorder %v2749, 2
      %v2755 = vxor.u32 %v2746, 2147483648
      %v2756 = vsel %vm2754, %v2755, %v2747
      %v2757 = vsel %vm2750, %v2753, %v2756
      %v2758 = vsel %vm2748, nan, %v2757
      %v2759 = vand.u32 2147483647, %v837
      %vm2760 = vcmp.le.f32.partialorder %v2759, 0.7853982
      %vm2761 = vcmp.lt.s32.totalorder %v837, 0
      %v2762 = vand.u32 %v837, 2139095040
      %v2763 = vshrl.u32 %v2762, 23
      %v2764 = vsub.s32 %v2763, 127
      %v2765 = vand.u32 2147483647, %v837
      %v2766 = vand.u32 %v2765, 8388607
      %v2767 = vor.u32 %v2766, 8388608
      %v2768 = vsub.s32 0, %v2767
      %v2769 = vadd.s32 %v2764, 1
      %vm2770 = vcmp.gt.s32.totalorder %v2769, 0
      %v2771 = vsel %vm2770, %v2769, 0
      %v2772 = vshrl.u32 %v2771, 5
      %v2773 = vand.u32 %v2771, 31
      %v2774 = vsub.s32 32, %v2773
      %v2775 = vshrl.u32 683565275, %v2774
      %v2776 = vshll.u32 683565275, %v2773
      %v2777 = vshrl.u32 2475754826, %v2774
      %v2778 = vor.u32 %v2776, %v2777
      %v2779 = vshll.u32 2475754826, %v2773
      %v2780 = vshrl.u32 2131351028, %v2774
      %v2781 = vor.u32 %v2779, %v2780
      %v2782 = vshll.u32 2131351028, %v2773
      %v2783 = vshrl.u32 2102212464, %v2774
      %v2784 = vor.u32 %v2782, %v2783
      %v2785 = vshll.u32 2102212464, %v2773
      %v2786 = vshrl.u32 920167782, %v2774
      %v2787 = vor.u32 %v2785, %v2786
      %v2788 = vshll.u32 920167782, %v2773
      %v2789 = vshrl.u32 1326507024, %v2774
      %v2790 = vor.u32 %v2788, %v2789
      %vm2791 = vcmp.lt.s32.totalorder %v2772, 1
      %vm2792 = vcmp.lt.s32.totalorder %v2772, 2
      %vm2793 = vcmp.lt.s32.totalorder %v2772, 3
      %vm2794 = vcmp.lt.s32.totalorder %v2772, 4
      %v2795 = vsel %vm2791, %v2775, %v2778
      %v2796 = vsel %vm2794, %v2784, 2102212464
      %v2797 = vsel %vm2793, %v2781, %v2796
      %v2798 = vsel %vm2792, %v2795, %v2797
      %v2799 = vsel %vm2791, %v2778, %v2781
      %v2800 = vsel %vm2794, %v2787, 920167782
      %v2801 = vsel %vm2793, %v2784, %v2800
      %v2802 = vsel %vm2792, %v2799, %v2801
      %v2803 = vsel %vm2791, %v2781, %v2784
      %v2804 = vsel %vm2794, %v2790, 1326507024
      %v2805 = vsel %vm2793, %v2787, %v2804
      %v2806 = vsel %vm2792, %v2803, %v2805
      %v2807 = vshll.u32 %v2767, 8
      %v2808 = vmul.u32.u64.compose %v2807, %v2806
      %v2809 = vextract.low.u32 %v2808
      %v2810 = vextract.high.u32 %v2808
      %v2811 = vmul.u32.u64.compose %v2807, %v2802
      %v2812 = vextract.low.u32 %v2811
      %v2813 = vextract.high.u32 %v2811
      %v2814 = vmul.u32 %v2807, %v2798
      %v2815 = vadd.s32 %v2810, %v2812
      %vm2816 = vc.u32 %v2810, %v2812
      %v2817 = vadd.s32 %v2813, 1
      %v2818 = vsel %vm2816, %v2817, %v2813
      %v2819 = vadd.s32 %v2814, %v2818
      %v2820 = vadd.s32 %v2819, 536870912
      %v2821 = vshrl.u32 %v2820, 30
      %v2822 = vshll.u32 %v2821, 30
      %v2823 = vsub.s32 %v2819, %v2822
      %vm2824 = vcmp.lt.s32.totalorder %v2823, 0
      %v2825 = vsub.s32 0, %v2823
      %v2826 = vsel %vm2824, %v2825, %v2823
      %v2827 = vclz %v2826
      %v2828 = vsub.s32 %v2827, 2
      %vm2829 = vcmp.gt.s32.totalorder 0, %v2828
      %v2830 = vsel %vm2829, 0, %v2828
      %v2831 = vsub.s32 32, %v2830
      %v2832 = vshll.u32 %v2823, %v2830
      %v2833 = vshrl.u32 %v2815, %v2831
      %v2834 = vor.u32 %v2832, %v2833
      %v2835 = vsub.s32 4294967266, %v2830
      %v2836 = vadd.s32 %v2835, 127
      %v2837 = vshll.u32 %v2836, 23
      %v2838 = vor.u32 4788187, %v2837
      %v2839 = vand.u32 2147483647, %v2838
      %v2841 = vcvt.s32.f32 %v2834
      %v2842 = vmul.f32 %v2841, %v2839
      %v2843 = vxor.u32 %v2842, 2147483648
      %v2844 = vsel %vm2761, %v2843, %v2842
      %v2845 = vsub.s32 4, %v2821
      %v2846 = vsel %vm2761, %v2845, %v2821
      %v2847 = vsel %vm2760, %v837, %v2844
      %v2848 = vsel %vm2760, 0, %v2846
      %v2849 = vcosq.f32.pop %v2847
      %v2850 = vsinq.f32.pop %v2847
      %vm2851 = vweird.f32 %v837
      %v2852 = vand.u32 %v2848, 3
      %vm2853 = vcmp.lt.s32.totalorder %v2852, 2
      %vm2854 = vcmp.eq.s32.totalorder %v2852, 0
      %v2855 = vxor.u32 %v2850, 2147483648
      %v2856 = vsel %vm2854, %v2849, %v2855
      %vm2857 = vcmp.eq.s32.totalorder %v2852, 2
      %v2858 = vxor.u32 %v2849, 2147483648
      %v2859 = vsel %vm2857, %v2858, %v2850
      %v2860 = vsel %vm2853, %v2856, %v2859
      %v2861 = vsel %vm2851, nan, %v2860
      %v2862 = vand.u32 2147483647, %v842
      %vm2863 = vcmp.le.f32.partialorder %v2862, 0.7853982
      %vm2864 = vcmp.lt.s32.totalorder %v842, 0
      %v2865 = vand.u32 %v842, 2139095040
      %v2866 = vshrl.u32 %v2865, 23
      %v2867 = vsub.s32 %v2866, 127
      %v2868 = vand.u32 2147483647, %v842
      %v2869 = vand.u32 %v2868, 8388607
      %v2870 = vor.u32 %v2869, 8388608
      %v2871 = vsub.s32 0, %v2870
      %v2872 = vadd.s32 %v2867, 1
      %vm2873 = vcmp.gt.s32.totalorder %v2872, 0
      %v2874 = vsel %vm2873, %v2872, 0
      %v2875 = vshrl.u32 %v2874, 5
      %v2876 = vand.u32 %v2874, 31
      %v2877 = vsub.s32 32, %v2876
      %v2878 = vshrl.u32 683565275, %v2877
      %v2879 = vshll.u32 683565275, %v2876
      %v2880 = vshrl.u32 2475754826, %v2877
      %v2881 = vor.u32 %v2879, %v2880
      %v2882 = vshll.u32 2475754826, %v2876
      %v2883 = vshrl.u32 2131351028, %v2877
      %v2884 = vor.u32 %v2882, %v2883
      %v2885 = vshll.u32 2131351028, %v2876
      %v2886 = vshrl.u32 2102212464, %v2877
      %v2887 = vor.u32 %v2885, %v2886
      %v2888 = vshll.u32 2102212464, %v2876
      %v2889 = vshrl.u32 920167782, %v2877
      %v2890 = vor.u32 %v2888, %v2889
      %v2891 = vshll.u32 920167782, %v2876
      %v2892 = vshrl.u32 1326507024, %v2877
      %v2893 = vor.u32 %v2891, %v2892
      %vm2894 = vcmp.lt.s32.totalorder %v2875, 1
      %vm2895 = vcmp.lt.s32.totalorder %v2875, 2
      %vm2896 = vcmp.lt.s32.totalorder %v2875, 3
      %vm2897 = vcmp.lt.s32.totalorder %v2875, 4
      %v2898 = vsel %vm2894, %v2878, %v2881
      %v2899 = vsel %vm2897, %v2887, 2102212464
      %v2900 = vsel %vm2896, %v2884, %v2899
      %v2901 = vsel %vm2895, %v2898, %v2900
      %v2902 = vsel %vm2894, %v2881, %v2884
      %v2903 = vsel %vm2897, %v2890, 920167782
      %v2904 = vsel %vm2896, %v2887, %v2903
      %v2905 = vsel %vm2895, %v2902, %v2904
      %v2906 = vsel %vm2894, %v2884, %v2887
      %v2907 = vsel %vm2897, %v2893, 1326507024
      %v2908 = vsel %vm2896, %v2890, %v2907
      %v2909 = vsel %vm2895, %v2906, %v2908
      %v2910 = vshll.u32 %v2870, 8
      %v2911 = vmul.u32.u64.compose %v2910, %v2909
      %v2912 = vextract.low.u32 %v2911
      %v2913 = vextract.high.u32 %v2911
      %v2914 = vmul.u32.u64.compose %v2910, %v2905
      %v2915 = vextract.low.u32 %v2914
      %v2916 = vextract.high.u32 %v2914
      %v2917 = vmul.u32 %v2910, %v2901
      %v2918 = vadd.s32 %v2913, %v2915
      %vm2919 = vc.u32 %v2913, %v2915
      %v2920 = vadd.s32 %v2916, 1
      %v2921 = vsel %vm2919, %v2920, %v2916
      %v2922 = vadd.s32 %v2917, %v2921
      %v2923 = vadd.s32 %v2922, 536870912
      %v2924 = vshrl.u32 %v2923, 30
      %v2925 = vshll.u32 %v2924, 30
      %v2926 = vsub.s32 %v2922, %v2925
      %vm2927 = vcmp.lt.s32.totalorder %v2926, 0
      %v2928 = vsub.s32 0, %v2926
      %v2929 = vsel %vm2927, %v2928, %v2926
      %v2930 = vclz %v2929
      %v2931 = vsub.s32 %v2930, 2
      %vm2932 = vcmp.gt.s32.totalorder 0, %v2931
      %v2933 = vsel %vm2932, 0, %v2931
      %v2934 = vsub.s32 32, %v2933
      %v2935 = vshll.u32 %v2926, %v2933
      %v2936 = vshrl.u32 %v2918, %v2934
      %v2937 = vor.u32 %v2935, %v2936
      %v2938 = vsub.s32 4294967266, %v2933
      %v2939 = vadd.s32 %v2938, 127
      %v2940 = vshll.u32 %v2939, 23
      %v2941 = vor.u32 4788187, %v2940
      %v2942 = vand.u32 2147483647, %v2941
      %v2944 = vcvt.s32.f32 %v2937
      %v2945 = vmul.f32 %v2944, %v2942
      %v2946 = vxor.u32 %v2945, 2147483648
      %v2947 = vsel %vm2864, %v2946, %v2945
      %v2948 = vsub.s32 4, %v2924
      %v2949 = vsel %vm2864, %v2948, %v2924
      %v2950 = vsel %vm2863, %v842, %v2947
      %v2951 = vsel %vm2863, 0, %v2949
      %v2952 = vcosq.f32.pop %v2950
      %v2953 = vsinq.f32.pop %v2950
      %vm2954 = vweird.f32 %v842
      %v2955 = vand.u32 %v2951, 3
      %vm2956 = vcmp.lt.s32.totalorder %v2955, 2
      %vm2957 = vcmp.eq.s32.totalorder %v2955, 0
      %v2958 = vxor.u32 %v2953, 2147483648
      %v2959 = vsel %vm2957, %v2952, %v2958
      %vm2960 = vcmp.eq.s32.totalorder %v2955, 2
      %v2961 = vxor.u32 %v2952, 2147483648
      %v2962 = vsel %vm2960, %v2961, %v2953
      %v2963 = vsel %vm2956, %v2959, %v2962
      %v2964 = vsel %vm2954, nan, %v2963
      %v2965 = vand.u32 2147483647, %v847
      %vm2966 = vcmp.le.f32.partialorder %v2965, 0.7853982
      %vm2967 = vcmp.lt.s32.totalorder %v847, 0
      %v2968 = vand.u32 %v847, 2139095040
      %v2969 = vshrl.u32 %v2968, 23
      %v2970 = vsub.s32 %v2969, 127
      %v2971 = vand.u32 2147483647, %v847
      %v2972 = vand.u32 %v2971, 8388607
      %v2973 = vor.u32 %v2972, 8388608
      %v2974 = vsub.s32 0, %v2973
      %v2975 = vadd.s32 %v2970, 1
      %vm2976 = vcmp.gt.s32.totalorder %v2975, 0
      %v2977 = vsel %vm2976, %v2975, 0
      %v2978 = vshrl.u32 %v2977, 5
      %v2979 = vand.u32 %v2977, 31
      %v2980 = vsub.s32 32, %v2979
      %v2981 = vshrl.u32 683565275, %v2980
      %v2982 = vshll.u32 683565275, %v2979
      %v2983 = vshrl.u32 2475754826, %v2980
      %v2984 = vor.u32 %v2982, %v2983
      %v2985 = vshll.u32 2475754826, %v2979
      %v2986 = vshrl.u32 2131351028, %v2980
      %v2987 = vor.u32 %v2985, %v2986
      %v2988 = vshll.u32 2131351028, %v2979
      %v2989 = vshrl.u32 2102212464, %v2980
      %v2990 = vor.u32 %v2988, %v2989
      %v2991 = vshll.u32 2102212464, %v2979
      %v2992 = vshrl.u32 920167782, %v2980
      %v2993 = vor.u32 %v2991, %v2992
      %v2994 = vshll.u32 920167782, %v2979
      %v2995 = vshrl.u32 1326507024, %v2980
      %v2996 = vor.u32 %v2994, %v2995
      %vm2997 = vcmp.lt.s32.totalorder %v2978, 1
      %vm2998 = vcmp.lt.s32.totalorder %v2978, 2
      %vm2999 = vcmp.lt.s32.totalorder %v2978, 3
      %vm3000 = vcmp.lt.s32.totalorder %v2978, 4
      %v3001 = vsel %vm2997, %v2981, %v2984
      %v3002 = vsel %vm3000, %v2990, 2102212464
      %v3003 = vsel %vm2999, %v2987, %v3002
      %v3004 = vsel %vm2998, %v3001, %v3003
      %v3005 = vsel %vm2997, %v2984, %v2987
      %v3006 = vsel %vm3000, %v2993, 920167782
      %v3007 = vsel %vm2999, %v2990, %v3006
      %v3008 = vsel %vm2998, %v3005, %v3007
      %v3009 = vsel %vm2997, %v2987, %v2990
      %v3010 = vsel %vm3000, %v2996, 1326507024
      %v3011 = vsel %vm2999, %v2993, %v3010
      %v3012 = vsel %vm2998, %v3009, %v3011
      %v3013 = vshll.u32 %v2973, 8
      %v3014 = vmul.u32.u64.compose %v3013, %v3012
      %v3015 = vextract.low.u32 %v3014
      %v3016 = vextract.high.u32 %v3014
      %v3017 = vmul.u32.u64.compose %v3013, %v3008
      %v3018 = vextract.low.u32 %v3017
      %v3019 = vextract.high.u32 %v3017
      %v3020 = vmul.u32 %v3013, %v3004
      %v3021 = vadd.s32 %v3016, %v3018
      %vm3022 = vc.u32 %v3016, %v3018
      %v3023 = vadd.s32 %v3019, 1
      %v3024 = vsel %vm3022, %v3023, %v3019
      %v3025 = vadd.s32 %v3020, %v3024
      %v3026 = vadd.s32 %v3025, 536870912
      %v3027 = vshrl.u32 %v3026, 30
      %v3028 = vshll.u32 %v3027, 30
      %v3029 = vsub.s32 %v3025, %v3028
      %vm3030 = vcmp.lt.s32.totalorder %v3029, 0
      %v3031 = vsub.s32 0, %v3029
      %v3032 = vsel %vm3030, %v3031, %v3029
      %v3033 = vclz %v3032
      %v3034 = vsub.s32 %v3033, 2
      %vm3035 = vcmp.gt.s32.totalorder 0, %v3034
      %v3036 = vsel %vm3035, 0, %v3034
      %v3037 = vsub.s32 32, %v3036
      %v3038 = vshll.u32 %v3029, %v3036
      %v3039 = vshrl.u32 %v3021, %v3037
      %v3040 = vor.u32 %v3038, %v3039
      %v3041 = vsub.s32 4294967266, %v3036
      %v3042 = vadd.s32 %v3041, 127
      %v3043 = vshll.u32 %v3042, 23
      %v3044 = vor.u32 4788187, %v3043
      %v3045 = vand.u32 2147483647, %v3044
      %v3047 = vcvt.s32.f32 %v3040
      %v3048 = vmul.f32 %v3047, %v3045
      %v3049 = vxor.u32 %v3048, 2147483648
      %v3050 = vsel %vm2967, %v3049, %v3048
      %v3051 = vsub.s32 4, %v3027
      %v3052 = vsel %vm2967, %v3051, %v3027
      %v3053 = vsel %vm2966, %v847, %v3050
      %v3054 = vsel %vm2966, 0, %v3052
      %v3055 = vcosq.f32.pop %v3053
      %v3056 = vsinq.f32.pop %v3053
      %vm3057 = vweird.f32 %v847
      %v3058 = vand.u32 %v3054, 3
      %vm3059 = vcmp.lt.s32.totalorder %v3058, 2
      %vm3060 = vcmp.eq.s32.totalorder %v3058, 0
      %v3061 = vxor.u32 %v3056, 2147483648
      %v3062 = vsel %vm3060, %v3055, %v3061
      %vm3063 = vcmp.eq.s32.totalorder %v3058, 2
      %v3064 = vxor.u32 %v3055, 2147483648
      %v3065 = vsel %vm3063, %v3064, %v3056
      %v3066 = vsel %vm3059, %v3062, %v3065
      %v3067 = vsel %vm3057, nan, %v3066
      %v3068 = vand.u32 2147483647, %v852
      %vm3069 = vcmp.le.f32.partialorder %v3068, 0.7853982
      %vm3070 = vcmp.lt.s32.totalorder %v852, 0
      %v3071 = vand.u32 %v852, 2139095040
      %v3072 = vshrl.u32 %v3071, 23
      %v3073 = vsub.s32 %v3072, 127
      %v3074 = vand.u32 2147483647, %v852
      %v3075 = vand.u32 %v3074, 8388607
      %v3076 = vor.u32 %v3075, 8388608
      %v3077 = vsub.s32 0, %v3076
      %v3078 = vadd.s32 %v3073, 1
      %vm3079 = vcmp.gt.s32.totalorder %v3078, 0
      %v3080 = vsel %vm3079, %v3078, 0
      %v3081 = vshrl.u32 %v3080, 5
      %v3082 = vand.u32 %v3080, 31
      %v3083 = vsub.s32 32, %v3082
      %v3084 = vshrl.u32 683565275, %v3083
      %v3085 = vshll.u32 683565275, %v3082
      %v3086 = vshrl.u32 2475754826, %v3083
      %v3087 = vor.u32 %v3085, %v3086
      %v3088 = vshll.u32 2475754826, %v3082
      %v3089 = vshrl.u32 2131351028, %v3083
      %v3090 = vor.u32 %v3088, %v3089
      %v3091 = vshll.u32 2131351028, %v3082
      %v3092 = vshrl.u32 2102212464, %v3083
      %v3093 = vor.u32 %v3091, %v3092
      %v3094 = vshll.u32 2102212464, %v3082
      %v3095 = vshrl.u32 920167782, %v3083
      %v3096 = vor.u32 %v3094, %v3095
      %v3097 = vshll.u32 920167782, %v3082
      %v3098 = vshrl.u32 1326507024, %v3083
      %v3099 = vor.u32 %v3097, %v3098
      %vm3100 = vcmp.lt.s32.totalorder %v3081, 1
      %vm3101 = vcmp.lt.s32.totalorder %v3081, 2
      %vm3102 = vcmp.lt.s32.totalorder %v3081, 3
      %vm3103 = vcmp.lt.s32.totalorder %v3081, 4
      %v3104 = vsel %vm3100, %v3084, %v3087
      %v3105 = vsel %vm3103, %v3093, 2102212464
      %v3106 = vsel %vm3102, %v3090, %v3105
      %v3107 = vsel %vm3101, %v3104, %v3106
      %v3108 = vsel %vm3100, %v3087, %v3090
      %v3109 = vsel %vm3103, %v3096, 920167782
      %v3110 = vsel %vm3102, %v3093, %v3109
      %v3111 = vsel %vm3101, %v3108, %v3110
      %v3112 = vsel %vm3100, %v3090, %v3093
      %v3113 = vsel %vm3103, %v3099, 1326507024
      %v3114 = vsel %vm3102, %v3096, %v3113
      %v3115 = vsel %vm3101, %v3112, %v3114
      %v3116 = vshll.u32 %v3076, 8
      %v3117 = vmul.u32.u64.compose %v3116, %v3115
      %v3118 = vextract.low.u32 %v3117
      %v3119 = vextract.high.u32 %v3117
      %v3120 = vmul.u32.u64.compose %v3116, %v3111
      %v3121 = vextract.low.u32 %v3120
      %v3122 = vextract.high.u32 %v3120
      %v3123 = vmul.u32 %v3116, %v3107
      %v3124 = vadd.s32 %v3119, %v3121
      %vm3125 = vc.u32 %v3119, %v3121
      %v3126 = vadd.s32 %v3122, 1
      %v3127 = vsel %vm3125, %v3126, %v3122
      %v3128 = vadd.s32 %v3123, %v3127
      %v3129 = vadd.s32 %v3128, 536870912
      %v3130 = vshrl.u32 %v3129, 30
      %v3131 = vshll.u32 %v3130, 30
      %v3132 = vsub.s32 %v3128, %v3131
      %vm3133 = vcmp.lt.s32.totalorder %v3132, 0
      %v3134 = vsub.s32 0, %v3132
      %v3135 = vsel %vm3133, %v3134, %v3132
      %v3136 = vclz %v3135
      %v3137 = vsub.s32 %v3136, 2
      %vm3138 = vcmp.gt.s32.totalorder 0, %v3137
      %v3139 = vsel %vm3138, 0, %v3137
      %v3140 = vsub.s32 32, %v3139
      %v3141 = vshll.u32 %v3132, %v3139
      %v3142 = vshrl.u32 %v3124, %v3140
      %v3143 = vor.u32 %v3141, %v3142
      %v3144 = vsub.s32 4294967266, %v3139
      %v3145 = vadd.s32 %v3144, 127
      %v3146 = vshll.u32 %v3145, 23
      %v3147 = vor.u32 4788187, %v3146
      %v3148 = vand.u32 2147483647, %v3147
      %v3150 = vcvt.s32.f32 %v3143
      %v3151 = vmul.f32 %v3150, %v3148
      %v3152 = vxor.u32 %v3151, 2147483648
      %v3153 = vsel %vm3070, %v3152, %v3151
      %v3154 = vsub.s32 4, %v3130
      %v3155 = vsel %vm3070, %v3154, %v3130
      %v3156 = vsel %vm3069, %v852, %v3153
      %v3157 = vsel %vm3069, 0, %v3155
      %v3158 = vcosq.f32.pop %v3156
      %v3159 = vsinq.f32.pop %v3156
      %vm3160 = vweird.f32 %v852
      %v3161 = vand.u32 %v3157, 3
      %vm3162 = vcmp.lt.s32.totalorder %v3161, 2
      %vm3163 = vcmp.eq.s32.totalorder %v3161, 0
      %v3164 = vxor.u32 %v3159, 2147483648
      %v3165 = vsel %vm3163, %v3158, %v3164
      %vm3166 = vcmp.eq.s32.totalorder %v3161, 2
      %v3167 = vxor.u32 %v3158, 2147483648
      %v3168 = vsel %vm3166, %v3167, %v3159
      %v3169 = vsel %vm3162, %v3165, %v3168
      %v3170 = vsel %vm3160, nan, %v3169
      %v3171 = vand.u32 2147483647, %v857
      %vm3172 = vcmp.le.f32.partialorder %v3171, 0.7853982
      %vm3173 = vcmp.lt.s32.totalorder %v857, 0
      %v3174 = vand.u32 %v857, 2139095040
      %v3175 = vshrl.u32 %v3174, 23
      %v3176 = vsub.s32 %v3175, 127
      %v3177 = vand.u32 2147483647, %v857
      %v3178 = vand.u32 %v3177, 8388607
      %v3179 = vor.u32 %v3178, 8388608
      %v3180 = vsub.s32 0, %v3179
      %v3181 = vadd.s32 %v3176, 1
      %vm3182 = vcmp.gt.s32.totalorder %v3181, 0
      %v3183 = vsel %vm3182, %v3181, 0
      %v3184 = vshrl.u32 %v3183, 5
      %v3185 = vand.u32 %v3183, 31
      %v3186 = vsub.s32 32, %v3185
      %v3187 = vshrl.u32 683565275, %v3186
      %v3188 = vshll.u32 683565275, %v3185
      %v3189 = vshrl.u32 2475754826, %v3186
      %v3190 = vor.u32 %v3188, %v3189
      %v3191 = vshll.u32 2475754826, %v3185
      %v3192 = vshrl.u32 2131351028, %v3186
      %v3193 = vor.u32 %v3191, %v3192
      %v3194 = vshll.u32 2131351028, %v3185
      %v3195 = vshrl.u32 2102212464, %v3186
      %v3196 = vor.u32 %v3194, %v3195
      %v3197 = vshll.u32 2102212464, %v3185
      %v3198 = vshrl.u32 920167782, %v3186
      %v3199 = vor.u32 %v3197, %v3198
      %v3200 = vshll.u32 920167782, %v3185
      %v3201 = vshrl.u32 1326507024, %v3186
      %v3202 = vor.u32 %v3200, %v3201
      %vm3203 = vcmp.lt.s32.totalorder %v3184, 1
      %vm3204 = vcmp.lt.s32.totalorder %v3184, 2
      %vm3205 = vcmp.lt.s32.totalorder %v3184, 3
      %vm3206 = vcmp.lt.s32.totalorder %v3184, 4
      %v3207 = vsel %vm3203, %v3187, %v3190
      %v3208 = vsel %vm3206, %v3196, 2102212464
      %v3209 = vsel %vm3205, %v3193, %v3208
      %v3210 = vsel %vm3204, %v3207, %v3209
      %v3211 = vsel %vm3203, %v3190, %v3193
      %v3212 = vsel %vm3206, %v3199, 920167782
      %v3213 = vsel %vm3205, %v3196, %v3212
      %v3214 = vsel %vm3204, %v3211, %v3213
      %v3215 = vsel %vm3203, %v3193, %v3196
      %v3216 = vsel %vm3206, %v3202, 1326507024
      %v3217 = vsel %vm3205, %v3199, %v3216
      %v3218 = vsel %vm3204, %v3215, %v3217
      %v3219 = vshll.u32 %v3179, 8
      %v3220 = vmul.u32.u64.compose %v3219, %v3218
      %v3221 = vextract.low.u32 %v3220
      %v3222 = vextract.high.u32 %v3220
      %v3223 = vmul.u32.u64.compose %v3219, %v3214
      %v3224 = vextract.low.u32 %v3223
      %v3225 = vextract.high.u32 %v3223
      %v3226 = vmul.u32 %v3219, %v3210
      %v3227 = vadd.s32 %v3222, %v3224
      %vm3228 = vc.u32 %v3222, %v3224
      %v3229 = vadd.s32 %v3225, 1
      %v3230 = vsel %vm3228, %v3229, %v3225
      %v3231 = vadd.s32 %v3226, %v3230
      %v3232 = vadd.s32 %v3231, 536870912
      %v3233 = vshrl.u32 %v3232, 30
      %v3234 = vshll.u32 %v3233, 30
      %v3235 = vsub.s32 %v3231, %v3234
      %vm3236 = vcmp.lt.s32.totalorder %v3235, 0
      %v3237 = vsub.s32 0, %v3235
      %v3238 = vsel %vm3236, %v3237, %v3235
      %v3239 = vclz %v3238
      %v3240 = vsub.s32 %v3239, 2
      %vm3241 = vcmp.gt.s32.totalorder 0, %v3240
      %v3242 = vsel %vm3241, 0, %v3240
      %v3243 = vsub.s32 32, %v3242
      %v3244 = vshll.u32 %v3235, %v3242
      %v3245 = vshrl.u32 %v3227, %v3243
      %v3246 = vor.u32 %v3244, %v3245
      %v3247 = vsub.s32 4294967266, %v3242
      %v3248 = vadd.s32 %v3247, 127
      %v3249 = vshll.u32 %v3248, 23
      %v3250 = vor.u32 4788187, %v3249
      %v3251 = vand.u32 2147483647, %v3250
      %v3253 = vcvt.s32.f32 %v3246
      %v3254 = vmul.f32 %v3253, %v3251
      %v3255 = vxor.u32 %v3254, 2147483648
      %v3256 = vsel %vm3173, %v3255, %v3254
      %v3257 = vsub.s32 4, %v3233
      %v3258 = vsel %vm3173, %v3257, %v3233
      %v3259 = vsel %vm3172, %v857, %v3256
      %v3260 = vsel %vm3172, 0, %v3258
      %v3261 = vcosq.f32.pop %v3259
      %v3262 = vsinq.f32.pop %v3259
      %vm3263 = vweird.f32 %v857
      %v3264 = vand.u32 %v3260, 3
      %vm3265 = vcmp.lt.s32.totalorder %v3264, 2
      %vm3266 = vcmp.eq.s32.totalorder %v3264, 0
      %v3267 = vxor.u32 %v3262, 2147483648
      %v3268 = vsel %vm3266, %v3261, %v3267
      %vm3269 = vcmp.eq.s32.totalorder %v3264, 2
      %v3270 = vxor.u32 %v3261, 2147483648
      %v3271 = vsel %vm3269, %v3270, %v3262
      %v3272 = vsel %vm3265, %v3268, %v3271
      %v3273 = vsel %vm3263, nan, %v3272
      %v3274 = vand.u32 2147483647, %v862
      %vm3275 = vcmp.le.f32.partialorder %v3274, 0.7853982
      %vm3276 = vcmp.lt.s32.totalorder %v862, 0
      %v3277 = vand.u32 %v862, 2139095040
      %v3278 = vshrl.u32 %v3277, 23
      %v3279 = vsub.s32 %v3278, 127
      %v3280 = vand.u32 2147483647, %v862
      %v3281 = vand.u32 %v3280, 8388607
      %v3282 = vor.u32 %v3281, 8388608
      %v3283 = vsub.s32 0, %v3282
      %v3284 = vadd.s32 %v3279, 1
      %vm3285 = vcmp.gt.s32.totalorder %v3284, 0
      %v3286 = vsel %vm3285, %v3284, 0
      %v3287 = vshrl.u32 %v3286, 5
      %v3288 = vand.u32 %v3286, 31
      %v3289 = vsub.s32 32, %v3288
      %v3290 = vshrl.u32 683565275, %v3289
      %v3291 = vshll.u32 683565275, %v3288
      %v3292 = vshrl.u32 2475754826, %v3289
      %v3293 = vor.u32 %v3291, %v3292
      %v3294 = vshll.u32 2475754826, %v3288
      %v3295 = vshrl.u32 2131351028, %v3289
      %v3296 = vor.u32 %v3294, %v3295
      %v3297 = vshll.u32 2131351028, %v3288
      %v3298 = vshrl.u32 2102212464, %v3289
      %v3299 = vor.u32 %v3297, %v3298
      %v3300 = vshll.u32 2102212464, %v3288
      %v3301 = vshrl.u32 920167782, %v3289
      %v3302 = vor.u32 %v3300, %v3301
      %v3303 = vshll.u32 920167782, %v3288
      %v3304 = vshrl.u32 1326507024, %v3289
      %v3305 = vor.u32 %v3303, %v3304
      %vm3306 = vcmp.lt.s32.totalorder %v3287, 1
      %vm3307 = vcmp.lt.s32.totalorder %v3287, 2
      %vm3308 = vcmp.lt.s32.totalorder %v3287, 3
      %vm3309 = vcmp.lt.s32.totalorder %v3287, 4
      %v3310 = vsel %vm3306, %v3290, %v3293
      %v3311 = vsel %vm3309, %v3299, 2102212464
      %v3312 = vsel %vm3308, %v3296, %v3311
      %v3313 = vsel %vm3307, %v3310, %v3312
      %v3314 = vsel %vm3306, %v3293, %v3296
      %v3315 = vsel %vm3309, %v3302, 920167782
      %v3316 = vsel %vm3308, %v3299, %v3315
      %v3317 = vsel %vm3307, %v3314, %v3316
      %v3318 = vsel %vm3306, %v3296, %v3299
      %v3319 = vsel %vm3309, %v3305, 1326507024
      %v3320 = vsel %vm3308, %v3302, %v3319
      %v3321 = vsel %vm3307, %v3318, %v3320
      %v3322 = vshll.u32 %v3282, 8
      %v3323 = vmul.u32.u64.compose %v3322, %v3321
      %v3324 = vextract.low.u32 %v3323
      %v3325 = vextract.high.u32 %v3323
      %v3326 = vmul.u32.u64.compose %v3322, %v3317
      %v3327 = vextract.low.u32 %v3326
      %v3328 = vextract.high.u32 %v3326
      %v3329 = vmul.u32 %v3322, %v3313
      %v3330 = vadd.s32 %v3325, %v3327
      %vm3331 = vc.u32 %v3325, %v3327
      %v3332 = vadd.s32 %v3328, 1
      %v3333 = vsel %vm3331, %v3332, %v3328
      %v3334 = vadd.s32 %v3329, %v3333
      %v3335 = vadd.s32 %v3334, 536870912
      %v3336 = vshrl.u32 %v3335, 30
      %v3337 = vshll.u32 %v3336, 30
      %v3338 = vsub.s32 %v3334, %v3337
      %vm3339 = vcmp.lt.s32.totalorder %v3338, 0
      %v3340 = vsub.s32 0, %v3338
      %v3341 = vsel %vm3339, %v3340, %v3338
      %v3342 = vclz %v3341
      %v3343 = vsub.s32 %v3342, 2
      %vm3344 = vcmp.gt.s32.totalorder 0, %v3343
      %v3345 = vsel %vm3344, 0, %v3343
      %v3346 = vsub.s32 32, %v3345
      %v3347 = vshll.u32 %v3338, %v3345
      %v3348 = vshrl.u32 %v3330, %v3346
      %v3349 = vor.u32 %v3347, %v3348
      %v3350 = vsub.s32 4294967266, %v3345
      %v3351 = vadd.s32 %v3350, 127
      %v3352 = vshll.u32 %v3351, 23
      %v3353 = vor.u32 4788187, %v3352
      %v3354 = vand.u32 2147483647, %v3353
      %v3356 = vcvt.s32.f32 %v3349
      %v3357 = vmul.f32 %v3356, %v3354
      %v3358 = vxor.u32 %v3357, 2147483648
      %v3359 = vsel %vm3276, %v3358, %v3357
      %v3360 = vsub.s32 4, %v3336
      %v3361 = vsel %vm3276, %v3360, %v3336
      %v3362 = vsel %vm3275, %v862, %v3359
      %v3363 = vsel %vm3275, 0, %v3361
      %v3364 = vcosq.f32.pop %v3362
      %v3365 = vsinq.f32.pop %v3362
      %vm3366 = vweird.f32 %v862
      %v3367 = vand.u32 %v3363, 3
      %vm3368 = vcmp.lt.s32.totalorder %v3367, 2
      %vm3369 = vcmp.eq.s32.totalorder %v3367, 0
      %v3370 = vxor.u32 %v3365, 2147483648
      %v3371 = vsel %vm3369, %v3364, %v3370
      %vm3372 = vcmp.eq.s32.totalorder %v3367, 2
      %v3373 = vxor.u32 %v3364, 2147483648
      %v3374 = vsel %vm3372, %v3373, %v3365
      %v3375 = vsel %vm3368, %v3371, %v3374
      %v3376 = vsel %vm3366, nan, %v3375
      %v3377 = vand.u32 2147483647, %v867
      %vm3378 = vcmp.le.f32.partialorder %v3377, 0.7853982
      %vm3379 = vcmp.lt.s32.totalorder %v867, 0
      %v3380 = vand.u32 %v867, 2139095040
      %v3381 = vshrl.u32 %v3380, 23
      %v3382 = vsub.s32 %v3381, 127
      %v3383 = vand.u32 2147483647, %v867
      %v3384 = vand.u32 %v3383, 8388607
      %v3385 = vor.u32 %v3384, 8388608
      %v3386 = vsub.s32 0, %v3385
      %v3387 = vadd.s32 %v3382, 1
      %vm3388 = vcmp.gt.s32.totalorder %v3387, 0
      %v3389 = vsel %vm3388, %v3387, 0
      %v3390 = vshrl.u32 %v3389, 5
      %v3391 = vand.u32 %v3389, 31
      %v3392 = vsub.s32 32, %v3391
      %v3393 = vshrl.u32 683565275, %v3392
      %v3394 = vshll.u32 683565275, %v3391
      %v3395 = vshrl.u32 2475754826, %v3392
      %v3396 = vor.u32 %v3394, %v3395
      %v3397 = vshll.u32 2475754826, %v3391
      %v3398 = vshrl.u32 2131351028, %v3392
      %v3399 = vor.u32 %v3397, %v3398
      %v3400 = vshll.u32 2131351028, %v3391
      %v3401 = vshrl.u32 2102212464, %v3392
      %v3402 = vor.u32 %v3400, %v3401
      %v3403 = vshll.u32 2102212464, %v3391
      %v3404 = vshrl.u32 920167782, %v3392
      %v3405 = vor.u32 %v3403, %v3404
      %v3406 = vshll.u32 920167782, %v3391
      %v3407 = vshrl.u32 1326507024, %v3392
      %v3408 = vor.u32 %v3406, %v3407
      %vm3409 = vcmp.lt.s32.totalorder %v3390, 1
      %vm3410 = vcmp.lt.s32.totalorder %v3390, 2
      %vm3411 = vcmp.lt.s32.totalorder %v3390, 3
      %vm3412 = vcmp.lt.s32.totalorder %v3390, 4
      %v3413 = vsel %vm3409, %v3393, %v3396
      %v3414 = vsel %vm3412, %v3402, 2102212464
      %v3415 = vsel %vm3411, %v3399, %v3414
      %v3416 = vsel %vm3410, %v3413, %v3415
      %v3417 = vsel %vm3409, %v3396, %v3399
      %v3418 = vsel %vm3412, %v3405, 920167782
      %v3419 = vsel %vm3411, %v3402, %v3418
      %v3420 = vsel %vm3410, %v3417, %v3419
      %v3421 = vsel %vm3409, %v3399, %v3402
      %v3422 = vsel %vm3412, %v3408, 1326507024
      %v3423 = vsel %vm3411, %v3405, %v3422
      %v3424 = vsel %vm3410, %v3421, %v3423
      %v3425 = vshll.u32 %v3385, 8
      %v3426 = vmul.u32.u64.compose %v3425, %v3424
      %v3427 = vextract.low.u32 %v3426
      %v3428 = vextract.high.u32 %v3426
      %v3429 = vmul.u32.u64.compose %v3425, %v3420
      %v3430 = vextract.low.u32 %v3429
      %v3431 = vextract.high.u32 %v3429
      %v3432 = vmul.u32 %v3425, %v3416
      %v3433 = vadd.s32 %v3428, %v3430
      %vm3434 = vc.u32 %v3428, %v3430
      %v3435 = vadd.s32 %v3431, 1
      %v3436 = vsel %vm3434, %v3435, %v3431
      %v3437 = vadd.s32 %v3432, %v3436
      %v3438 = vadd.s32 %v3437, 536870912
      %v3439 = vshrl.u32 %v3438, 30
      %v3440 = vshll.u32 %v3439, 30
      %v3441 = vsub.s32 %v3437, %v3440
      %vm3442 = vcmp.lt.s32.totalorder %v3441, 0
      %v3443 = vsub.s32 0, %v3441
      %v3444 = vsel %vm3442, %v3443, %v3441
      %v3445 = vclz %v3444
      %v3446 = vsub.s32 %v3445, 2
      %vm3447 = vcmp.gt.s32.totalorder 0, %v3446
      %v3448 = vsel %vm3447, 0, %v3446
      %v3449 = vsub.s32 32, %v3448
      %v3450 = vshll.u32 %v3441, %v3448
      %v3451 = vshrl.u32 %v3433, %v3449
      %v3452 = vor.u32 %v3450, %v3451
      %v3453 = vsub.s32 4294967266, %v3448
      %v3454 = vadd.s32 %v3453, 127
      %v3455 = vshll.u32 %v3454, 23
      %v3456 = vor.u32 4788187, %v3455
      %v3457 = vand.u32 2147483647, %v3456
      %v3459 = vcvt.s32.f32 %v3452
      %v3460 = vmul.f32 %v3459, %v3457
      %v3461 = vxor.u32 %v3460, 2147483648
      %v3462 = vsel %vm3379, %v3461, %v3460
      %v3463 = vsub.s32 4, %v3439
      %v3464 = vsel %vm3379, %v3463, %v3439
      %v3465 = vsel %vm3378, %v867, %v3462
      %v3466 = vsel %vm3378, 0, %v3464
      %v3467 = vcosq.f32.pop %v3465
      %v3468 = vsinq.f32.pop %v3465
      %vm3469 = vweird.f32 %v867
      %v3470 = vand.u32 %v3466, 3
      %vm3471 = vcmp.lt.s32.totalorder %v3470, 2
      %vm3472 = vcmp.eq.s32.totalorder %v3470, 0
      %v3473 = vxor.u32 %v3468, 2147483648
      %v3474 = vsel %vm3472, %v3467, %v3473
      %vm3475 = vcmp.eq.s32.totalorder %v3470, 2
      %v3476 = vxor.u32 %v3467, 2147483648
      %v3477 = vsel %vm3475, %v3476, %v3468
      %v3478 = vsel %vm3471, %v3474, %v3477
      %v3479 = vsel %vm3469, nan, %v3478
      %v3480 = vand.u32 2147483647, %v872
      %vm3481 = vcmp.le.f32.partialorder %v3480, 0.7853982
      %vm3482 = vcmp.lt.s32.totalorder %v872, 0
      %v3483 = vand.u32 %v872, 2139095040
      %v3484 = vshrl.u32 %v3483, 23
      %v3485 = vsub.s32 %v3484, 127
      %v3486 = vand.u32 2147483647, %v872
      %v3487 = vand.u32 %v3486, 8388607
      %v3488 = vor.u32 %v3487, 8388608
      %v3489 = vsub.s32 0, %v3488
      %v3490 = vadd.s32 %v3485, 1
      %vm3491 = vcmp.gt.s32.totalorder %v3490, 0
      %v3492 = vsel %vm3491, %v3490, 0
      %v3493 = vshrl.u32 %v3492, 5
      %v3494 = vand.u32 %v3492, 31
      %v3495 = vsub.s32 32, %v3494
      %v3496 = vshrl.u32 683565275, %v3495
      %v3497 = vshll.u32 683565275, %v3494
      %v3498 = vshrl.u32 2475754826, %v3495
      %v3499 = vor.u32 %v3497, %v3498
      %v3500 = vshll.u32 2475754826, %v3494
      %v3501 = vshrl.u32 2131351028, %v3495
      %v3502 = vor.u32 %v3500, %v3501
      %v3503 = vshll.u32 2131351028, %v3494
      %v3504 = vshrl.u32 2102212464, %v3495
      %v3505 = vor.u32 %v3503, %v3504
      %v3506 = vshll.u32 2102212464, %v3494
      %v3507 = vshrl.u32 920167782, %v3495
      %v3508 = vor.u32 %v3506, %v3507
      %v3509 = vshll.u32 920167782, %v3494
      %v3510 = vshrl.u32 1326507024, %v3495
      %v3511 = vor.u32 %v3509, %v3510
      %vm3512 = vcmp.lt.s32.totalorder %v3493, 1
      %vm3513 = vcmp.lt.s32.totalorder %v3493, 2
      %vm3514 = vcmp.lt.s32.totalorder %v3493, 3
      %vm3515 = vcmp.lt.s32.totalorder %v3493, 4
      %v3516 = vsel %vm3512, %v3496, %v3499
      %v3517 = vsel %vm3515, %v3505, 2102212464
      %v3518 = vsel %vm3514, %v3502, %v3517
      %v3519 = vsel %vm3513, %v3516, %v3518
      %v3520 = vsel %vm3512, %v3499, %v3502
      %v3521 = vsel %vm3515, %v3508, 920167782
      %v3522 = vsel %vm3514, %v3505, %v3521
      %v3523 = vsel %vm3513, %v3520, %v3522
      %v3524 = vsel %vm3512, %v3502, %v3505
      %v3525 = vsel %vm3515, %v3511, 1326507024
      %v3526 = vsel %vm3514, %v3508, %v3525
      %v3527 = vsel %vm3513, %v3524, %v3526
      %v3528 = vshll.u32 %v3488, 8
      %v3529 = vmul.u32.u64.compose %v3528, %v3527
      %v3530 = vextract.low.u32 %v3529
      %v3531 = vextract.high.u32 %v3529
      %v3532 = vmul.u32.u64.compose %v3528, %v3523
      %v3533 = vextract.low.u32 %v3532
      %v3534 = vextract.high.u32 %v3532
      %v3535 = vmul.u32 %v3528, %v3519
      %v3536 = vadd.s32 %v3531, %v3533
      %vm3537 = vc.u32 %v3531, %v3533
      %v3538 = vadd.s32 %v3534, 1
      %v3539 = vsel %vm3537, %v3538, %v3534
      %v3540 = vadd.s32 %v3535, %v3539
      %v3541 = vadd.s32 %v3540, 536870912
      %v3542 = vshrl.u32 %v3541, 30
      %v3543 = vshll.u32 %v3542, 30
      %v3544 = vsub.s32 %v3540, %v3543
      %vm3545 = vcmp.lt.s32.totalorder %v3544, 0
      %v3546 = vsub.s32 0, %v3544
      %v3547 = vsel %vm3545, %v3546, %v3544
      %v3548 = vclz %v3547
      %v3549 = vsub.s32 %v3548, 2
      %vm3550 = vcmp.gt.s32.totalorder 0, %v3549
      %v3551 = vsel %vm3550, 0, %v3549
      %v3552 = vsub.s32 32, %v3551
      %v3553 = vshll.u32 %v3544, %v3551
      %v3554 = vshrl.u32 %v3536, %v3552
      %v3555 = vor.u32 %v3553, %v3554
      %v3556 = vsub.s32 4294967266, %v3551
      %v3557 = vadd.s32 %v3556, 127
      %v3558 = vshll.u32 %v3557, 23
      %v3559 = vor.u32 4788187, %v3558
      %v3560 = vand.u32 2147483647, %v3559
      %v3562 = vcvt.s32.f32 %v3555
      %v3563 = vmul.f32 %v3562, %v3560
      %v3564 = vxor.u32 %v3563, 2147483648
      %v3565 = vsel %vm3482, %v3564, %v3563
      %v3566 = vsub.s32 4, %v3542
      %v3567 = vsel %vm3482, %v3566, %v3542
      %v3568 = vsel %vm3481, %v872, %v3565
      %v3569 = vsel %vm3481, 0, %v3567
      %v3570 = vcosq.f32.pop %v3568
      %v3571 = vsinq.f32.pop %v3568
      %vm3572 = vweird.f32 %v872
      %v3573 = vand.u32 %v3569, 3
      %vm3574 = vcmp.lt.s32.totalorder %v3573, 2
      %vm3575 = vcmp.eq.s32.totalorder %v3573, 0
      %v3576 = vxor.u32 %v3571, 2147483648
      %v3577 = vsel %vm3575, %v3570, %v3576
      %vm3578 = vcmp.eq.s32.totalorder %v3573, 2
      %v3579 = vxor.u32 %v3570, 2147483648
      %v3580 = vsel %vm3578, %v3579, %v3571
      %v3581 = vsel %vm3574, %v3577, %v3580
      %v3582 = vsel %vm3572, nan, %v3581
      %v3583 = vand.u32 2147483647, %v877
      %vm3584 = vcmp.le.f32.partialorder %v3583, 0.7853982
      %vm3585 = vcmp.lt.s32.totalorder %v877, 0
      %v3586 = vand.u32 %v877, 2139095040
      %v3587 = vshrl.u32 %v3586, 23
      %v3588 = vsub.s32 %v3587, 127
      %v3589 = vand.u32 2147483647, %v877
      %v3590 = vand.u32 %v3589, 8388607
      %v3591 = vor.u32 %v3590, 8388608
      %v3592 = vsub.s32 0, %v3591
      %v3593 = vadd.s32 %v3588, 1
      %vm3594 = vcmp.gt.s32.totalorder %v3593, 0
      %v3595 = vsel %vm3594, %v3593, 0
      %v3596 = vshrl.u32 %v3595, 5
      %v3597 = vand.u32 %v3595, 31
      %v3598 = vsub.s32 32, %v3597
      %v3599 = vshrl.u32 683565275, %v3598
      %v3600 = vshll.u32 683565275, %v3597
      %v3601 = vshrl.u32 2475754826, %v3598
      %v3602 = vor.u32 %v3600, %v3601
      %v3603 = vshll.u32 2475754826, %v3597
      %v3604 = vshrl.u32 2131351028, %v3598
      %v3605 = vor.u32 %v3603, %v3604
      %v3606 = vshll.u32 2131351028, %v3597
      %v3607 = vshrl.u32 2102212464, %v3598
      %v3608 = vor.u32 %v3606, %v3607
      %v3609 = vshll.u32 2102212464, %v3597
      %v3610 = vshrl.u32 920167782, %v3598
      %v3611 = vor.u32 %v3609, %v3610
      %v3612 = vshll.u32 920167782, %v3597
      %v3613 = vshrl.u32 1326507024, %v3598
      %v3614 = vor.u32 %v3612, %v3613
      %vm3615 = vcmp.lt.s32.totalorder %v3596, 1
      %vm3616 = vcmp.lt.s32.totalorder %v3596, 2
      %vm3617 = vcmp.lt.s32.totalorder %v3596, 3
      %vm3618 = vcmp.lt.s32.totalorder %v3596, 4
      %v3619 = vsel %vm3615, %v3599, %v3602
      %v3620 = vsel %vm3618, %v3608, 2102212464
      %v3621 = vsel %vm3617, %v3605, %v3620
      %v3622 = vsel %vm3616, %v3619, %v3621
      %v3623 = vsel %vm3615, %v3602, %v3605
      %v3624 = vsel %vm3618, %v3611, 920167782
      %v3625 = vsel %vm3617, %v3608, %v3624
      %v3626 = vsel %vm3616, %v3623, %v3625
      %v3627 = vsel %vm3615, %v3605, %v3608
      %v3628 = vsel %vm3618, %v3614, 1326507024
      %v3629 = vsel %vm3617, %v3611, %v3628
      %v3630 = vsel %vm3616, %v3627, %v3629
      %v3631 = vshll.u32 %v3591, 8
      %v3632 = vmul.u32.u64.compose %v3631, %v3630
      %v3633 = vextract.low.u32 %v3632
      %v3634 = vextract.high.u32 %v3632
      %v3635 = vmul.u32.u64.compose %v3631, %v3626
      %v3636 = vextract.low.u32 %v3635
      %v3637 = vextract.high.u32 %v3635
      %v3638 = vmul.u32 %v3631, %v3622
      %v3639 = vadd.s32 %v3634, %v3636
      %vm3640 = vc.u32 %v3634, %v3636
      %v3641 = vadd.s32 %v3637, 1
      %v3642 = vsel %vm3640, %v3641, %v3637
      %v3643 = vadd.s32 %v3638, %v3642
      %v3644 = vadd.s32 %v3643, 536870912
      %v3645 = vshrl.u32 %v3644, 30
      %v3646 = vshll.u32 %v3645, 30
      %v3647 = vsub.s32 %v3643, %v3646
      %vm3648 = vcmp.lt.s32.totalorder %v3647, 0
      %v3649 = vsub.s32 0, %v3647
      %v3650 = vsel %vm3648, %v3649, %v3647
      %v3651 = vclz %v3650
      %v3652 = vsub.s32 %v3651, 2
      %vm3653 = vcmp.gt.s32.totalorder 0, %v3652
      %v3654 = vsel %vm3653, 0, %v3652
      %v3655 = vsub.s32 32, %v3654
      %v3656 = vshll.u32 %v3647, %v3654
      %v3657 = vshrl.u32 %v3639, %v3655
      %v3658 = vor.u32 %v3656, %v3657
      %v3659 = vsub.s32 4294967266, %v3654
      %v3660 = vadd.s32 %v3659, 127
      %v3661 = vshll.u32 %v3660, 23
      %v3662 = vor.u32 4788187, %v3661
      %v3663 = vand.u32 2147483647, %v3662
      %v3665 = vcvt.s32.f32 %v3658
      %v3666 = vmul.f32 %v3665, %v3663
      %v3667 = vxor.u32 %v3666, 2147483648
      %v3668 = vsel %vm3585, %v3667, %v3666
      %v3669 = vsub.s32 4, %v3645
      %v3670 = vsel %vm3585, %v3669, %v3645
      %v3671 = vsel %vm3584, %v877, %v3668
      %v3672 = vsel %vm3584, 0, %v3670
      %v3673 = vcosq.f32.pop %v3671
      %v3674 = vsinq.f32.pop %v3671
      %vm3675 = vweird.f32 %v877
      %v3676 = vand.u32 %v3672, 3
      %vm3677 = vcmp.lt.s32.totalorder %v3676, 2
      %vm3678 = vcmp.eq.s32.totalorder %v3676, 0
      %v3679 = vxor.u32 %v3674, 2147483648
      %v3680 = vsel %vm3678, %v3673, %v3679
      %vm3681 = vcmp.eq.s32.totalorder %v3676, 2
      %v3682 = vxor.u32 %v3673, 2147483648
      %v3683 = vsel %vm3681, %v3682, %v3674
      %v3684 = vsel %vm3677, %v3680, %v3683
      %v3685 = vsel %vm3675, nan, %v3684
      %v3686 = vand.u32 2147483647, %v882
      %vm3687 = vcmp.le.f32.partialorder %v3686, 0.7853982
      %vm3688 = vcmp.lt.s32.totalorder %v882, 0
      %v3689 = vand.u32 %v882, 2139095040
      %v3690 = vshrl.u32 %v3689, 23
      %v3691 = vsub.s32 %v3690, 127
      %v3692 = vand.u32 2147483647, %v882
      %v3693 = vand.u32 %v3692, 8388607
      %v3694 = vor.u32 %v3693, 8388608
      %v3695 = vsub.s32 0, %v3694
      %v3696 = vadd.s32 %v3691, 1
      %vm3697 = vcmp.gt.s32.totalorder %v3696, 0
      %v3698 = vsel %vm3697, %v3696, 0
      %v3699 = vshrl.u32 %v3698, 5
      %v3700 = vand.u32 %v3698, 31
      %v3701 = vsub.s32 32, %v3700
      %v3702 = vshrl.u32 683565275, %v3701
      %v3703 = vshll.u32 683565275, %v3700
      %v3704 = vshrl.u32 2475754826, %v3701
      %v3705 = vor.u32 %v3703, %v3704
      %v3706 = vshll.u32 2475754826, %v3700
      %v3707 = vshrl.u32 2131351028, %v3701
      %v3708 = vor.u32 %v3706, %v3707
      %v3709 = vshll.u32 2131351028, %v3700
      %v3710 = vshrl.u32 2102212464, %v3701
      %v3711 = vor.u32 %v3709, %v3710
      %v3712 = vshll.u32 2102212464, %v3700
      %v3713 = vshrl.u32 920167782, %v3701
      %v3714 = vor.u32 %v3712, %v3713
      %v3715 = vshll.u32 920167782, %v3700
      %v3716 = vshrl.u32 1326507024, %v3701
      %v3717 = vor.u32 %v3715, %v3716
      %vm3718 = vcmp.lt.s32.totalorder %v3699, 1
      %vm3719 = vcmp.lt.s32.totalorder %v3699, 2
      %vm3720 = vcmp.lt.s32.totalorder %v3699, 3
      %vm3721 = vcmp.lt.s32.totalorder %v3699, 4
      %v3722 = vsel %vm3718, %v3702, %v3705
      %v3723 = vsel %vm3721, %v3711, 2102212464
      %v3724 = vsel %vm3720, %v3708, %v3723
      %v3725 = vsel %vm3719, %v3722, %v3724
      %v3726 = vsel %vm3718, %v3705, %v3708
      %v3727 = vsel %vm3721, %v3714, 920167782
      %v3728 = vsel %vm3720, %v3711, %v3727
      %v3729 = vsel %vm3719, %v3726, %v3728
      %v3730 = vsel %vm3718, %v3708, %v3711
      %v3731 = vsel %vm3721, %v3717, 1326507024
      %v3732 = vsel %vm3720, %v3714, %v3731
      %v3733 = vsel %vm3719, %v3730, %v3732
      %v3734 = vshll.u32 %v3694, 8
      %v3735 = vmul.u32.u64.compose %v3734, %v3733
      %v3736 = vextract.low.u32 %v3735
      %v3737 = vextract.high.u32 %v3735
      %v3738 = vmul.u32.u64.compose %v3734, %v3729
      %v3739 = vextract.low.u32 %v3738
      %v3740 = vextract.high.u32 %v3738
      %v3741 = vmul.u32 %v3734, %v3725
      %v3742 = vadd.s32 %v3737, %v3739
      %vm3743 = vc.u32 %v3737, %v3739
      %v3744 = vadd.s32 %v3740, 1
      %v3745 = vsel %vm3743, %v3744, %v3740
      %v3746 = vadd.s32 %v3741, %v3745
      %v3747 = vadd.s32 %v3746, 536870912
      %v3748 = vshrl.u32 %v3747, 30
      %v3749 = vshll.u32 %v3748, 30
      %v3750 = vsub.s32 %v3746, %v3749
      %vm3751 = vcmp.lt.s32.totalorder %v3750, 0
      %v3752 = vsub.s32 0, %v3750
      %v3753 = vsel %vm3751, %v3752, %v3750
      %v3754 = vclz %v3753
      %v3755 = vsub.s32 %v3754, 2
      %vm3756 = vcmp.gt.s32.totalorder 0, %v3755
      %v3757 = vsel %vm3756, 0, %v3755
      %v3758 = vsub.s32 32, %v3757
      %v3759 = vshll.u32 %v3750, %v3757
      %v3760 = vshrl.u32 %v3742, %v3758
      %v3761 = vor.u32 %v3759, %v3760
      %v3762 = vsub.s32 4294967266, %v3757
      %v3763 = vadd.s32 %v3762, 127
      %v3764 = vshll.u32 %v3763, 23
      %v3765 = vor.u32 4788187, %v3764
      %v3766 = vand.u32 2147483647, %v3765
      %v3768 = vcvt.s32.f32 %v3761
      %v3769 = vmul.f32 %v3768, %v3766
      %v3770 = vxor.u32 %v3769, 2147483648
      %v3771 = vsel %vm3688, %v3770, %v3769
      %v3772 = vsub.s32 4, %v3748
      %v3773 = vsel %vm3688, %v3772, %v3748
      %v3774 = vsel %vm3687, %v882, %v3771
      %v3775 = vsel %vm3687, 0, %v3773
      %v3776 = vcosq.f32.pop %v3774
      %v3777 = vsinq.f32.pop %v3774
      %vm3778 = vweird.f32 %v882
      %v3779 = vand.u32 %v3775, 3
      %vm3780 = vcmp.lt.s32.totalorder %v3779, 2
      %vm3781 = vcmp.eq.s32.totalorder %v3779, 0
      %v3782 = vxor.u32 %v3777, 2147483648
      %v3783 = vsel %vm3781, %v3776, %v3782
      %vm3784 = vcmp.eq.s32.totalorder %v3779, 2
      %v3785 = vxor.u32 %v3776, 2147483648
      %v3786 = vsel %vm3784, %v3785, %v3777
      %v3787 = vsel %vm3780, %v3783, %v3786
      %v3788 = vsel %vm3778, nan, %v3787
      %v3789 = vand.u32 2147483647, %v887
      %vm3790 = vcmp.le.f32.partialorder %v3789, 0.7853982
      %vm3791 = vcmp.lt.s32.totalorder %v887, 0
      %v3792 = vand.u32 %v887, 2139095040
      %v3793 = vshrl.u32 %v3792, 23
      %v3794 = vsub.s32 %v3793, 127
      %v3795 = vand.u32 2147483647, %v887
      %v3796 = vand.u32 %v3795, 8388607
      %v3797 = vor.u32 %v3796, 8388608
      %v3798 = vsub.s32 0, %v3797
      %v3799 = vadd.s32 %v3794, 1
      %vm3800 = vcmp.gt.s32.totalorder %v3799, 0
      %v3801 = vsel %vm3800, %v3799, 0
      %v3802 = vshrl.u32 %v3801, 5
      %v3803 = vand.u32 %v3801, 31
      %v3804 = vsub.s32 32, %v3803
      %v3805 = vshrl.u32 683565275, %v3804
      %v3806 = vshll.u32 683565275, %v3803
      %v3807 = vshrl.u32 2475754826, %v3804
      %v3808 = vor.u32 %v3806, %v3807
      %v3809 = vshll.u32 2475754826, %v3803
      %v3810 = vshrl.u32 2131351028, %v3804
      %v3811 = vor.u32 %v3809, %v3810
      %v3812 = vshll.u32 2131351028, %v3803
      %v3813 = vshrl.u32 2102212464, %v3804
      %v3814 = vor.u32 %v3812, %v3813
      %v3815 = vshll.u32 2102212464, %v3803
      %v3816 = vshrl.u32 920167782, %v3804
      %v3817 = vor.u32 %v3815, %v3816
      %v3818 = vshll.u32 920167782, %v3803
      %v3819 = vshrl.u32 1326507024, %v3804
      %v3820 = vor.u32 %v3818, %v3819
      %vm3821 = vcmp.lt.s32.totalorder %v3802, 1
      %vm3822 = vcmp.lt.s32.totalorder %v3802, 2
      %vm3823 = vcmp.lt.s32.totalorder %v3802, 3
      %vm3824 = vcmp.lt.s32.totalorder %v3802, 4
      %v3825 = vsel %vm3821, %v3805, %v3808
      %v3826 = vsel %vm3824, %v3814, 2102212464
      %v3827 = vsel %vm3823, %v3811, %v3826
      %v3828 = vsel %vm3822, %v3825, %v3827
      %v3829 = vsel %vm3821, %v3808, %v3811
      %v3830 = vsel %vm3824, %v3817, 920167782
      %v3831 = vsel %vm3823, %v3814, %v3830
      %v3832 = vsel %vm3822, %v3829, %v3831
      %v3833 = vsel %vm3821, %v3811, %v3814
      %v3834 = vsel %vm3824, %v3820, 1326507024
      %v3835 = vsel %vm3823, %v3817, %v3834
      %v3836 = vsel %vm3822, %v3833, %v3835
      %v3837 = vshll.u32 %v3797, 8
      %v3838 = vmul.u32.u64.compose %v3837, %v3836
      %v3839 = vextract.low.u32 %v3838
      %v3840 = vextract.high.u32 %v3838
      %v3841 = vmul.u32.u64.compose %v3837, %v3832
      %v3842 = vextract.low.u32 %v3841
      %v3843 = vextract.high.u32 %v3841
      %v3844 = vmul.u32 %v3837, %v3828
      %v3845 = vadd.s32 %v3840, %v3842
      %vm3846 = vc.u32 %v3840, %v3842
      %v3847 = vadd.s32 %v3843, 1
      %v3848 = vsel %vm3846, %v3847, %v3843
      %v3849 = vadd.s32 %v3844, %v3848
      %v3850 = vadd.s32 %v3849, 536870912
      %v3851 = vshrl.u32 %v3850, 30
      %v3852 = vshll.u32 %v3851, 30
      %v3853 = vsub.s32 %v3849, %v3852
      %vm3854 = vcmp.lt.s32.totalorder %v3853, 0
      %v3855 = vsub.s32 0, %v3853
      %v3856 = vsel %vm3854, %v3855, %v3853
      %v3857 = vclz %v3856
      %v3858 = vsub.s32 %v3857, 2
      %vm3859 = vcmp.gt.s32.totalorder 0, %v3858
      %v3860 = vsel %vm3859, 0, %v3858
      %v3861 = vsub.s32 32, %v3860
      %v3862 = vshll.u32 %v3853, %v3860
      %v3863 = vshrl.u32 %v3845, %v3861
      %v3864 = vor.u32 %v3862, %v3863
      %v3865 = vsub.s32 4294967266, %v3860
      %v3866 = vadd.s32 %v3865, 127
      %v3867 = vshll.u32 %v3866, 23
      %v3868 = vor.u32 4788187, %v3867
      %v3869 = vand.u32 2147483647, %v3868
      %v3871 = vcvt.s32.f32 %v3864
      %v3872 = vmul.f32 %v3871, %v3869
      %v3873 = vxor.u32 %v3872, 2147483648
      %v3874 = vsel %vm3791, %v3873, %v3872
      %v3875 = vsub.s32 4, %v3851
      %v3876 = vsel %vm3791, %v3875, %v3851
      %v3877 = vsel %vm3790, %v887, %v3874
      %v3878 = vsel %vm3790, 0, %v3876
      %v3879 = vcosq.f32.pop %v3877
      %v3880 = vsinq.f32.pop %v3877
      %vm3881 = vweird.f32 %v887
      %v3882 = vand.u32 %v3878, 3
      %vm3883 = vcmp.lt.s32.totalorder %v3882, 2
      %vm3884 = vcmp.eq.s32.totalorder %v3882, 0
      %v3885 = vxor.u32 %v3880, 2147483648
      %v3886 = vsel %vm3884, %v3879, %v3885
      %vm3887 = vcmp.eq.s32.totalorder %v3882, 2
      %v3888 = vxor.u32 %v3879, 2147483648
      %v3889 = vsel %vm3887, %v3888, %v3880
      %v3890 = vsel %vm3883, %v3886, %v3889
      %v3891 = vsel %vm3881, nan, %v3890
      %v3892 = vand.u32 2147483647, %v892
      %vm3893 = vcmp.le.f32.partialorder %v3892, 0.7853982
      %vm3894 = vcmp.lt.s32.totalorder %v892, 0
      %v3895 = vand.u32 %v892, 2139095040
      %v3896 = vshrl.u32 %v3895, 23
      %v3897 = vsub.s32 %v3896, 127
      %v3898 = vand.u32 2147483647, %v892
      %v3899 = vand.u32 %v3898, 8388607
      %v3900 = vor.u32 %v3899, 8388608
      %v3901 = vsub.s32 0, %v3900
      %v3902 = vadd.s32 %v3897, 1
      %vm3903 = vcmp.gt.s32.totalorder %v3902, 0
      %v3904 = vsel %vm3903, %v3902, 0
      %v3905 = vshrl.u32 %v3904, 5
      %v3906 = vand.u32 %v3904, 31
      %v3907 = vsub.s32 32, %v3906
      %v3908 = vshrl.u32 683565275, %v3907
      %v3909 = vshll.u32 683565275, %v3906
      %v3910 = vshrl.u32 2475754826, %v3907
      %v3911 = vor.u32 %v3909, %v3910
      %v3912 = vshll.u32 2475754826, %v3906
      %v3913 = vshrl.u32 2131351028, %v3907
      %v3914 = vor.u32 %v3912, %v3913
      %v3915 = vshll.u32 2131351028, %v3906
      %v3916 = vshrl.u32 2102212464, %v3907
      %v3917 = vor.u32 %v3915, %v3916
      %v3918 = vshll.u32 2102212464, %v3906
      %v3919 = vshrl.u32 920167782, %v3907
      %v3920 = vor.u32 %v3918, %v3919
      %v3921 = vshll.u32 920167782, %v3906
      %v3922 = vshrl.u32 1326507024, %v3907
      %v3923 = vor.u32 %v3921, %v3922
      %vm3924 = vcmp.lt.s32.totalorder %v3905, 1
      %vm3925 = vcmp.lt.s32.totalorder %v3905, 2
      %vm3926 = vcmp.lt.s32.totalorder %v3905, 3
      %vm3927 = vcmp.lt.s32.totalorder %v3905, 4
      %v3928 = vsel %vm3924, %v3908, %v3911
      %v3929 = vsel %vm3927, %v3917, 2102212464
      %v3930 = vsel %vm3926, %v3914, %v3929
      %v3931 = vsel %vm3925, %v3928, %v3930
      %v3932 = vsel %vm3924, %v3911, %v3914
      %v3933 = vsel %vm3927, %v3920, 920167782
      %v3934 = vsel %vm3926, %v3917, %v3933
      %v3935 = vsel %vm3925, %v3932, %v3934
      %v3936 = vsel %vm3924, %v3914, %v3917
      %v3937 = vsel %vm3927, %v3923, 1326507024
      %v3938 = vsel %vm3926, %v3920, %v3937
      %v3939 = vsel %vm3925, %v3936, %v3938
      %v3940 = vshll.u32 %v3900, 8
      %v3941 = vmul.u32.u64.compose %v3940, %v3939
      %v3942 = vextract.low.u32 %v3941
      %v3943 = vextract.high.u32 %v3941
      %v3944 = vmul.u32.u64.compose %v3940, %v3935
      %v3945 = vextract.low.u32 %v3944
      %v3946 = vextract.high.u32 %v3944
      %v3947 = vmul.u32 %v3940, %v3931
      %v3948 = vadd.s32 %v3943, %v3945
      %vm3949 = vc.u32 %v3943, %v3945
      %v3950 = vadd.s32 %v3946, 1
      %v3951 = vsel %vm3949, %v3950, %v3946
      %v3952 = vadd.s32 %v3947, %v3951
      %v3953 = vadd.s32 %v3952, 536870912
      %v3954 = vshrl.u32 %v3953, 30
      %v3955 = vshll.u32 %v3954, 30
      %v3956 = vsub.s32 %v3952, %v3955
      %vm3957 = vcmp.lt.s32.totalorder %v3956, 0
      %v3958 = vsub.s32 0, %v3956
      %v3959 = vsel %vm3957, %v3958, %v3956
      %v3960 = vclz %v3959
      %v3961 = vsub.s32 %v3960, 2
      %vm3962 = vcmp.gt.s32.totalorder 0, %v3961
      %v3963 = vsel %vm3962, 0, %v3961
      %v3964 = vsub.s32 32, %v3963
      %v3965 = vshll.u32 %v3956, %v3963
      %v3966 = vshrl.u32 %v3948, %v3964
      %v3967 = vor.u32 %v3965, %v3966
      %v3968 = vsub.s32 4294967266, %v3963
      %v3969 = vadd.s32 %v3968, 127
      %v3970 = vshll.u32 %v3969, 23
      %v3971 = vor.u32 4788187, %v3970
      %v3972 = vand.u32 2147483647, %v3971
      %v3974 = vcvt.s32.f32 %v3967
      %v3975 = vmul.f32 %v3974, %v3972
      %v3976 = vxor.u32 %v3975, 2147483648
      %v3977 = vsel %vm3894, %v3976, %v3975
      %v3978 = vsub.s32 4, %v3954
      %v3979 = vsel %vm3894, %v3978, %v3954
      %v3980 = vsel %vm3893, %v892, %v3977
      %v3981 = vsel %vm3893, 0, %v3979
      %v3982 = vcosq.f32.pop %v3980
      %v3983 = vsinq.f32.pop %v3980
      %vm3984 = vweird.f32 %v892
      %v3985 = vand.u32 %v3981, 3
      %vm3986 = vcmp.lt.s32.totalorder %v3985, 2
      %vm3987 = vcmp.eq.s32.totalorder %v3985, 0
      %v3988 = vxor.u32 %v3983, 2147483648
      %v3989 = vsel %vm3987, %v3982, %v3988
      %vm3990 = vcmp.eq.s32.totalorder %v3985, 2
      %v3991 = vxor.u32 %v3982, 2147483648
      %v3992 = vsel %vm3990, %v3991, %v3983
      %v3993 = vsel %vm3986, %v3989, %v3992
      %v3994 = vsel %vm3984, nan, %v3993
      %v3995 = vand.u32 2147483647, %v897
      %vm3996 = vcmp.le.f32.partialorder %v3995, 0.7853982
      %vm3997 = vcmp.lt.s32.totalorder %v897, 0
      %v3998 = vand.u32 %v897, 2139095040
      %v3999 = vshrl.u32 %v3998, 23
      %v4000 = vsub.s32 %v3999, 127
      %v4001 = vand.u32 2147483647, %v897
      %v4002 = vand.u32 %v4001, 8388607
      %v4003 = vor.u32 %v4002, 8388608
      %v4004 = vsub.s32 0, %v4003
      %v4005 = vadd.s32 %v4000, 1
      %vm4006 = vcmp.gt.s32.totalorder %v4005, 0
      %v4007 = vsel %vm4006, %v4005, 0
      %v4008 = vshrl.u32 %v4007, 5
      %v4009 = vand.u32 %v4007, 31
      %v4010 = vsub.s32 32, %v4009
      %v4011 = vshrl.u32 683565275, %v4010
      %v4012 = vshll.u32 683565275, %v4009
      %v4013 = vshrl.u32 2475754826, %v4010
      %v4014 = vor.u32 %v4012, %v4013
      %v4015 = vshll.u32 2475754826, %v4009
      %v4016 = vshrl.u32 2131351028, %v4010
      %v4017 = vor.u32 %v4015, %v4016
      %v4018 = vshll.u32 2131351028, %v4009
      %v4019 = vshrl.u32 2102212464, %v4010
      %v4020 = vor.u32 %v4018, %v4019
      %v4021 = vshll.u32 2102212464, %v4009
      %v4022 = vshrl.u32 920167782, %v4010
      %v4023 = vor.u32 %v4021, %v4022
      %v4024 = vshll.u32 920167782, %v4009
      %v4025 = vshrl.u32 1326507024, %v4010
      %v4026 = vor.u32 %v4024, %v4025
      %vm4027 = vcmp.lt.s32.totalorder %v4008, 1
      %vm4028 = vcmp.lt.s32.totalorder %v4008, 2
      %vm4029 = vcmp.lt.s32.totalorder %v4008, 3
      %vm4030 = vcmp.lt.s32.totalorder %v4008, 4
      %v4031 = vsel %vm4027, %v4011, %v4014
      %v4032 = vsel %vm4030, %v4020, 2102212464
      %v4033 = vsel %vm4029, %v4017, %v4032
      %v4034 = vsel %vm4028, %v4031, %v4033
      %v4035 = vsel %vm4027, %v4014, %v4017
      %v4036 = vsel %vm4030, %v4023, 920167782
      %v4037 = vsel %vm4029, %v4020, %v4036
      %v4038 = vsel %vm4028, %v4035, %v4037
      %v4039 = vsel %vm4027, %v4017, %v4020
      %v4040 = vsel %vm4030, %v4026, 1326507024
      %v4041 = vsel %vm4029, %v4023, %v4040
      %v4042 = vsel %vm4028, %v4039, %v4041
      %v4043 = vshll.u32 %v4003, 8
      %v4044 = vmul.u32.u64.compose %v4043, %v4042
      %v4045 = vextract.low.u32 %v4044
      %v4046 = vextract.high.u32 %v4044
      %v4047 = vmul.u32.u64.compose %v4043, %v4038
      %v4048 = vextract.low.u32 %v4047
      %v4049 = vextract.high.u32 %v4047
      %v4050 = vmul.u32 %v4043, %v4034
      %v4051 = vadd.s32 %v4046, %v4048
      %vm4052 = vc.u32 %v4046, %v4048
      %v4053 = vadd.s32 %v4049, 1
      %v4054 = vsel %vm4052, %v4053, %v4049
      %v4055 = vadd.s32 %v4050, %v4054
      %v4056 = vadd.s32 %v4055, 536870912
      %v4057 = vshrl.u32 %v4056, 30
      %v4058 = vshll.u32 %v4057, 30
      %v4059 = vsub.s32 %v4055, %v4058
      %vm4060 = vcmp.lt.s32.totalorder %v4059, 0
      %v4061 = vsub.s32 0, %v4059
      %v4062 = vsel %vm4060, %v4061, %v4059
      %v4063 = vclz %v4062
      %v4064 = vsub.s32 %v4063, 2
      %vm4065 = vcmp.gt.s32.totalorder 0, %v4064
      %v4066 = vsel %vm4065, 0, %v4064
      %v4067 = vsub.s32 32, %v4066
      %v4068 = vshll.u32 %v4059, %v4066
      %v4069 = vshrl.u32 %v4051, %v4067
      %v4070 = vor.u32 %v4068, %v4069
      %v4071 = vsub.s32 4294967266, %v4066
      %v4072 = vadd.s32 %v4071, 127
      %v4073 = vshll.u32 %v4072, 23
      %v4074 = vor.u32 4788187, %v4073
      %v4075 = vand.u32 2147483647, %v4074
      %v4077 = vcvt.s32.f32 %v4070
      %v4078 = vmul.f32 %v4077, %v4075
      %v4079 = vxor.u32 %v4078, 2147483648
      %v4080 = vsel %vm3997, %v4079, %v4078
      %v4081 = vsub.s32 4, %v4057
      %v4082 = vsel %vm3997, %v4081, %v4057
      %v4083 = vsel %vm3996, %v897, %v4080
      %v4084 = vsel %vm3996, 0, %v4082
      %v4085 = vcosq.f32.pop %v4083
      %v4086 = vsinq.f32.pop %v4083
      %vm4087 = vweird.f32 %v897
      %v4088 = vand.u32 %v4084, 3
      %vm4089 = vcmp.lt.s32.totalorder %v4088, 2
      %vm4090 = vcmp.eq.s32.totalorder %v4088, 0
      %v4091 = vxor.u32 %v4086, 2147483648
      %v4092 = vsel %vm4090, %v4085, %v4091
      %vm4093 = vcmp.eq.s32.totalorder %v4088, 2
      %v4094 = vxor.u32 %v4085, 2147483648
      %v4095 = vsel %vm4093, %v4094, %v4086
      %v4096 = vsel %vm4089, %v4092, %v4095
      %v4097 = vsel %vm4087, nan, %v4096
      %v4098 = vand.u32 2147483647, %v902
      %vm4099 = vcmp.le.f32.partialorder %v4098, 0.7853982
      %vm4100 = vcmp.lt.s32.totalorder %v902, 0
      %v4101 = vand.u32 %v902, 2139095040
      %v4102 = vshrl.u32 %v4101, 23
      %v4103 = vsub.s32 %v4102, 127
      %v4104 = vand.u32 2147483647, %v902
      %v4105 = vand.u32 %v4104, 8388607
      %v4106 = vor.u32 %v4105, 8388608
      %v4107 = vsub.s32 0, %v4106
      %v4108 = vadd.s32 %v4103, 1
      %vm4109 = vcmp.gt.s32.totalorder %v4108, 0
      %v4110 = vsel %vm4109, %v4108, 0
      %v4111 = vshrl.u32 %v4110, 5
      %v4112 = vand.u32 %v4110, 31
      %v4113 = vsub.s32 32, %v4112
      %v4114 = vshrl.u32 683565275, %v4113
      %v4115 = vshll.u32 683565275, %v4112
      %v4116 = vshrl.u32 2475754826, %v4113
      %v4117 = vor.u32 %v4115, %v4116
      %v4118 = vshll.u32 2475754826, %v4112
      %v4119 = vshrl.u32 2131351028, %v4113
      %v4120 = vor.u32 %v4118, %v4119
      %v4121 = vshll.u32 2131351028, %v4112
      %v4122 = vshrl.u32 2102212464, %v4113
      %v4123 = vor.u32 %v4121, %v4122
      %v4124 = vshll.u32 2102212464, %v4112
      %v4125 = vshrl.u32 920167782, %v4113
      %v4126 = vor.u32 %v4124, %v4125
      %v4127 = vshll.u32 920167782, %v4112
      %v4128 = vshrl.u32 1326507024, %v4113
      %v4129 = vor.u32 %v4127, %v4128
      %vm4130 = vcmp.lt.s32.totalorder %v4111, 1
      %vm4131 = vcmp.lt.s32.totalorder %v4111, 2
      %vm4132 = vcmp.lt.s32.totalorder %v4111, 3
      %vm4133 = vcmp.lt.s32.totalorder %v4111, 4
      %v4134 = vsel %vm4130, %v4114, %v4117
      %v4135 = vsel %vm4133, %v4123, 2102212464
      %v4136 = vsel %vm4132, %v4120, %v4135
      %v4137 = vsel %vm4131, %v4134, %v4136
      %v4138 = vsel %vm4130, %v4117, %v4120
      %v4139 = vsel %vm4133, %v4126, 920167782
      %v4140 = vsel %vm4132, %v4123, %v4139
      %v4141 = vsel %vm4131, %v4138, %v4140
      %v4142 = vsel %vm4130, %v4120, %v4123
      %v4143 = vsel %vm4133, %v4129, 1326507024
      %v4144 = vsel %vm4132, %v4126, %v4143
      %v4145 = vsel %vm4131, %v4142, %v4144
      %v4146 = vshll.u32 %v4106, 8
      %v4147 = vmul.u32.u64.compose %v4146, %v4145
      %v4148 = vextract.low.u32 %v4147
      %v4149 = vextract.high.u32 %v4147
      %v4150 = vmul.u32.u64.compose %v4146, %v4141
      %v4151 = vextract.low.u32 %v4150
      %v4152 = vextract.high.u32 %v4150
      %v4153 = vmul.u32 %v4146, %v4137
      %v4154 = vadd.s32 %v4149, %v4151
      %vm4155 = vc.u32 %v4149, %v4151
      %v4156 = vadd.s32 %v4152, 1
      %v4157 = vsel %vm4155, %v4156, %v4152
      %v4158 = vadd.s32 %v4153, %v4157
      %v4159 = vadd.s32 %v4158, 536870912
      %v4160 = vshrl.u32 %v4159, 30
      %v4161 = vshll.u32 %v4160, 30
      %v4162 = vsub.s32 %v4158, %v4161
      %vm4163 = vcmp.lt.s32.totalorder %v4162, 0
      %v4164 = vsub.s32 0, %v4162
      %v4165 = vsel %vm4163, %v4164, %v4162
      %v4166 = vclz %v4165
      %v4167 = vsub.s32 %v4166, 2
      %vm4168 = vcmp.gt.s32.totalorder 0, %v4167
      %v4169 = vsel %vm4168, 0, %v4167
      %v4170 = vsub.s32 32, %v4169
      %v4171 = vshll.u32 %v4162, %v4169
      %v4172 = vshrl.u32 %v4154, %v4170
      %v4173 = vor.u32 %v4171, %v4172
      %v4174 = vsub.s32 4294967266, %v4169
      %v4175 = vadd.s32 %v4174, 127
      %v4176 = vshll.u32 %v4175, 23
      %v4177 = vor.u32 4788187, %v4176
      %v4178 = vand.u32 2147483647, %v4177
      %v4180 = vcvt.s32.f32 %v4173
      %v4181 = vmul.f32 %v4180, %v4178
      %v4182 = vxor.u32 %v4181, 2147483648
      %v4183 = vsel %vm4100, %v4182, %v4181
      %v4184 = vsub.s32 4, %v4160
      %v4185 = vsel %vm4100, %v4184, %v4160
      %v4186 = vsel %vm4099, %v902, %v4183
      %v4187 = vsel %vm4099, 0, %v4185
      %v4188 = vcosq.f32.pop %v4186
      %v4189 = vsinq.f32.pop %v4186
      %vm4190 = vweird.f32 %v902
      %v4191 = vand.u32 %v4187, 3
      %vm4192 = vcmp.lt.s32.totalorder %v4191, 2
      %vm4193 = vcmp.eq.s32.totalorder %v4191, 0
      %v4194 = vxor.u32 %v4189, 2147483648
      %v4195 = vsel %vm4193, %v4188, %v4194
      %vm4196 = vcmp.eq.s32.totalorder %v4191, 2
      %v4197 = vxor.u32 %v4188, 2147483648
      %v4198 = vsel %vm4196, %v4197, %v4189
      %v4199 = vsel %vm4192, %v4195, %v4198
      %v4200 = vsel %vm4190, nan, %v4199
      %4202 = vrot.lane.b32.xlu0 %v179, 64
      %v4203 = vpop.permute.xlu0 %4202
      %v4206 = vsel %vm185, %v1007, 0
      %v4209 = vsel %vm185, %v1110, 0
      %v4212 = vsel %vm185, %v1213, 0
      %v4215 = vsel %vm185, %v1316, 0
      %v4218 = vsel %vm185, %v1419, 0
      %v4221 = vsel %vm185, %v1522, 0
      %v4224 = vsel %vm185, %v1625, 0
      %v4227 = vsel %vm185, %v1728, 0
      %v4230 = vsel %vm185, %v1831, 0
      %v4233 = vsel %vm185, %v1934, 0
      %v4236 = vsel %vm185, %v2037, 0
      %v4239 = vsel %vm185, %v2140, 0
      %v4242 = vsel %vm185, %v2243, 0
      %v4245 = vsel %vm185, %v2346, 0
      %v4248 = vsel %vm185, %v2449, 0
      %v4251 = vsel %vm185, %v2552, 0
      %v4254 = vsel %vm185, %v2655, 0
      %v4257 = vsel %vm185, %v2758, 0
      %v4260 = vsel %vm185, %v2861, 0
      %v4263 = vsel %vm185, %v2964, 0
      %v4266 = vsel %vm185, %v3067, 0
      %v4269 = vsel %vm185, %v3170, 0
      %v4272 = vsel %vm185, %v3273, 0
      %v4275 = vsel %vm185, %v3376, 0
      %v4278 = vsel %vm185, %v3479, 0
      %v4281 = vsel %vm185, %v3582, 0
      %v4284 = vsel %vm185, %v3685, 0
      %v4287 = vsel %vm185, %v3788, 0
      %v4290 = vsel %vm185, %v3891, 0
      %v4293 = vsel %vm185, %v3994, 0
      %v4296 = vsel %vm185, %v4097, 0
      %v4299 = vsel %vm185, %v4200, 0
      %4301 = vmatprep.subr.mxu0 0.0
      %4302 = vmatpush1.msra.mxu0 %v4203
      %4303 = vmatprep.subr.mxu0 0.0
      %4304 = vmatpush1.msra.mxu0 0.0
      %4305 = vmatprep.subr.mxu0 0.0
      %4306 = vmatpush1.msra.mxu0 0.0
      %4307 = vmatprep.subr.mxu0 0.0
      %4308 = vmatpush1.msra.mxu0 0.0
      %4309 = vmatprep.subr.mxu0 0.0
      %4310 = vmatpush1.msra.mxu0 0.0
      %4311 = vmatprep.subr.mxu0 0.0
      %4312 = vmatpush1.msra.mxu0 0.0
      %4313 = vmatprep.subr.mxu0 0.0
      %4314 = vmatpush1.msra.mxu0 0.0
      %4315 = vmatprep.subr.mxu0 0.0
      %4316 = vmatpush1.msra.mxu0 0.0
      %4317 = vmatprep.subr.mxu0 0.0
      %4318 = vmatpush1.msra.mxu0 0.0
      %4319 = vmatprep.subr.mxu0 0.0
      %4320 = vmatpush1.msra.mxu0 0.0
      %4321 = vmatprep.subr.mxu0 0.0
      %4322 = vmatpush1.msra.mxu0 0.0
      %4323 = vmatprep.subr.mxu0 0.0
      %4324 = vmatpush1.msra.mxu0 0.0
      %4325 = vmatprep.subr.mxu0 0.0
      %4326 = vmatpush1.msra.mxu0 0.0
      %4327 = vmatprep.subr.mxu0 0.0
      %4328 = vmatpush1.msra.mxu0 0.0
      %4329 = vmatprep.subr.mxu0 0.0
      %4330 = vmatpush1.msra.mxu0 0.0
      %4331 = vmatprep.subr.mxu0 0.0
      %4332 = vmatpush1.msra.mxu0 0.0
      %4333 = vmatprep.subr.mxu0 0.0
      %4334 = vmatpush1.msra.mxu0 0.0
      %4335 = vmatprep.subr.mxu0 0.0
      %4336 = vmatpush1.msra.mxu0 0.0
      %4337 = vmatprep.subr.mxu0 0.0
      %4338 = vmatpush1.msra.mxu0 0.0
      %4339 = vmatprep.subr.mxu0 0.0
      %4340 = vmatpush1.msra.mxu0 0.0
      %4341 = vmatprep.subr.mxu0 0.0
      %4342 = vmatpush1.msra.mxu0 0.0
      %4343 = vmatprep.subr.mxu0 0.0
      %4344 = vmatpush1.msra.mxu0 0.0
      %4345 = vmatprep.subr.mxu0 0.0
      %4346 = vmatpush1.msra.mxu0 0.0
      %4347 = vmatprep.subr.mxu0 0.0
      %4348 = vmatpush1.msra.mxu0 0.0
      %4349 = vmatprep.subr.mxu0 0.0
      %4350 = vmatpush1.msra.mxu0 0.0
      %4351 = vmatprep.subr.mxu0 0.0
      %4352 = vmatpush1.msra.mxu0 0.0
      %4353 = vmatprep.subr.mxu0 0.0
      %4354 = vmatpush1.msra.mxu0 0.0
      %4355 = vmatprep.subr.mxu0 0.0
      %4356 = vmatpush1.msra.mxu0 0.0
      %4357 = vmatprep.subr.mxu0 0.0
      %4358 = vmatpush1.msra.mxu0 0.0
      %4359 = vmatprep.subr.mxu0 0.0
      %4360 = vmatpush1.msra.mxu0 0.0
      %4361 = vmatprep.subr.mxu0 0.0
      %4362 = vmatpush1.msra.mxu0 0.0
      %4363 = vmatprep.subr.mxu0 0.0
      %4364 = vmatpush1.msra.mxu0 0.0
      %4365 = vmatprep.mubr.f32.mxu0 0.0
      %4366 = vmatmul.mubr.f32.gmra.mrb[0].mxu0 %v4206
      %v4367 = vpop.f32.mrb[0].mxu0
      %v4368 = vadd.f32 0.0, %v4367
      %v4369 = vpop.f32.mrb[0].mxu0
      %4370 = vmatprep.mubr.f32.mxu0 0.0
      %4371 = vmatmul.mubr.f32.gmra.mrb[0].mxu0 %v4209
      %v4372 = vpop.f32.mrb[0].mxu0
      %v4373 = vadd.f32 0.0, %v4372
      %v4374 = vpop.f32.mrb[0].mxu0
      %4375 = vmatprep.mubr.f32.mxu0 0.0
      %4376 = vmatmul.mubr.f32.gmra.mrb[0].mxu0 %v4212
      %v4377 = vpop.f32.mrb[0].mxu0
      %v4378 = vadd.f32 0.0, %v4377
      %v4379 = vpop.f32.mrb[0].mxu0
      %4380 = vmatprep.mubr.f32.mxu0 0.0
      %4381 = vmatmul.mubr.f32.gmra.mrb[0].mxu0 %v4215
      %v4382 = vpop.f32.mrb[0].mxu0
      %v4383 = vadd.f32 0.0, %v4382
      %v4384 = vpop.f32.mrb[0].mxu0
      %4385 = vmatprep.mubr.f32.mxu0 0.0
      %4386 = vmatmul.mubr.f32.gmra.mrb[0].mxu0 %v4218
      %v4387 = vpop.f32.mrb[0].mxu0
      %v4388 = vadd.f32 0.0, %v4387
      %v4389 = vpop.f32.mrb[0].mxu0
      %4390 = vmatprep.mubr.f32.mxu0 0.0
      %4391 = vmatmul.mubr.f32.gmra.mrb[0].mxu0 %v4221
      %v4392 = vpop.f32.mrb[0].mxu0
      %v4393 = vadd.f32 0.0, %v4392
      %v4394 = vpop.f32.mrb[0].mxu0
      %4395 = vmatprep.mubr.f32.mxu0 0.0
      %4396 = vmatmul.mubr.f32.gmra.mrb[0].mxu0 %v4224
      %v4397 = vpop.f32.mrb[0].mxu0
      %v4398 = vadd.f32 0.0, %v4397
      %v4399 = vpop.f32.mrb[0].mxu0
      %4400 = vmatprep.mubr.f32.mxu0 0.0
      %4401 = vmatmul.mubr.f32.gmra.mrb[0].mxu0 %v4227
      %v4402 = vpop.f32.mrb[0].mxu0
      %v4403 = vadd.f32 0.0, %v4402
      %v4404 = vpop.f32.mrb[0].mxu0
      %4405 = vmatprep.mubr.f32.mxu0 0.0
      %4406 = vmatmul.mubr.f32.gmra.mrb[0].mxu0 %v4230
      %v4407 = vpop.f32.mrb[0].mxu0
      %v4408 = vadd.f32 0.0, %v4407
      %v4409 = vpop.f32.mrb[0].mxu0
      %4410 = vmatprep.mubr.f32.mxu0 0.0
      %4411 = vmatmul.mubr.f32.gmra.mrb[0].mxu0 %v4233
      %v4412 = vpop.f32.mrb[0].mxu0
      %v4413 = vadd.f32 0.0, %v4412
      %v4414 = vpop.f32.mrb[0].mxu0
      %4415 = vmatprep.mubr.f32.mxu0 0.0
      %4416 = vmatmul.mubr.f32.gmra.mrb[0].mxu0 %v4236
      %v4417 = vpop.f32.mrb[0].mxu0
      %v4418 = vadd.f32 0.0, %v4417
      %v4419 = vpop.f32.mrb[0].mxu0
      %4420 = vmatprep.mubr.f32.mxu0 0.0
      %4421 = vmatmul.mubr.f32.gmra.mrb[0].mxu0 %v4239
      %v4422 = vpop.f32.mrb[0].mxu0
      %v4423 = vadd.f32 0.0, %v4422
      %v4424 = vpop.f32.mrb[0].mxu0
      %4425 = vmatprep.mubr.f32.mxu0 0.0
      %4426 = vmatmul.mubr.f32.gmra.mrb[0].mxu0 %v4242
      %v4427 = vpop.f32.mrb[0].mxu0
      %v4428 = vadd.f32 0.0, %v4427
      %v4429 = vpop.f32.mrb[0].mxu0
      %4430 = vmatprep.mubr.f32.mxu0 0.0
      %4431 = vmatmul.mubr.f32.gmra.mrb[0].mxu0 %v4245
      %v4432 = vpop.f32.mrb[0].mxu0
      %v4433 = vadd.f32 0.0, %v4432
      %v4434 = vpop.f32.mrb[0].mxu0
      %4435 = vmatprep.mubr.f32.mxu0 0.0
      %4436 = vmatmul.mubr.f32.gmra.mrb[0].mxu0 %v4248
      %v4437 = vpop.f32.mrb[0].mxu0
      %v4438 = vadd.f32 0.0, %v4437
      %v4439 = vpop.f32.mrb[0].mxu0
      %4440 = vmatprep.mubr.f32.mxu0 0.0
      %4441 = vmatmul.mubr.f32.gmra.mrb[0].mxu0 %v4251
      %v4442 = vpop.f32.mrb[0].mxu0
      %v4443 = vadd.f32 0.0, %v4442
      %v4444 = vpop.f32.mrb[0].mxu0
      %4445 = vmatprep.mubr.f32.mxu0 0.0
      %4446 = vmatmul.mubr.f32.gmra.mrb[0].mxu0 %v4254
      %v4447 = vpop.f32.mrb[0].mxu0
      %v4448 = vadd.f32 0.0, %v4447
      %v4449 = vpop.f32.mrb[0].mxu0
      %4450 = vmatprep.mubr.f32.mxu0 0.0
      %4451 = vmatmul.mubr.f32.gmra.mrb[0].mxu0 %v4257
      %v4452 = vpop.f32.mrb[0].mxu0
      %v4453 = vadd.f32 0.0, %v4452
      %v4454 = vpop.f32.mrb[0].mxu0
      %4455 = vmatprep.mubr.f32.mxu0 0.0
      %4456 = vmatmul.mubr.f32.gmra.mrb[0].mxu0 %v4260
      %v4457 = vpop.f32.mrb[0].mxu0
      %v4458 = vadd.f32 0.0, %v4457
      %v4459 = vpop.f32.mrb[0].mxu0
      %4460 = vmatprep.mubr.f32.mxu0 0.0
      %4461 = vmatmul.mubr.f32.gmra.mrb[0].mxu0 %v4263
      %v4462 = vpop.f32.mrb[0].mxu0
      %v4463 = vadd.f32 0.0, %v4462
      %v4464 = vpop.f32.mrb[0].mxu0
      %4465 = vmatprep.mubr.f32.mxu0 0.0
      %4466 = vmatmul.mubr.f32.gmra.mrb[0].mxu0 %v4266
      %v4467 = vpop.f32.mrb[0].mxu0
      %v4468 = vadd.f32 0.0, %v4467
      %v4469 = vpop.f32.mrb[0].mxu0
      %4470 = vmatprep.mubr.f32.mxu0 0.0
      %4471 = vmatmul.mubr.f32.gmra.mrb[0].mxu0 %v4269
      %v4472 = vpop.f32.mrb[0].mxu0
      %v4473 = vadd.f32 0.0, %v4472
      %v4474 = vpop.f32.mrb[0].mxu0
      %4475 = vmatprep.mubr.f32.mxu0 0.0
      %4476 = vmatmul.mubr.f32.gmra.mrb[0].mxu0 %v4272
      %v4477 = vpop.f32.mrb[0].mxu0
      %v4478 = vadd.f32 0.0, %v4477
      %v4479 = vpop.f32.mrb[0].mxu0
      %4480 = vmatprep.mubr.f32.mxu0 0.0
      %4481 = vmatmul.mubr.f32.gmra.mrb[0].mxu0 %v4275
      %v4482 = vpop.f32.mrb[0].mxu0
      %v4483 = vadd.f32 0.0, %v4482
      %v4484 = vpop.f32.mrb[0].mxu0
      %4485 = vmatprep.mubr.f32.mxu0 0.0
      %4486 = vmatmul.mubr.f32.gmra.mrb[0].mxu0 %v4278
      %v4487 = vpop.f32.mrb[0].mxu0
      %v4488 = vadd.f32 0.0, %v4487
      %v4489 = vpop.f32.mrb[0].mxu0
      %4490 = vmatprep.mubr.f32.mxu0 0.0
      %4491 = vmatmul.mubr.f32.gmra.mrb[0].mxu0 %v4281
      %v4492 = vpop.f32.mrb[0].mxu0
      %v4493 = vadd.f32 0.0, %v4492
      %v4494 = vpop.f32.mrb[0].mxu0
      %4495 = vmatprep.mubr.f32.mxu0 0.0
      %4496 = vmatmul.mubr.f32.gmra.mrb[0].mxu0 %v4284
      %v4497 = vpop.f32.mrb[0].mxu0
      %v4498 = vadd.f32 0.0, %v4497
      %v4499 = vpop.f32.mrb[0].mxu0
      %4500 = vmatprep.mubr.f32.mxu0 0.0
      %4501 = vmatmul.mubr.f32.gmra.mrb[0].mxu0 %v4287
      %v4502 = vpop.f32.mrb[0].mxu0
      %v4503 = vadd.f32 0.0, %v4502
      %v4504 = vpop.f32.mrb[0].mxu0
      %4505 = vmatprep.mubr.f32.mxu0 0.0
      %4506 = vmatmul.mubr.f32.gmra.mrb[0].mxu0 %v4290
      %v4507 = vpop.f32.mrb[0].mxu0
      %v4508 = vadd.f32 0.0, %v4507
      %v4509 = vpop.f32.mrb[0].mxu0
      %4510 = vmatprep.mubr.f32.mxu0 0.0
      %4511 = vmatmul.mubr.f32.gmra.mrb[0].mxu0 %v4293
      %v4512 = vpop.f32.mrb[0].mxu0
      %v4513 = vadd.f32 0.0, %v4512
      %v4514 = vpop.f32.mrb[0].mxu0
      %4515 = vmatprep.mubr.f32.mxu0 0.0
      %4516 = vmatmul.mubr.f32.gmra.mrb[0].mxu0 %v4296
      %v4517 = vpop.f32.mrb[0].mxu0
      %v4518 = vadd.f32 0.0, %v4517
      %v4519 = vpop.f32.mrb[0].mxu0
      %4520 = vmatprep.mubr.f32.mxu0 0.0
      %4521 = vmatmul.mubr.f32.gmra.mrb[0].mxu0 %v4299
      %v4522 = vpop.f32.mrb[0].mxu0
      %v4523 = vadd.f32 0.0, %v4522
      %v4524 = vpop.f32.mrb[0].mxu0
      %4525 = vdwg.mxu0
      %4526 = vrot.lane.b32.xlu0 %v179, 32
      %v4527 = vpop.permute.xlu0 %4526
      %4529 = vmatprep.subr.mxu0 0.0
      %4530 = vmatpush1.msra.mxu0 %v4527
      %4531 = vmatprep.subr.mxu0 0.0
      %4532 = vmatpush1.msra.mxu0 0.0
      %4533 = vmatprep.subr.mxu0 0.0
      %4534 = vmatpush1.msra.mxu0 0.0
      %4535 = vmatprep.subr.mxu0 0.0
      %4536 = vmatpush1.msra.mxu0 0.0
      %4537 = vmatprep.subr.mxu0 0.0
      %4538 = vmatpush1.msra.mxu0 0.0
      %4539 = vmatprep.subr.mxu0 0.0
      %4540 = vmatpush1.msra.mxu0 0.0
      %4541 = vmatprep.subr.mxu0 0.0
      %4542 = vmatpush1.msra.mxu0 0.0
      %4543 = vmatprep.subr.mxu0 0.0
      %4544 = vmatpush1.msra.mxu0 0.0
      %4545 = vmatprep.subr.mxu0 0.0
      %4546 = vmatpush1.msra.mxu0 0.0
      %4547 = vmatprep.subr.mxu0 0.0
      %4548 = vmatpush1.msra.mxu0 0.0
      %4549 = vmatprep.subr.mxu0 0.0
      %4550 = vmatpush1.msra.mxu0 0.0
      %4551 = vmatprep.subr.mxu0 0.0
      %4552 = vmatpush1.msra.mxu0 0.0
      %4553 = vmatprep.subr.mxu0 0.0
      %4554 = vmatpush1.msra.mxu0 0.0
      %4555 = vmatprep.subr.mxu0 0.0
      %4556 = vmatpush1.msra.mxu0 0.0
      %4557 = vmatprep.subr.mxu0 0.0
      %4558 = vmatpush1.msra.mxu0 0.0
      %4559 = vmatprep.subr.mxu0 0.0
      %4560 = vmatpush1.msra.mxu0 0.0
      %4561 = vmatprep.subr.mxu0 0.0
      %4562 = vmatpush1.msra.mxu0 0.0
      %4563 = vmatprep.subr.mxu0 0.0
      %4564 = vmatpush1.msra.mxu0 0.0
      %4565 = vmatprep.subr.mxu0 0.0
      %4566 = vmatpush1.msra.mxu0 0.0
      %4567 = vmatprep.subr.mxu0 0.0
      %4568 = vmatpush1.msra.mxu0 0.0
      %4569 = vmatprep.subr.mxu0 0.0
      %4570 = vmatpush1.msra.mxu0 0.0
      %4571 = vmatprep.subr.mxu0 0.0
      %4572 = vmatpush1.msra.mxu0 0.0
      %4573 = vmatprep.subr.mxu0 0.0
      %4574 = vmatpush1.msra.mxu0 0.0
      %4575 = vmatprep.subr.mxu0 0.0
      %4576 = vmatpush1.msra.mxu0 0.0
      %4577 = vmatprep.subr.mxu0 0.0
      %4578 = vmatpush1.msra.mxu0 0.0
      %4579 = vmatprep.subr.mxu0 0.0
      %4580 = vmatpush1.msra.mxu0 0.0
      %4581 = vmatprep.subr.mxu0 0.0
      %4582 = vmatpush1.msra.mxu0 0.0
      %4583 = vmatprep.subr.mxu0 0.0
      %4584 = vmatpush1.msra.mxu0 0.0
      %4585 = vmatprep.subr.mxu0 0.0
      %4586 = vmatpush1.msra.mxu0 0.0
      %4587 = vmatprep.subr.mxu0 0.0
      %4588 = vmatpush1.msra.mxu0 0.0
      %4589 = vmatprep.subr.mxu0 0.0
      %4590 = vmatpush1.msra.mxu0 0.0
      %4591 = vmatprep.subr.mxu0 0.0
      %4592 = vmatpush1.msra.mxu0 0.0
      %4593 = vmatprep.mubr.f32.mxu0 0.0
      %4594 = vmatmul.mubr.f32.gmra.mrb[0].mxu0 %v4206
      %v4595 = vpop.f32.mrb[0].mxu0
      %v4596 = vadd.f32 0.0, %v4595
      %v4597 = vpop.f32.mrb[0].mxu0
      %4598 = vmatprep.mubr.f32.mxu0 0.0
      %4599 = vmatmul.mubr.f32.gmra.mrb[0].mxu0 %v4209
      %v4600 = vpop.f32.mrb[0].mxu0
      %v4601 = vadd.f32 0.0, %v4600
      %v4602 = vpop.f32.mrb[0].mxu0
      %4603 = vmatprep.mubr.f32.mxu0 0.0
      %4604 = vmatmul.mubr.f32.gmra.mrb[0].mxu0 %v4212
      %v4605 = vpop.f32.mrb[0].mxu0
      %v4606 = vadd.f32 0.0, %v4605
      %v4607 = vpop.f32.mrb[0].mxu0
      %4608 = vmatprep.mubr.f32.mxu0 0.0
      %4609 = vmatmul.mubr.f32.gmra.mrb[0].mxu0 %v4215
      %v4610 = vpop.f32.mrb[0].mxu0
      %v4611 = vadd.f32 0.0, %v4610
      %v4612 = vpop.f32.mrb[0].mxu0
      %4613 = vmatprep.mubr.f32.mxu0 0.0
      %4614 = vmatmul.mubr.f32.gmra.mrb[0].mxu0 %v4218
      %v4615 = vpop.f32.mrb[0].mxu0
      %v4616 = vadd.f32 0.0, %v4615
      %v4617 = vpop.f32.mrb[0].mxu0
      %4618 = vmatprep.mubr.f32.mxu0 0.0
      %4619 = vmatmul.mubr.f32.gmra.mrb[0].mxu0 %v4221
      %v4620 = vpop.f32.mrb[0].mxu0
      %v4621 = vadd.f32 0.0, %v4620
      %v4622 = vpop.f32.mrb[0].mxu0
      %4623 = vmatprep.mubr.f32.mxu0 0.0
      %4624 = vmatmul.mubr.f32.gmra.mrb[0].mxu0 %v4224
      %v4625 = vpop.f32.mrb[0].mxu0
      %v4626 = vadd.f32 0.0, %v4625
      %v4627 = vpop.f32.mrb[0].mxu0
      %4628 = vmatprep.mubr.f32.mxu0 0.0
      %4629 = vmatmul.mubr.f32.gmra.mrb[0].mxu0 %v4227
      %v4630 = vpop.f32.mrb[0].mxu0
      %v4631 = vadd.f32 0.0, %v4630
      %v4632 = vpop.f32.mrb[0].mxu0
      %4633 = vmatprep.mubr.f32.mxu0 0.0
      %4634 = vmatmul.mubr.f32.gmra.mrb[0].mxu0 %v4230
      %v4635 = vpop.f32.mrb[0].mxu0
      %v4636 = vadd.f32 0.0, %v4635
      %v4637 = vpop.f32.mrb[0].mxu0
      %4638 = vmatprep.mubr.f32.mxu0 0.0
      %4639 = vmatmul.mubr.f32.gmra.mrb[0].mxu0 %v4233
      %v4640 = vpop.f32.mrb[0].mxu0
      %v4641 = vadd.f32 0.0, %v4640
      %v4642 = vpop.f32.mrb[0].mxu0
      %4643 = vmatprep.mubr.f32.mxu0 0.0
      %4644 = vmatmul.mubr.f32.gmra.mrb[0].mxu0 %v4236
      %v4645 = vpop.f32.mrb[0].mxu0
      %v4646 = vadd.f32 0.0, %v4645
      %v4647 = vpop.f32.mrb[0].mxu0
      %4648 = vmatprep.mubr.f32.mxu0 0.0
      %4649 = vmatmul.mubr.f32.gmra.mrb[0].mxu0 %v4239
      %v4650 = vpop.f32.mrb[0].mxu0
      %v4651 = vadd.f32 0.0, %v4650
      %v4652 = vpop.f32.mrb[0].mxu0
      %4653 = vmatprep.mubr.f32.mxu0 0.0
      %4654 = vmatmul.mubr.f32.gmra.mrb[0].mxu0 %v4242
      %v4655 = vpop.f32.mrb[0].mxu0
      %v4656 = vadd.f32 0.0, %v4655
      %v4657 = vpop.f32.mrb[0].mxu0
      %4658 = vmatprep.mubr.f32.mxu0 0.0
      %4659 = vmatmul.mubr.f32.gmra.mrb[0].mxu0 %v4245
      %v4660 = vpop.f32.mrb[0].mxu0
      %v4661 = vadd.f32 0.0, %v4660
      %v4662 = vpop.f32.mrb[0].mxu0
      %4663 = vmatprep.mubr.f32.mxu0 0.0
      %4664 = vmatmul.mubr.f32.gmra.mrb[0].mxu0 %v4248
      %v4665 = vpop.f32.mrb[0].mxu0
      %v4666 = vadd.f32 0.0, %v4665
      %v4667 = vpop.f32.mrb[0].mxu0
      %4668 = vmatprep.mubr.f32.mxu0 0.0
      %4669 = vmatmul.mubr.f32.gmra.mrb[0].mxu0 %v4251
      %v4670 = vpop.f32.mrb[0].mxu0
      %v4671 = vadd.f32 0.0, %v4670
      %v4672 = vpop.f32.mrb[0].mxu0
      %4673 = vmatprep.mubr.f32.mxu0 0.0
      %4674 = vmatmul.mubr.f32.gmra.mrb[0].mxu0 %v4254
      %v4675 = vpop.f32.mrb[0].mxu0
      %v4676 = vadd.f32 0.0, %v4675
      %v4677 = vpop.f32.mrb[0].mxu0
      %4678 = vmatprep.mubr.f32.mxu0 0.0
      %4679 = vmatmul.mubr.f32.gmra.mrb[0].mxu0 %v4257
      %v4680 = vpop.f32.mrb[0].mxu0
      %v4681 = vadd.f32 0.0, %v4680
      %v4682 = vpop.f32.mrb[0].mxu0
      %4683 = vmatprep.mubr.f32.mxu0 0.0
      %4684 = vmatmul.mubr.f32.gmra.mrb[0].mxu0 %v4260
      %v4685 = vpop.f32.mrb[0].mxu0
      %v4686 = vadd.f32 0.0, %v4685
      %v4687 = vpop.f32.mrb[0].mxu0
      %4688 = vmatprep.mubr.f32.mxu0 0.0
      %4689 = vmatmul.mubr.f32.gmra.mrb[0].mxu0 %v4263
      %v4690 = vpop.f32.mrb[0].mxu0
      %v4691 = vadd.f32 0.0, %v4690
      %v4692 = vpop.f32.mrb[0].mxu0
      %4693 = vmatprep.mubr.f32.mxu0 0.0
      %4694 = vmatmul.mubr.f32.gmra.mrb[0].mxu0 %v4266
      %v4695 = vpop.f32.mrb[0].mxu0
      %v4696 = vadd.f32 0.0, %v4695
      %v4697 = vpop.f32.mrb[0].mxu0
      %4698 = vmatprep.mubr.f32.mxu0 0.0
      %4699 = vmatmul.mubr.f32.gmra.mrb[0].mxu0 %v4269
      %v4700 = vpop.f32.mrb[0].mxu0
      %v4701 = vadd.f32 0.0, %v4700
      %v4702 = vpop.f32.mrb[0].mxu0
      %4703 = vmatprep.mubr.f32.mxu0 0.0
      %4704 = vmatmul.mubr.f32.gmra.mrb[0].mxu0 %v4272
      %v4705 = vpop.f32.mrb[0].mxu0
      %v4706 = vadd.f32 0.0, %v4705
      %v4707 = vpop.f32.mrb[0].mxu0
      %4708 = vmatprep.mubr.f32.mxu0 0.0
      %4709 = vmatmul.mubr.f32.gmra.mrb[0].mxu0 %v4275
      %v4710 = vpop.f32.mrb[0].mxu0
      %v4711 = vadd.f32 0.0, %v4710
      %v4712 = vpop.f32.mrb[0].mxu0
      %4713 = vmatprep.mubr.f32.mxu0 0.0
      %4714 = vmatmul.mubr.f32.gmra.mrb[0].mxu0 %v4278
      %v4715 = vpop.f32.mrb[0].mxu0
      %v4716 = vadd.f32 0.0, %v4715
      %v4717 = vpop.f32.mrb[0].mxu0
      %4718 = vmatprep.mubr.f32.mxu0 0.0
      %4719 = vmatmul.mubr.f32.gmra.mrb[0].mxu0 %v4281
      %v4720 = vpop.f32.mrb[0].mxu0
      %v4721 = vadd.f32 0.0, %v4720
      %v4722 = vpop.f32.mrb[0].mxu0
      %4723 = vmatprep.mubr.f32.mxu0 0.0
      %4724 = vmatmul.mubr.f32.gmra.mrb[0].mxu0 %v4284
      %v4725 = vpop.f32.mrb[0].mxu0
      %v4726 = vadd.f32 0.0, %v4725
      %v4727 = vpop.f32.mrb[0].mxu0
      %4728 = vmatprep.mubr.f32.mxu0 0.0
      %4729 = vmatmul.mubr.f32.gmra.mrb[0].mxu0 %v4287
      %v4730 = vpop.f32.mrb[0].mxu0
      %v4731 = vadd.f32 0.0, %v4730
      %v4732 = vpop.f32.mrb[0].mxu0
      %4733 = vmatprep.mubr.f32.mxu0 0.0
      %4734 = vmatmul.mubr.f32.gmra.mrb[0].mxu0 %v4290
      %v4735 = vpop.f32.mrb[0].mxu0
      %v4736 = vadd.f32 0.0, %v4735
      %v4737 = vpop.f32.mrb[0].mxu0
      %4738 = vmatprep.mubr.f32.mxu0 0.0
      %4739 = vmatmul.mubr.f32.gmra.mrb[0].mxu0 %v4293
      %v4740 = vpop.f32.mrb[0].mxu0
      %v4741 = vadd.f32 0.0, %v4740
      %v4742 = vpop.f32.mrb[0].mxu0
      %4743 = vmatprep.mubr.f32.mxu0 0.0
      %4744 = vmatmul.mubr.f32.gmra.mrb[0].mxu0 %v4296
      %v4745 = vpop.f32.mrb[0].mxu0
      %v4746 = vadd.f32 0.0, %v4745
      %v4747 = vpop.f32.mrb[0].mxu0
      %4748 = vmatprep.mubr.f32.mxu0 0.0
      %4749 = vmatmul.mubr.f32.gmra.mrb[0].mxu0 %v4299
      %v4750 = vpop.f32.mrb[0].mxu0
      %v4751 = vadd.f32 0.0, %v4750
      %v4752 = vpop.f32.mrb[0].mxu0
      %4753 = vdwg.mxu0
      %v4754 = vmul.f32 %v4368, %v4596
      %v4755 = vmul.f32 %v4373, %v4601
      %v4756 = vmul.f32 %v4378, %v4606
      %v4757 = vmul.f32 %v4383, %v4611
      %v4758 = vmul.f32 %v4388, %v4616
      %v4759 = vmul.f32 %v4393, %v4621
      %v4760 = vmul.f32 %v4398, %v4626
      %v4761 = vmul.f32 %v4403, %v4631
      %v4762 = vmul.f32 %v4408, %v4636
      %v4763 = vmul.f32 %v4413, %v4641
      %v4764 = vmul.f32 %v4418, %v4646
      %v4765 = vmul.f32 %v4423, %v4651
      %v4766 = vmul.f32 %v4428, %v4656
      %v4767 = vmul.f32 %v4433, %v4661
      %v4768 = vmul.f32 %v4438, %v4666
      %v4769 = vmul.f32 %v4443, %v4671
      %v4770 = vmul.f32 %v4448, %v4676
      %v4771 = vmul.f32 %v4453, %v4681
      %v4772 = vmul.f32 %v4458, %v4686
      %v4773 = vmul.f32 %v4463, %v4691
      %v4774 = vmul.f32 %v4468, %v4696
      %v4775 = vmul.f32 %v4473, %v4701
      %v4776 = vmul.f32 %v4478, %v4706
      %v4777 = vmul.f32 %v4483, %v4711
      %v4778 = vmul.f32 %v4488, %v4716
      %v4779 = vmul.f32 %v4493, %v4721
      %v4780 = vmul.f32 %v4498, %v4726
      %v4781 = vmul.f32 %v4503, %v4731
      %v4782 = vmul.f32 %v4508, %v4736
      %v4783 = vmul.f32 %v4513, %v4741
      %v4784 = vmul.f32 %v4518, %v4746
      %v4785 = vmul.f32 %v4523, %v4751
      %4818 = vrot.lane.b32.xlu0 %v4754, 112
      %v4819 = vpop.permute.xlu0 %4818
      %4820 = vrot.lane.b32.xlu0 %v4755, 112
      %v4821 = vpop.permute.xlu0 %4820
      %4822 = vrot.lane.b32.xlu0 %v4756, 112
      %v4823 = vpop.permute.xlu0 %4822
      %4824 = vrot.lane.b32.xlu0 %v4757, 112
      %v4825 = vpop.permute.xlu0 %4824
      %4826 = vrot.lane.b32.xlu0 %v4758, 112
      %v4827 = vpop.permute.xlu0 %4826
      %4828 = vrot.lane.b32.xlu0 %v4759, 112
      %v4829 = vpop.permute.xlu0 %4828
      %4830 = vrot.lane.b32.xlu0 %v4760, 112
      %v4831 = vpop.permute.xlu0 %4830
      %4832 = vrot.lane.b32.xlu0 %v4761, 112
      %v4833 = vpop.permute.xlu0 %4832
      %4834 = vrot.lane.b32.xlu0 %v4762, 112
      %v4835 = vpop.permute.xlu0 %4834
      %4836 = vrot.lane.b32.xlu0 %v4763, 112
      %v4837 = vpop.permute.xlu0 %4836
      %4838 = vrot.lane.b32.xlu0 %v4764, 112
      %v4839 = vpop.permute.xlu0 %4838
      %4840 = vrot.lane.b32.xlu0 %v4765, 112
      %v4841 = vpop.permute.xlu0 %4840
      %4842 = vrot.lane.b32.xlu0 %v4766, 112
      %v4843 = vpop.permute.xlu0 %4842
      %4844 = vrot.lane.b32.xlu0 %v4767, 112
      %v4845 = vpop.permute.xlu0 %4844
      %4846 = vrot.lane.b32.xlu0 %v4768, 112
      %v4847 = vpop.permute.xlu0 %4846
      %4848 = vrot.lane.b32.xlu0 %v4769, 112
      %v4849 = vpop.permute.xlu0 %4848
      %4850 = vrot.lane.b32.xlu0 %v4770, 112
      %v4851 = vpop.permute.xlu0 %4850
      %4852 = vrot.lane.b32.xlu0 %v4771, 112
      %v4853 = vpop.permute.xlu0 %4852
      %4854 = vrot.lane.b32.xlu0 %v4772, 112
      %v4855 = vpop.permute.xlu0 %4854
      %4856 = vrot.lane.b32.xlu0 %v4773, 112
      %v4857 = vpop.permute.xlu0 %4856
      %4858 = vrot.lane.b32.xlu0 %v4774, 112
      %v4859 = vpop.permute.xlu0 %4858
      %4860 = vrot.lane.b32.xlu0 %v4775, 112
      %v4861 = vpop.permute.xlu0 %4860
      %4862 = vrot.lane.b32.xlu0 %v4776, 112
      %v4863 = vpop.permute.xlu0 %4862
      %4864 = vrot.lane.b32.xlu0 %v4777, 112
      %v4865 = vpop.permute.xlu0 %4864
      %4866 = vrot.lane.b32.xlu0 %v4778, 112
      %v4867 = vpop.permute.xlu0 %4866
      %4868 = vrot.lane.b32.xlu0 %v4779, 112
      %v4869 = vpop.permute.xlu0 %4868
      %4870 = vrot.lane.b32.xlu0 %v4780, 112
      %v4871 = vpop.permute.xlu0 %4870
      %4872 = vrot.lane.b32.xlu0 %v4781, 112
      %v4873 = vpop.permute.xlu0 %4872
      %4874 = vrot.lane.b32.xlu0 %v4782, 112
      %v4875 = vpop.permute.xlu0 %4874
      %4876 = vrot.lane.b32.xlu0 %v4783, 112
      %v4877 = vpop.permute.xlu0 %4876
      %4878 = vrot.lane.b32.xlu0 %v4784, 112
      %v4879 = vpop.permute.xlu0 %4878
      %4880 = vrot.lane.b32.xlu0 %v4785, 112
      %v4881 = vpop.permute.xlu0 %4880
      %v4914 = vmul.f32 %v4754, %v4819
      %v4915 = vmul.f32 %v4755, %v4821
      %v4916 = vmul.f32 %v4756, %v4823
      %v4917 = vmul.f32 %v4757, %v4825
      %v4918 = vmul.f32 %v4758, %v4827
      %v4919 = vmul.f32 %v4759, %v4829
      %v4920 = vmul.f32 %v4760, %v4831
      %v4921 = vmul.f32 %v4761, %v4833
      %v4922 = vmul.f32 %v4762, %v4835
      %v4923 = vmul.f32 %v4763, %v4837
      %v4924 = vmul.f32 %v4764, %v4839
      %v4925 = vmul.f32 %v4765, %v4841
      %v4926 = vmul.f32 %v4766, %v4843
      %v4927 = vmul.f32 %v4767, %v4845
      %v4928 = vmul.f32 %v4768, %v4847
      %v4929 = vmul.f32 %v4769, %v4849
      %v4930 = vmul.f32 %v4770, %v4851
      %v4931 = vmul.f32 %v4771, %v4853
      %v4932 = vmul.f32 %v4772, %v4855
      %v4933 = vmul.f32 %v4773, %v4857
      %v4934 = vmul.f32 %v4774, %v4859
      %v4935 = vmul.f32 %v4775, %v4861
      %v4936 = vmul.f32 %v4776, %v4863
      %v4937 = vmul.f32 %v4777, %v4865
      %v4938 = vmul.f32 %v4778, %v4867
      %v4939 = vmul.f32 %v4779, %v4869
      %v4940 = vmul.f32 %v4780, %v4871
      %v4941 = vmul.f32 %v4781, %v4873
      %v4942 = vmul.f32 %v4782, %v4875
      %v4943 = vmul.f32 %v4783, %v4877
      %v4944 = vmul.f32 %v4784, %v4879
      %v4945 = vmul.f32 %v4785, %v4881
      %v4946 = vld [vmem:[%s1 + $0x50] sm:$0xff]
      %v4947 = vld [vmem:[%s1 + $0x58] sm:$0xff]
      %vm4948 = vcmask 130048
      %v4950 = vsel %vm4948, %v4914, 0
      %v4953 = vsel %vm4948, %v4915, 0
      %v4956 = vsel %vm4948, %v4916, 0
      %v4959 = vsel %vm4948, %v4917, 0
      %v4962 = vsel %vm4948, %v4918, 0
      %v4965 = vsel %vm4948, %v4919, 0
      %v4968 = vsel %vm4948, %v4920, 0
      %v4971 = vsel %vm4948, %v4921, 0
      %v4974 = vsel %vm4948, %v4922, 0
      %v4977 = vsel %vm4948, %v4923, 0
      %v4980 = vsel %vm4948, %v4924, 0
      %v4983 = vsel %vm4948, %v4925, 0
      %v4986 = vsel %vm4948, %v4926, 0
      %v4989 = vsel %vm4948, %v4927, 0
      %v4992 = vsel %vm4948, %v4928, 0
      %v4995 = vsel %vm4948, %v4929, 0
      %v4998 = vsel %vm4948, %v4930, 0
      %v5001 = vsel %vm4948, %v4931, 0
      %v5004 = vsel %vm4948, %v4932, 0
      %v5007 = vsel %vm4948, %v4933, 0
      %v5010 = vsel %vm4948, %v4934, 0
      %v5013 = vsel %vm4948, %v4935, 0
      %v5016 = vsel %vm4948, %v4936, 0
      %v5019 = vsel %vm4948, %v4937, 0
      %v5022 = vsel %vm4948, %v4938, 0
      %v5025 = vsel %vm4948, %v4939, 0
      %v5028 = vsel %vm4948, %v4940, 0
      %v5031 = vsel %vm4948, %v4941, 0
      %v5034 = vsel %vm4948, %v4942, 0
      %v5037 = vsel %vm4948, %v4943, 0
      %v5040 = vsel %vm4948, %v4944, 0
      %v5043 = vsel %vm4948, %v4945, 0
      %5045 = vmatprep.subr.mxu0 0.0
      %5046 = vmatpush1.msra.mxu0 %v4946
      %5047 = vmatprep.subr.mxu0 0.0
      %5048 = vmatpush1.msra.mxu0 %v4947
      %5049 = vmatprep.subr.mxu0 0.0
      %5050 = vmatpush1.msra.mxu0 0.0
      %5051 = vmatprep.subr.mxu0 0.0
      %5052 = vmatpush1.msra.mxu0 0.0
      %5053 = vmatprep.subr.mxu0 0.0
      %5054 = vmatpush1.msra.mxu0 0.0
      %5055 = vmatprep.subr.mxu0 0.0
      %5056 = vmatpush1.msra.mxu0 0.0
      %5057 = vmatprep.subr.mxu0 0.0
      %5058 = vmatpush1.msra.mxu0 0.0
      %5059 = vmatprep.subr.mxu0 0.0
      %5060 = vmatpush1.msra.mxu0 0.0
      %5061 = vmatprep.subr.mxu0 0.0
      %5062 = vmatpush1.msra.mxu0 0.0
      %5063 = vmatprep.subr.mxu0 0.0
      %5064 = vmatpush1.msra.mxu0 0.0
      %5065 = vmatprep.subr.mxu0 0.0
      %5066 = vmatpush1.msra.mxu0 0.0
      %5067 = vmatprep.subr.mxu0 0.0
      %5068 = vmatpush1.msra.mxu0 0.0
      %5069 = vmatprep.subr.mxu0 0.0
      %5070 = vmatpush1.msra.mxu0 0.0
      %5071 = vmatprep.subr.mxu0 0.0
      %5072 = vmatpush1.msra.mxu0 0.0
      %5073 = vmatprep.subr.mxu0 0.0
      %5074 = vmatpush1.msra.mxu0 0.0
      %5075 = vmatprep.subr.mxu0 0.0
      %5076 = vmatpush1.msra.mxu0 0.0
      %5077 = vmatprep.subr.mxu0 0.0
      %5078 = vmatpush1.msra.mxu0 0.0
      %5079 = vmatprep.subr.mxu0 0.0
      %5080 = vmatpush1.msra.mxu0 0.0
      %5081 = vmatprep.subr.mxu0 0.0
      %5082 = vmatpush1.msra.mxu0 0.0
      %5083 = vmatprep.subr.mxu0 0.0
      %5084 = vmatpush1.msra.mxu0 0.0
      %5085 = vmatprep.subr.mxu0 0.0
      %5086 = vmatpush1.msra.mxu0 0.0
      %5087 = vmatprep.subr.mxu0 0.0
      %5088 = vmatpush1.msra.mxu0 0.0
      %5089 = vmatprep.subr.mxu0 0.0
      %5090 = vmatpush1.msra.mxu0 0.0
      %5091 = vmatprep.subr.mxu0 0.0
      %5092 = vmatpush1.msra.mxu0 0.0
      %5093 = vmatprep.subr.mxu0 0.0
      %5094 = vmatpush1.msra.mxu0 0.0
      %5095 = vmatprep.subr.mxu0 0.0
      %5096 = vmatpush1.msra.mxu0 0.0
      %5097 = vmatprep.subr.mxu0 0.0
      %5098 = vmatpush1.msra.mxu0 0.0
      %5099 = vmatprep.subr.mxu0 0.0
      %5100 = vmatpush1.msra.mxu0 0.0
      %5101 = vmatprep.subr.mxu0 0.0
      %5102 = vmatpush1.msra.mxu0 0.0
      %5103 = vmatprep.subr.mxu0 0.0
      %5104 = vmatpush1.msra.mxu0 0.0
      %5105 = vmatprep.subr.mxu0 0.0
      %5106 = vmatpush1.msra.mxu0 0.0
      %5107 = vmatprep.subr.mxu0 0.0
      %5108 = vmatpush1.msra.mxu0 0.0
      %5109 = vmatprep.mubr.f32.mxu0 0.0
      %5110 = vmatmul.mubr.f32.gmra.mrb[0].mxu0 %v4950
      %v5111 = vpop.f32.mrb[0].mxu0
      %v5112 = vadd.f32 0.0, %v5111
      %v5113 = vpop.f32.mrb[0].mxu0
      %5114 = vmatprep.mubr.f32.mxu0 0.0
      %5115 = vmatmul.mubr.f32.gmra.mrb[0].mxu0 %v4953
      %v5116 = vpop.f32.mrb[0].mxu0
      %v5117 = vadd.f32 0.0, %v5116
      %v5118 = vpop.f32.mrb[0].mxu0
      %5119 = vmatprep.mubr.f32.mxu0 0.0
      %5120 = vmatmul.mubr.f32.gmra.mrb[0].mxu0 %v4956
      %v5121 = vpop.f32.mrb[0].mxu0
      %v5122 = vadd.f32 0.0, %v5121
      %v5123 = vpop.f32.mrb[0].mxu0
      %5124 = vmatprep.mubr.f32.mxu0 0.0
      %5125 = vmatmul.mubr.f32.gmra.mrb[0].mxu0 %v4959
      %v5126 = vpop.f32.mrb[0].mxu0
      %v5127 = vadd.f32 0.0, %v5126
      %v5128 = vpop.f32.mrb[0].mxu0
      %5129 = vmatprep.mubr.f32.mxu0 0.0
      %5130 = vmatmul.mubr.f32.gmra.mrb[0].mxu0 %v4962
      %v5131 = vpop.f32.mrb[0].mxu0
      %v5132 = vadd.f32 0.0, %v5131
      %v5133 = vpop.f32.mrb[0].mxu0
      %5134 = vmatprep.mubr.f32.mxu0 0.0
      %5135 = vmatmul.mubr.f32.gmra.mrb[0].mxu0 %v4965
      %v5136 = vpop.f32.mrb[0].mxu0
      %v5137 = vadd.f32 0.0, %v5136
      %v5138 = vpop.f32.mrb[0].mxu0
      %5139 = vmatprep.mubr.f32.mxu0 0.0
      %5140 = vmatmul.mubr.f32.gmra.mrb[0].mxu0 %v4968
      %v5141 = vpop.f32.mrb[0].mxu0
      %v5142 = vadd.f32 0.0, %v5141
      %v5143 = vpop.f32.mrb[0].mxu0
      %5144 = vmatprep.mubr.f32.mxu0 0.0
      %5145 = vmatmul.mubr.f32.gmra.mrb[0].mxu0 %v4971
      %v5146 = vpop.f32.mrb[0].mxu0
      %v5147 = vadd.f32 0.0, %v5146
      %v5148 = vpop.f32.mrb[0].mxu0
      %5149 = vmatprep.mubr.f32.mxu0 0.0
      %5150 = vmatmul.mubr.f32.gmra.mrb[0].mxu0 %v4974
      %v5151 = vpop.f32.mrb[0].mxu0
      %v5152 = vadd.f32 0.0, %v5151
      %v5153 = vpop.f32.mrb[0].mxu0
      %5154 = vmatprep.mubr.f32.mxu0 0.0
      %5155 = vmatmul.mubr.f32.gmra.mrb[0].mxu0 %v4977
      %v5156 = vpop.f32.mrb[0].mxu0
      %v5157 = vadd.f32 0.0, %v5156
      %v5158 = vpop.f32.mrb[0].mxu0
      %5159 = vmatprep.mubr.f32.mxu0 0.0
      %5160 = vmatmul.mubr.f32.gmra.mrb[0].mxu0 %v4980
      %v5161 = vpop.f32.mrb[0].mxu0
      %v5162 = vadd.f32 0.0, %v5161
      %v5163 = vpop.f32.mrb[0].mxu0
      %5164 = vmatprep.mubr.f32.mxu0 0.0
      %5165 = vmatmul.mubr.f32.gmra.mrb[0].mxu0 %v4983
      %v5166 = vpop.f32.mrb[0].mxu0
      %v5167 = vadd.f32 0.0, %v5166
      %v5168 = vpop.f32.mrb[0].mxu0
      %5169 = vmatprep.mubr.f32.mxu0 0.0
      %5170 = vmatmul.mubr.f32.gmra.mrb[0].mxu0 %v4986
      %v5171 = vpop.f32.mrb[0].mxu0
      %v5172 = vadd.f32 0.0, %v5171
      %v5173 = vpop.f32.mrb[0].mxu0
      %5174 = vmatprep.mubr.f32.mxu0 0.0
      %5175 = vmatmul.mubr.f32.gmra.mrb[0].mxu0 %v4989
      %v5176 = vpop.f32.mrb[0].mxu0
      %v5177 = vadd.f32 0.0, %v5176
      %v5178 = vpop.f32.mrb[0].mxu0
      %5179 = vmatprep.mubr.f32.mxu0 0.0
      %5180 = vmatmul.mubr.f32.gmra.mrb[0].mxu0 %v4992
      %v5181 = vpop.f32.mrb[0].mxu0
      %v5182 = vadd.f32 0.0, %v5181
      %v5183 = vpop.f32.mrb[0].mxu0
      %5184 = vmatprep.mubr.f32.mxu0 0.0
      %5185 = vmatmul.mubr.f32.gmra.mrb[0].mxu0 %v4995
      %v5186 = vpop.f32.mrb[0].mxu0
      %v5187 = vadd.f32 0.0, %v5186
      %v5188 = vpop.f32.mrb[0].mxu0
      %5189 = vmatprep.mubr.f32.mxu0 0.0
      %5190 = vmatmul.mubr.f32.gmra.mrb[0].mxu0 %v4998
      %v5191 = vpop.f32.mrb[0].mxu0
      %v5192 = vadd.f32 0.0, %v5191
      %v5193 = vpop.f32.mrb[0].mxu0
      %5194 = vmatprep.mubr.f32.mxu0 0.0
      %5195 = vmatmul.mubr.f32.gmra.mrb[0].mxu0 %v5001
      %v5196 = vpop.f32.mrb[0].mxu0
      %v5197 = vadd.f32 0.0, %v5196
      %v5198 = vpop.f32.mrb[0].mxu0
      %5199 = vmatprep.mubr.f32.mxu0 0.0
      %5200 = vmatmul.mubr.f32.gmra.mrb[0].mxu0 %v5004
      %v5201 = vpop.f32.mrb[0].mxu0
      %v5202 = vadd.f32 0.0, %v5201
      %v5203 = vpop.f32.mrb[0].mxu0
      %5204 = vmatprep.mubr.f32.mxu0 0.0
      %5205 = vmatmul.mubr.f32.gmra.mrb[0].mxu0 %v5007
      %v5206 = vpop.f32.mrb[0].mxu0
      %v5207 = vadd.f32 0.0, %v5206
      %v5208 = vpop.f32.mrb[0].mxu0
      %5209 = vmatprep.mubr.f32.mxu0 0.0
      %5210 = vmatmul.mubr.f32.gmra.mrb[0].mxu0 %v5010
      %v5211 = vpop.f32.mrb[0].mxu0
      %v5212 = vadd.f32 0.0, %v5211
      %v5213 = vpop.f32.mrb[0].mxu0
      %5214 = vmatprep.mubr.f32.mxu0 0.0
      %5215 = vmatmul.mubr.f32.gmra.mrb[0].mxu0 %v5013
      %v5216 = vpop.f32.mrb[0].mxu0
      %v5217 = vadd.f32 0.0, %v5216
      %v5218 = vpop.f32.mrb[0].mxu0
      %5219 = vmatprep.mubr.f32.mxu0 0.0
      %5220 = vmatmul.mubr.f32.gmra.mrb[0].mxu0 %v5016
      %v5221 = vpop.f32.mrb[0].mxu0
      %v5222 = vadd.f32 0.0, %v5221
      %v5223 = vpop.f32.mrb[0].mxu0
      %5224 = vmatprep.mubr.f32.mxu0 0.0
      %5225 = vmatmul.mubr.f32.gmra.mrb[0].mxu0 %v5019
      %v5226 = vpop.f32.mrb[0].mxu0
      %v5227 = vadd.f32 0.0, %v5226
      %v5228 = vpop.f32.mrb[0].mxu0
      %5229 = vmatprep.mubr.f32.mxu0 0.0
      %5230 = vmatmul.mubr.f32.gmra.mrb[0].mxu0 %v5022
      %v5231 = vpop.f32.mrb[0].mxu0
      %v5232 = vadd.f32 0.0, %v5231
      %v5233 = vpop.f32.mrb[0].mxu0
      %5234 = vmatprep.mubr.f32.mxu0 0.0
      %5235 = vmatmul.mubr.f32.gmra.mrb[0].mxu0 %v5025
      %v5236 = vpop.f32.mrb[0].mxu0
      %v5237 = vadd.f32 0.0, %v5236
      %v5238 = vpop.f32.mrb[0].mxu0
      %5239 = vmatprep.mubr.f32.mxu0 0.0
      %5240 = vmatmul.mubr.f32.gmra.mrb[0].mxu0 %v5028
      %v5241 = vpop.f32.mrb[0].mxu0
      %v5242 = vadd.f32 0.0, %v5241
      %v5243 = vpop.f32.mrb[0].mxu0
      %5244 = vmatprep.mubr.f32.mxu0 0.0
      %5245 = vmatmul.mubr.f32.gmra.mrb[0].mxu0 %v5031
      %v5246 = vpop.f32.mrb[0].mxu0
      %v5247 = vadd.f32 0.0, %v5246
      %v5248 = vpop.f32.mrb[0].mxu0
      %5249 = vmatprep.mubr.f32.mxu0 0.0
      %5250 = vmatmul.mubr.f32.gmra.mrb[0].mxu0 %v5034
      %v5251 = vpop.f32.mrb[0].mxu0
      %v5252 = vadd.f32 0.0, %v5251
      %v5253 = vpop.f32.mrb[0].mxu0
      %5254 = vmatprep.mubr.f32.mxu0 0.0
      %5255 = vmatmul.mubr.f32.gmra.mrb[0].mxu0 %v5037
      %v5256 = vpop.f32.mrb[0].mxu0
      %v5257 = vadd.f32 0.0, %v5256
      %v5258 = vpop.f32.mrb[0].mxu0
      %5259 = vmatprep.mubr.f32.mxu0 0.0
      %5260 = vmatmul.mubr.f32.gmra.mrb[0].mxu0 %v5040
      %v5261 = vpop.f32.mrb[0].mxu0
      %v5262 = vadd.f32 0.0, %v5261
      %v5263 = vpop.f32.mrb[0].mxu0
      %5264 = vmatprep.mubr.f32.mxu0 0.0
      %5265 = vmatmul.mubr.f32.gmra.mrb[0].mxu0 %v5043
      %v5266 = vpop.f32.mrb[0].mxu0
      %v5267 = vadd.f32 0.0, %v5266
      %v5268 = vpop.f32.mrb[0].mxu0
      %5269 = vdwg.mxu0
      %v5270 = vmul.f32 %v5112, %v5112
      %v5271 = vmul.f32 %v5117, %v5117
      %v5272 = vmul.f32 %v5122, %v5122
      %v5273 = vmul.f32 %v5127, %v5127
      %v5274 = vmul.f32 %v5132, %v5132
      %v5275 = vmul.f32 %v5137, %v5137
      %v5276 = vmul.f32 %v5142, %v5142
      %v5277 = vmul.f32 %v5147, %v5147
      %v5278 = vmul.f32 %v5152, %v5152
      %v5279 = vmul.f32 %v5157, %v5157
      %v5280 = vmul.f32 %v5162, %v5162
      %v5281 = vmul.f32 %v5167, %v5167
      %v5282 = vmul.f32 %v5172, %v5172
      %v5283 = vmul.f32 %v5177, %v5177
      %v5284 = vmul.f32 %v5182, %v5182
      %v5285 = vmul.f32 %v5187, %v5187
      %v5286 = vmul.f32 %v5192, %v5192
      %v5287 = vmul.f32 %v5197, %v5197
      %v5288 = vmul.f32 %v5202, %v5202
      %v5289 = vmul.f32 %v5207, %v5207
      %v5290 = vmul.f32 %v5212, %v5212
      %v5291 = vmul.f32 %v5217, %v5217
      %v5292 = vmul.f32 %v5222, %v5222
      %v5293 = vmul.f32 %v5227, %v5227
      %v5294 = vmul.f32 %v5232, %v5232
      %v5295 = vmul.f32 %v5237, %v5237
      %v5296 = vmul.f32 %v5242, %v5242
      %v5297 = vmul.f32 %v5247, %v5247
      %v5298 = vmul.f32 %v5252, %v5252
      %v5299 = vmul.f32 %v5257, %v5257
      %v5300 = vmul.f32 %v5262, %v5262
      %v5301 = vmul.f32 %v5267, %v5267
      %v5302 = vld [vmem:[%s1 + $0x60] sm:$0xff]
      %v5303 = vld [vmem:[%s1 + $0x68] sm:$0xff]
      %v5304 = vld [vmem:[%s1 + $0x70] sm:$0xff]
      %v5305 = vld [vmem:[%s1 + $0x78] sm:$0xff]
      %5306 = vrot.lane.b32.xlu0 %v184, 48
      %v5307 = vpop.permute.xlu0 %5306
      %vm5309 = vcmask 261120
      %v5311 = vsel %vm5309, %v5270, 0
      %v5314 = vsel %vm5309, %v5271, 0
      %v5317 = vsel %vm5309, %v5272, 0
      %v5320 = vsel %vm5309, %v5273, 0
      %v5323 = vsel %vm5309, %v5274, 0
      %v5326 = vsel %vm5309, %v5275, 0
      %v5329 = vsel %vm5309, %v5276, 0
      %v5332 = vsel %vm5309, %v5277, 0
      %v5335 = vsel %vm5309, %v5278, 0
      %v5338 = vsel %vm5309, %v5279, 0
      %v5341 = vsel %vm5309, %v5280, 0
      %v5344 = vsel %vm5309, %v5281, 0
      %v5347 = vsel %vm5309, %v5282, 0
      %v5350 = vsel %vm5309, %v5283, 0
      %v5353 = vsel %vm5309, %v5284, 0
      %v5356 = vsel %vm5309, %v5285, 0
      %v5359 = vsel %vm5309, %v5286, 0
      %v5362 = vsel %vm5309, %v5287, 0
      %v5365 = vsel %vm5309, %v5288, 0
      %v5368 = vsel %vm5309, %v5289, 0
      %v5371 = vsel %vm5309, %v5290, 0
      %v5374 = vsel %vm5309, %v5291, 0
      %v5377 = vsel %vm5309, %v5292, 0
      %v5380 = vsel %vm5309, %v5293, 0
      %v5383 = vsel %vm5309, %v5294, 0
      %v5386 = vsel %vm5309, %v5295, 0
      %v5389 = vsel %vm5309, %v5296, 0
      %v5392 = vsel %vm5309, %v5297, 0
      %v5395 = vsel %vm5309, %v5298, 0
      %v5398 = vsel %vm5309, %v5299, 0
      %v5401 = vsel %vm5309, %v5300, 0
      %v5404 = vsel %vm5309, %v5301, 0
      %5406 = vmatprep.subr.mxu0 0.0
      %5407 = vmatpush1.msra.mxu0 %v5302
      %5408 = vmatprep.subr.mxu0 0.0
      %5409 = vmatpush1.msra.mxu0 %v5303
      %5410 = vmatprep.subr.mxu0 0.0
      %5411 = vmatpush1.msra.mxu0 %v5304
      %5412 = vmatprep.subr.mxu0 0.0
      %5413 = vmatpush1.msra.mxu0 %v5305
      %5414 = vmatprep.subr.mxu0 0.0
      %5415 = vmatpush1.msra.mxu0 0.0
      %5416 = vmatprep.subr.mxu0 0.0
      %5417 = vmatpush1.msra.mxu0 0.0
      %5418 = vmatprep.subr.mxu0 0.0
      %5419 = vmatpush1.msra.mxu0 0.0
      %5420 = vmatprep.subr.mxu0 0.0
      %5421 = vmatpush1.msra.mxu0 0.0
      %5422 = vmatprep.subr.mxu0 0.0
      %5423 = vmatpush1.msra.mxu0 0.0
      %5424 = vmatprep.subr.mxu0 0.0
      %5425 = vmatpush1.msra.mxu0 0.0
      %5426 = vmatprep.subr.mxu0 0.0
      %5427 = vmatpush1.msra.mxu0 0.0
      %5428 = vmatprep.subr.mxu0 0.0
      %5429 = vmatpush1.msra.mxu0 0.0
      %5430 = vmatprep.subr.mxu0 0.0
      %5431 = vmatpush1.msra.mxu0 0.0
      %5432 = vmatprep.subr.mxu0 0.0
      %5433 = vmatpush1.msra.mxu0 0.0
      %5434 = vmatprep.subr.mxu0 0.0
      %5435 = vmatpush1.msra.mxu0 0.0
      %5436 = vmatprep.subr.mxu0 0.0
      %5437 = vmatpush1.msra.mxu0 0.0
      %5438 = vmatprep.subr.mxu0 0.0
      %5439 = vmatpush1.msra.mxu0 0.0
      %5440 = vmatprep.subr.mxu0 0.0
      %5441 = vmatpush1.msra.mxu0 0.0
      %5442 = vmatprep.subr.mxu0 0.0
      %5443 = vmatpush1.msra.mxu0 0.0
      %5444 = vmatprep.subr.mxu0 0.0
      %5445 = vmatpush1.msra.mxu0 0.0
      %5446 = vmatprep.subr.mxu0 0.0
      %5447 = vmatpush1.msra.mxu0 0.0
      %5448 = vmatprep.subr.mxu0 0.0
      %5449 = vmatpush1.msra.mxu0 0.0
      %5450 = vmatprep.subr.mxu0 0.0
      %5451 = vmatpush1.msra.mxu0 0.0
      %5452 = vmatprep.subr.mxu0 0.0
      %5453 = vmatpush1.msra.mxu0 0.0
      %5454 = vmatprep.subr.mxu0 0.0
      %5455 = vmatpush1.msra.mxu0 0.0
      %5456 = vmatprep.subr.mxu0 0.0
      %5457 = vmatpush1.msra.mxu0 0.0
      %5458 = vmatprep.subr.mxu0 0.0
      %5459 = vmatpush1.msra.mxu0 0.0
      %5460 = vmatprep.subr.mxu0 0.0
      %5461 = vmatpush1.msra.mxu0 0.0
      %5462 = vmatprep.subr.mxu0 0.0
      %5463 = vmatpush1.msra.mxu0 0.0
      %5464 = vmatprep.subr.mxu0 0.0
      %5465 = vmatpush1.msra.mxu0 0.0
      %5466 = vmatprep.subr.mxu0 0.0
      %5467 = vmatpush1.msra.mxu0 0.0
      %5468 = vmatprep.subr.mxu0 0.0
      %5469 = vmatpush1.msra.mxu0 0.0
      %5470 = vmatprep.mubr.f32.mxu0 0.0
      %5471 = vmatmul.mubr.f32.gmra.mrb[0].mxu0 %v5311
      %v5472 = vpop.f32.mrb[0].mxu0
      %v5473 = vadd.f32 %v5307, %v5472
      %v5474 = vpop.f32.mrb[0].mxu0
      %5475 = vmatprep.mubr.f32.mxu0 0.0
      %5476 = vmatmul.mubr.f32.gmra.mrb[0].mxu0 %v5314
      %v5477 = vpop.f32.mrb[0].mxu0
      %v5478 = vadd.f32 %v5307, %v5477
      %v5479 = vpop.f32.mrb[0].mxu0
      %5480 = vmatprep.mubr.f32.mxu0 0.0
      %5481 = vmatmul.mubr.f32.gmra.mrb[0].mxu0 %v5317
      %v5482 = vpop.f32.mrb[0].mxu0
      %v5483 = vadd.f32 %v5307, %v5482
      %v5484 = vpop.f32.mrb[0].mxu0
      %5485 = vmatprep.mubr.f32.mxu0 0.0
      %5486 = vmatmul.mubr.f32.gmra.mrb[0].mxu0 %v5320
      %v5487 = vpop.f32.mrb[0].mxu0
      %v5488 = vadd.f32 %v5307, %v5487
      %v5489 = vpop.f32.mrb[0].mxu0
      %5490 = vmatprep.mubr.f32.mxu0 0.0
      %5491 = vmatmul.mubr.f32.gmra.mrb[0].mxu0 %v5323
      %v5492 = vpop.f32.mrb[0].mxu0
      %v5493 = vadd.f32 %v5307, %v5492
      %v5494 = vpop.f32.mrb[0].mxu0
      %5495 = vmatprep.mubr.f32.mxu0 0.0
      %5496 = vmatmul.mubr.f32.gmra.mrb[0].mxu0 %v5326
      %v5497 = vpop.f32.mrb[0].mxu0
      %v5498 = vadd.f32 %v5307, %v5497
      %v5499 = vpop.f32.mrb[0].mxu0
      %5500 = vmatprep.mubr.f32.mxu0 0.0
      %5501 = vmatmul.mubr.f32.gmra.mrb[0].mxu0 %v5329
      %v5502 = vpop.f32.mrb[0].mxu0
      %v5503 = vadd.f32 %v5307, %v5502
      %v5504 = vpop.f32.mrb[0].mxu0
      %5505 = vmatprep.mubr.f32.mxu0 0.0
      %5506 = vmatmul.mubr.f32.gmra.mrb[0].mxu0 %v5332
      %v5507 = vpop.f32.mrb[0].mxu0
      %v5508 = vadd.f32 %v5307, %v5507
      %v5509 = vpop.f32.mrb[0].mxu0
      %5510 = vmatprep.mubr.f32.mxu0 0.0
      %5511 = vmatmul.mubr.f32.gmra.mrb[0].mxu0 %v5335
      %v5512 = vpop.f32.mrb[0].mxu0
      %v5513 = vadd.f32 %v5307, %v5512
      %v5514 = vpop.f32.mrb[0].mxu0
      %5515 = vmatprep.mubr.f32.mxu0 0.0
      %5516 = vmatmul.mubr.f32.gmra.mrb[0].mxu0 %v5338
      %v5517 = vpop.f32.mrb[0].mxu0
      %v5518 = vadd.f32 %v5307, %v5517
      %v5519 = vpop.f32.mrb[0].mxu0
      %5520 = vmatprep.mubr.f32.mxu0 0.0
      %5521 = vmatmul.mubr.f32.gmra.mrb[0].mxu0 %v5341
      %v5522 = vpop.f32.mrb[0].mxu0
      %v5523 = vadd.f32 %v5307, %v5522
      %v5524 = vpop.f32.mrb[0].mxu0
      %5525 = vmatprep.mubr.f32.mxu0 0.0
      %5526 = vmatmul.mubr.f32.gmra.mrb[0].mxu0 %v5344
      %v5527 = vpop.f32.mrb[0].mxu0
      %v5528 = vadd.f32 %v5307, %v5527
      %v5529 = vpop.f32.mrb[0].mxu0
      %5530 = vmatprep.mubr.f32.mxu0 0.0
      %5531 = vmatmul.mubr.f32.gmra.mrb[0].mxu0 %v5347
      %v5532 = vpop.f32.mrb[0].mxu0
      %v5533 = vadd.f32 %v5307, %v5532
      %v5534 = vpop.f32.mrb[0].mxu0
      %5535 = vmatprep.mubr.f32.mxu0 0.0
      %5536 = vmatmul.mubr.f32.gmra.mrb[0].mxu0 %v5350
      %v5537 = vpop.f32.mrb[0].mxu0
      %v5538 = vadd.f32 %v5307, %v5537
      %v5539 = vpop.f32.mrb[0].mxu0
      %5540 = vmatprep.mubr.f32.mxu0 0.0
      %5541 = vmatmul.mubr.f32.gmra.mrb[0].mxu0 %v5353
      %v5542 = vpop.f32.mrb[0].mxu0
      %v5543 = vadd.f32 %v5307, %v5542
      %v5544 = vpop.f32.mrb[0].mxu0
      %5545 = vmatprep.mubr.f32.mxu0 0.0
      %5546 = vmatmul.mubr.f32.gmra.mrb[0].mxu0 %v5356
      %v5547 = vpop.f32.mrb[0].mxu0
      %v5548 = vadd.f32 %v5307, %v5547
      %v5549 = vpop.f32.mrb[0].mxu0
      %5550 = vmatprep.mubr.f32.mxu0 0.0
      %5551 = vmatmul.mubr.f32.gmra.mrb[0].mxu0 %v5359
      %v5552 = vpop.f32.mrb[0].mxu0
      %v5553 = vadd.f32 %v5307, %v5552
      %v5554 = vpop.f32.mrb[0].mxu0
      %5555 = vmatprep.mubr.f32.mxu0 0.0
      %5556 = vmatmul.mubr.f32.gmra.mrb[0].mxu0 %v5362
      %v5557 = vpop.f32.mrb[0].mxu0
      %v5558 = vadd.f32 %v5307, %v5557
      %v5559 = vpop.f32.mrb[0].mxu0
      %5560 = vmatprep.mubr.f32.mxu0 0.0
      %5561 = vmatmul.mubr.f32.gmra.mrb[0].mxu0 %v5365
      %v5562 = vpop.f32.mrb[0].mxu0
      %v5563 = vadd.f32 %v5307, %v5562
      %v5564 = vpop.f32.mrb[0].mxu0
      %5565 = vmatprep.mubr.f32.mxu0 0.0
      %5566 = vmatmul.mubr.f32.gmra.mrb[0].mxu0 %v5368
      %v5567 = vpop.f32.mrb[0].mxu0
      %v5568 = vadd.f32 %v5307, %v5567
      %v5569 = vpop.f32.mrb[0].mxu0
      %5570 = vmatprep.mubr.f32.mxu0 0.0
      %5571 = vmatmul.mubr.f32.gmra.mrb[0].mxu0 %v5371
      %v5572 = vpop.f32.mrb[0].mxu0
      %v5573 = vadd.f32 %v5307, %v5572
      %v5574 = vpop.f32.mrb[0].mxu0
      %5575 = vmatprep.mubr.f32.mxu0 0.0
      %5576 = vmatmul.mubr.f32.gmra.mrb[0].mxu0 %v5374
      %v5577 = vpop.f32.mrb[0].mxu0
      %v5578 = vadd.f32 %v5307, %v5577
      %v5579 = vpop.f32.mrb[0].mxu0
      %5580 = vmatprep.mubr.f32.mxu0 0.0
      %5581 = vmatmul.mubr.f32.gmra.mrb[0].mxu0 %v5377
      %v5582 = vpop.f32.mrb[0].mxu0
      %v5583 = vadd.f32 %v5307, %v5582
      %v5584 = vpop.f32.mrb[0].mxu0
      %5585 = vmatprep.mubr.f32.mxu0 0.0
      %5586 = vmatmul.mubr.f32.gmra.mrb[0].mxu0 %v5380
      %v5587 = vpop.f32.mrb[0].mxu0
      %v5588 = vadd.f32 %v5307, %v5587
      %v5589 = vpop.f32.mrb[0].mxu0
      %5590 = vmatprep.mubr.f32.mxu0 0.0
      %5591 = vmatmul.mubr.f32.gmra.mrb[0].mxu0 %v5383
      %v5592 = vpop.f32.mrb[0].mxu0
      %v5593 = vadd.f32 %v5307, %v5592
      %v5594 = vpop.f32.mrb[0].mxu0
      %5595 = vmatprep.mubr.f32.mxu0 0.0
      %5596 = vmatmul.mubr.f32.gmra.mrb[0].mxu0 %v5386
      %v5597 = vpop.f32.mrb[0].mxu0
      %v5598 = vadd.f32 %v5307, %v5597
      %v5599 = vpop.f32.mrb[0].mxu0
      %5600 = vmatprep.mubr.f32.mxu0 0.0
      %5601 = vmatmul.mubr.f32.gmra.mrb[0].mxu0 %v5389
      %v5602 = vpop.f32.mrb[0].mxu0
      %v5603 = vadd.f32 %v5307, %v5602
      %v5604 = vpop.f32.mrb[0].mxu0
      %5605 = vmatprep.mubr.f32.mxu0 0.0
      %5606 = vmatmul.mubr.f32.gmra.mrb[0].mxu0 %v5392
      %v5607 = vpop.f32.mrb[0].mxu0
      %v5608 = vadd.f32 %v5307, %v5607
      %v5609 = vpop.f32.mrb[0].mxu0
      %5610 = vmatprep.mubr.f32.mxu0 0.0
      %5611 = vmatmul.mubr.f32.gmra.mrb[0].mxu0 %v5395
      %v5612 = vpop.f32.mrb[0].mxu0
      %v5613 = vadd.f32 %v5307, %v5612
      %v5614 = vpop.f32.mrb[0].mxu0
      %5615 = vmatprep.mubr.f32.mxu0 0.0
      %5616 = vmatmul.mubr.f32.gmra.mrb[0].mxu0 %v5398
      %v5617 = vpop.f32.mrb[0].mxu0
      %v5618 = vadd.f32 %v5307, %v5617
      %v5619 = vpop.f32.mrb[0].mxu0
      %5620 = vmatprep.mubr.f32.mxu0 0.0
      %5621 = vmatmul.mubr.f32.gmra.mrb[0].mxu0 %v5401
      %v5622 = vpop.f32.mrb[0].mxu0
      %v5623 = vadd.f32 %v5307, %v5622
      %v5624 = vpop.f32.mrb[0].mxu0
      %5625 = vmatprep.mubr.f32.mxu0 0.0
      %5626 = vmatmul.mubr.f32.gmra.mrb[0].mxu0 %v5404
      %v5627 = vpop.f32.mrb[0].mxu0
      %v5628 = vadd.f32 %v5307, %v5627
      %v5629 = vpop.f32.mrb[0].mxu0
      %5630 = vdwg.mxu0
      %v5631 = vmax.f32 %v5473, 0.0
      %v5632 = vmax.f32 %v5478, 0.0
      %v5633 = vmax.f32 %v5483, 0.0
      %v5634 = vmax.f32 %v5488, 0.0
      %v5635 = vmax.f32 %v5493, 0.0
      %v5636 = vmax.f32 %v5498, 0.0
      %v5637 = vmax.f32 %v5503, 0.0
      %v5638 = vmax.f32 %v5508, 0.0
      %v5639 = vmax.f32 %v5513, 0.0
      %v5640 = vmax.f32 %v5518, 0.0
      %v5641 = vmax.f32 %v5523, 0.0
      %v5642 = vmax.f32 %v5528, 0.0
      %v5643 = vmax.f32 %v5533, 0.0
      %v5644 = vmax.f32 %v5538, 0.0
      %v5645 = vmax.f32 %v5543, 0.0
      %v5646 = vmax.f32 %v5548, 0.0
      %v5647 = vmax.f32 %v5553, 0.0
      %v5648 = vmax.f32 %v5558, 0.0
      %v5649 = vmax.f32 %v5563, 0.0
      %v5650 = vmax.f32 %v5568, 0.0
      %v5651 = vmax.f32 %v5573, 0.0
      %v5652 = vmax.f32 %v5578, 0.0
      %v5653 = vmax.f32 %v5583, 0.0
      %v5654 = vmax.f32 %v5588, 0.0
      %v5655 = vmax.f32 %v5593, 0.0
      %v5656 = vmax.f32 %v5598, 0.0
      %v5657 = vmax.f32 %v5603, 0.0
      %v5658 = vmax.f32 %v5608, 0.0
      %v5659 = vmax.f32 %v5613, 0.0
      %v5660 = vmax.f32 %v5618, 0.0
      %v5661 = vmax.f32 %v5623, 0.0
      %v5662 = vmax.f32 %v5628, 0.0
      %v5663 = vld [vmem:[%s1 + $0x80] sm:$0xff]
      %v5664 = vld [vmem:[%s1 + $0x88] sm:$0xff]
      %v5665 = vld [vmem:[%s1 + $0x90] sm:$0xff]
      %v5666 = vld [vmem:[%s1 + $0x98] sm:$0xff]
      %v5667 = vld [vmem:[%s1 + $0x49] sm:$0x1]
      %v5668 = vlaneseq
      %v5669 = vshrl.u32 %v5668, 7
      %v5670 = vsub.s32 0, %v5669
      %v5671 = vrot.slane %v5667, %v5670
      %v5673 = vsel %vm5309, %v5631, 0
      %v5676 = vsel %vm5309, %v5632, 0
      %v5679 = vsel %vm5309, %v5633, 0
      %v5682 = vsel %vm5309, %v5634, 0
      %v5685 = vsel %vm5309, %v5635, 0
      %v5688 = vsel %vm5309, %v5636, 0
      %v5691 = vsel %vm5309, %v5637, 0
      %v5694 = vsel %vm5309, %v5638, 0
      %v5697 = vsel %vm5309, %v5639, 0
      %v5700 = vsel %vm5309, %v5640, 0
      %v5703 = vsel %vm5309, %v5641, 0
      %v5706 = vsel %vm5309, %v5642, 0
      %v5709 = vsel %vm5309, %v5643, 0
      %v5712 = vsel %vm5309, %v5644, 0
      %v5715 = vsel %vm5309, %v5645, 0
      %v5718 = vsel %vm5309, %v5646, 0
      %v5721 = vsel %vm5309, %v5647, 0
      %v5724 = vsel %vm5309, %v5648, 0
      %v5727 = vsel %vm5309, %v5649, 0
      %v5730 = vsel %vm5309, %v5650, 0
      %v5733 = vsel %vm5309, %v5651, 0
      %v5736 = vsel %vm5309, %v5652, 0
      %v5739 = vsel %vm5309, %v5653, 0
      %v5742 = vsel %vm5309, %v5654, 0
      %v5745 = vsel %vm5309, %v5655, 0
      %v5748 = vsel %vm5309, %v5656, 0
      %v5751 = vsel %vm5309, %v5657, 0
      %v5754 = vsel %vm5309, %v5658, 0
      %v5757 = vsel %vm5309, %v5659, 0
      %v5760 = vsel %vm5309, %v5660, 0
      %v5763 = vsel %vm5309, %v5661, 0
      %v5766 = vsel %vm5309, %v5662, 0
      %5768 = vmatprep.subr.mxu0 0.0
      %5769 = vmatpush1.msra.mxu0 %v5663
      %5770 = vmatprep.subr.mxu0 0.0
      %5771 = vmatpush1.msra.mxu0 %v5664
      %5772 = vmatprep.subr.mxu0 0.0
      %5773 = vmatpush1.msra.mxu0 %v5665
      %5774 = vmatprep.subr.mxu0 0.0
      %5775 = vmatpush1.msra.mxu0 %v5666
      %5776 = vmatprep.subr.mxu0 0.0
      %5777 = vmatpush1.msra.mxu0 0.0
      %5778 = vmatprep.subr.mxu0 0.0
      %5779 = vmatpush1.msra.mxu0 0.0
      %5780 = vmatprep.subr.mxu0 0.0
      %5781 = vmatpush1.msra.mxu0 0.0
      %5782 = vmatprep.subr.mxu0 0.0
      %5783 = vmatpush1.msra.mxu0 0.0
      %5784 = vmatprep.subr.mxu0 0.0
      %5785 = vmatpush1.msra.mxu0 0.0
      %5786 = vmatprep.subr.mxu0 0.0
      %5787 = vmatpush1.msra.mxu0 0.0
      %5788 = vmatprep.subr.mxu0 0.0
      %5789 = vmatpush1.msra.mxu0 0.0
      %5790 = vmatprep.subr.mxu0 0.0
      %5791 = vmatpush1.msra.mxu0 0.0
      %5792 = vmatprep.subr.mxu0 0.0
      %5793 = vmatpush1.msra.mxu0 0.0
      %5794 = vmatprep.subr.mxu0 0.0
      %5795 = vmatpush1.msra.mxu0 0.0
      %5796 = vmatprep.subr.mxu0 0.0
      %5797 = vmatpush1.msra.mxu0 0.0
      %5798 = vmatprep.subr.mxu0 0.0
      %5799 = vmatpush1.msra.mxu0 0.0
      %5800 = vmatprep.subr.mxu0 0.0
      %5801 = vmatpush1.msra.mxu0 0.0
      %5802 = vmatprep.subr.mxu0 0.0
      %5803 = vmatpush1.msra.mxu0 0.0
      %5804 = vmatprep.subr.mxu0 0.0
      %5805 = vmatpush1.msra.mxu0 0.0
      %5806 = vmatprep.subr.mxu0 0.0
      %5807 = vmatpush1.msra.mxu0 0.0
      %5808 = vmatprep.subr.mxu0 0.0
      %5809 = vmatpush1.msra.mxu0 0.0
      %5810 = vmatprep.subr.mxu0 0.0
      %5811 = vmatpush1.msra.mxu0 0.0
      %5812 = vmatprep.subr.mxu0 0.0
      %5813 = vmatpush1.msra.mxu0 0.0
      %5814 = vmatprep.subr.mxu0 0.0
      %5815 = vmatpush1.msra.mxu0 0.0
      %5816 = vmatprep.subr.mxu0 0.0
      %5817 = vmatpush1.msra.mxu0 0.0
      %5818 = vmatprep.subr.mxu0 0.0
      %5819 = vmatpush1.msra.mxu0 0.0
      %5820 = vmatprep.subr.mxu0 0.0
      %5821 = vmatpush1.msra.mxu0 0.0
      %5822 = vmatprep.subr.mxu0 0.0
      %5823 = vmatpush1.msra.mxu0 0.0
      %5824 = vmatprep.subr.mxu0 0.0
      %5825 = vmatpush1.msra.mxu0 0.0
      %5826 = vmatprep.subr.mxu0 0.0
      %5827 = vmatpush1.msra.mxu0 0.0
      %5828 = vmatprep.subr.mxu0 0.0
      %5829 = vmatpush1.msra.mxu0 0.0
      %5830 = vmatprep.subr.mxu0 0.0
      %5831 = vmatpush1.msra.mxu0 0.0
      %5832 = vmatprep.mubr.f32.mxu0 0.0
      %5833 = vmatmul.mubr.f32.gmra.mrb[0].mxu0 %v5673
      %v5834 = vpop.f32.mrb[0].mxu0
      %v5835 = vadd.f32 %v5671, %v5834
      %v5836 = vpop.f32.mrb[0].mxu0
      %5837 = vmatprep.mubr.f32.mxu0 0.0
      %5838 = vmatmul.mubr.f32.gmra.mrb[0].mxu0 %v5676
      %v5839 = vpop.f32.mrb[0].mxu0
      %v5840 = vadd.f32 %v5671, %v5839
      %v5841 = vpop.f32.mrb[0].mxu0
      %5842 = vmatprep.mubr.f32.mxu0 0.0
      %5843 = vmatmul.mubr.f32.gmra.mrb[0].mxu0 %v5679
      %v5844 = vpop.f32.mrb[0].mxu0
      %v5845 = vadd.f32 %v5671, %v5844
      %v5846 = vpop.f32.mrb[0].mxu0
      %5847 = vmatprep.mubr.f32.mxu0 0.0
      %5848 = vmatmul.mubr.f32.gmra.mrb[0].mxu0 %v5682
      %v5849 = vpop.f32.mrb[0].mxu0
      %v5850 = vadd.f32 %v5671, %v5849
      %v5851 = vpop.f32.mrb[0].mxu0
      %5852 = vmatprep.mubr.f32.mxu0 0.0
      %5853 = vmatmul.mubr.f32.gmra.mrb[0].mxu0 %v5685
      %v5854 = vpop.f32.mrb[0].mxu0
      %v5855 = vadd.f32 %v5671, %v5854
      %v5856 = vpop.f32.mrb[0].mxu0
      %5857 = vmatprep.mubr.f32.mxu0 0.0
      %5858 = vmatmul.mubr.f32.gmra.mrb[0].mxu0 %v5688
      %v5859 = vpop.f32.mrb[0].mxu0
      %v5860 = vadd.f32 %v5671, %v5859
      %v5861 = vpop.f32.mrb[0].mxu0
      %5862 = vmatprep.mubr.f32.mxu0 0.0
      %5863 = vmatmul.mubr.f32.gmra.mrb[0].mxu0 %v5691
      %v5864 = vpop.f32.mrb[0].mxu0
      %v5865 = vadd.f32 %v5671, %v5864
      %v5866 = vpop.f32.mrb[0].mxu0
      %5867 = vmatprep.mubr.f32.mxu0 0.0
      %5868 = vmatmul.mubr.f32.gmra.mrb[0].mxu0 %v5694
      %v5869 = vpop.f32.mrb[0].mxu0
      %v5870 = vadd.f32 %v5671, %v5869
      %v5871 = vpop.f32.mrb[0].mxu0
      %5872 = vmatprep.mubr.f32.mxu0 0.0
      %5873 = vmatmul.mubr.f32.gmra.mrb[0].mxu0 %v5697
      %v5874 = vpop.f32.mrb[0].mxu0
      %v5875 = vadd.f32 %v5671, %v5874
      %v5876 = vpop.f32.mrb[0].mxu0
      %5877 = vmatprep.mubr.f32.mxu0 0.0
      %5878 = vmatmul.mubr.f32.gmra.mrb[0].mxu0 %v5700
      %v5879 = vpop.f32.mrb[0].mxu0
      %v5880 = vadd.f32 %v5671, %v5879
      %v5881 = vpop.f32.mrb[0].mxu0
      %5882 = vmatprep.mubr.f32.mxu0 0.0
      %5883 = vmatmul.mubr.f32.gmra.mrb[0].mxu0 %v5703
      %v5884 = vpop.f32.mrb[0].mxu0
      %v5885 = vadd.f32 %v5671, %v5884
      %v5886 = vpop.f32.mrb[0].mxu0
      %5887 = vmatprep.mubr.f32.mxu0 0.0
      %5888 = vmatmul.mubr.f32.gmra.mrb[0].mxu0 %v5706
      %v5889 = vpop.f32.mrb[0].mxu0
      %v5890 = vadd.f32 %v5671, %v5889
      %v5891 = vpop.f32.mrb[0].mxu0
      %5892 = vmatprep.mubr.f32.mxu0 0.0
      %5893 = vmatmul.mubr.f32.gmra.mrb[0].mxu0 %v5709
      %v5894 = vpop.f32.mrb[0].mxu0
      %v5895 = vadd.f32 %v5671, %v5894
      %v5896 = vpop.f32.mrb[0].mxu0
      %5897 = vmatprep.mubr.f32.mxu0 0.0
      %5898 = vmatmul.mubr.f32.gmra.mrb[0].mxu0 %v5712
      %v5899 = vpop.f32.mrb[0].mxu0
      %v5900 = vadd.f32 %v5671, %v5899
      %v5901 = vpop.f32.mrb[0].mxu0
      %5902 = vmatprep.mubr.f32.mxu0 0.0
      %5903 = vmatmul.mubr.f32.gmra.mrb[0].mxu0 %v5715
      %v5904 = vpop.f32.mrb[0].mxu0
      %v5905 = vadd.f32 %v5671, %v5904
      %v5906 = vpop.f32.mrb[0].mxu0
      %5907 = vmatprep.mubr.f32.mxu0 0.0
      %5908 = vmatmul.mubr.f32.gmra.mrb[0].mxu0 %v5718
      %v5909 = vpop.f32.mrb[0].mxu0
      %v5910 = vadd.f32 %v5671, %v5909
      %v5911 = vpop.f32.mrb[0].mxu0
      %5912 = vmatprep.mubr.f32.mxu0 0.0
      %5913 = vmatmul.mubr.f32.gmra.mrb[0].mxu0 %v5721
      %v5914 = vpop.f32.mrb[0].mxu0
      %v5915 = vadd.f32 %v5671, %v5914
      %v5916 = vpop.f32.mrb[0].mxu0
      %5917 = vmatprep.mubr.f32.mxu0 0.0
      %5918 = vmatmul.mubr.f32.gmra.mrb[0].mxu0 %v5724
      %v5919 = vpop.f32.mrb[0].mxu0
      %v5920 = vadd.f32 %v5671, %v5919
      %v5921 = vpop.f32.mrb[0].mxu0
      %5922 = vmatprep.mubr.f32.mxu0 0.0
      %5923 = vmatmul.mubr.f32.gmra.mrb[0].mxu0 %v5727
      %v5924 = vpop.f32.mrb[0].mxu0
      %v5925 = vadd.f32 %v5671, %v5924
      %v5926 = vpop.f32.mrb[0].mxu0
      %5927 = vmatprep.mubr.f32.mxu0 0.0
      %5928 = vmatmul.mubr.f32.gmra.mrb[0].mxu0 %v5730
      %v5929 = vpop.f32.mrb[0].mxu0
      %v5930 = vadd.f32 %v5671, %v5929
      %v5931 = vpop.f32.mrb[0].mxu0
      %5932 = vmatprep.mubr.f32.mxu0 0.0
      %5933 = vmatmul.mubr.f32.gmra.mrb[0].mxu0 %v5733
      %v5934 = vpop.f32.mrb[0].mxu0
      %v5935 = vadd.f32 %v5671, %v5934
      %v5936 = vpop.f32.mrb[0].mxu0
      %5937 = vmatprep.mubr.f32.mxu0 0.0
      %5938 = vmatmul.mubr.f32.gmra.mrb[0].mxu0 %v5736
      %v5939 = vpop.f32.mrb[0].mxu0
      %v5940 = vadd.f32 %v5671, %v5939
      %v5941 = vpop.f32.mrb[0].mxu0
      %5942 = vmatprep.mubr.f32.mxu0 0.0
      %5943 = vmatmul.mubr.f32.gmra.mrb[0].mxu0 %v5739
      %v5944 = vpop.f32.mrb[0].mxu0
      %v5945 = vadd.f32 %v5671, %v5944
      %v5946 = vpop.f32.mrb[0].mxu0
      %5947 = vmatprep.mubr.f32.mxu0 0.0
      %5948 = vmatmul.mubr.f32.gmra.mrb[0].mxu0 %v5742
      %v5949 = vpop.f32.mrb[0].mxu0
      %v5950 = vadd.f32 %v5671, %v5949
      %v5951 = vpop.f32.mrb[0].mxu0
      %5952 = vmatprep.mubr.f32.mxu0 0.0
      %5953 = vmatmul.mubr.f32.gmra.mrb[0].mxu0 %v5745
      %v5954 = vpop.f32.mrb[0].mxu0
      %v5955 = vadd.f32 %v5671, %v5954
      %v5956 = vpop.f32.mrb[0].mxu0
      %5957 = vmatprep.mubr.f32.mxu0 0.0
      %5958 = vmatmul.mubr.f32.gmra.mrb[0].mxu0 %v5748
      %v5959 = vpop.f32.mrb[0].mxu0
      %v5960 = vadd.f32 %v5671, %v5959
      %v5961 = vpop.f32.mrb[0].mxu0
      %5962 = vmatprep.mubr.f32.mxu0 0.0
      %5963 = vmatmul.mubr.f32.gmra.mrb[0].mxu0 %v5751
      %v5964 = vpop.f32.mrb[0].mxu0
      %v5965 = vadd.f32 %v5671, %v5964
      %v5966 = vpop.f32.mrb[0].mxu0
      %5967 = vmatprep.mubr.f32.mxu0 0.0
      %5968 = vmatmul.mubr.f32.gmra.mrb[0].mxu0 %v5754
      %v5969 = vpop.f32.mrb[0].mxu0
      %v5970 = vadd.f32 %v5671, %v5969
      %v5971 = vpop.f32.mrb[0].mxu0
      %5972 = vmatprep.mubr.f32.mxu0 0.0
      %5973 = vmatmul.mubr.f32.gmra.mrb[0].mxu0 %v5757
      %v5974 = vpop.f32.mrb[0].mxu0
      %v5975 = vadd.f32 %v5671, %v5974
      %v5976 = vpop.f32.mrb[0].mxu0
      %5977 = vmatprep.mubr.f32.mxu0 0.0
      %5978 = vmatmul.mubr.f32.gmra.mrb[0].mxu0 %v5760
      %v5979 = vpop.f32.mrb[0].mxu0
      %v5980 = vadd.f32 %v5671, %v5979
      %v5981 = vpop.f32.mrb[0].mxu0
      %5982 = vmatprep.mubr.f32.mxu0 0.0
      %5983 = vmatmul.mubr.f32.gmra.mrb[0].mxu0 %v5763
      %v5984 = vpop.f32.mrb[0].mxu0
      %v5985 = vadd.f32 %v5671, %v5984
      %v5986 = vpop.f32.mrb[0].mxu0
      %5987 = vmatprep.mubr.f32.mxu0 0.0
      %5988 = vmatmul.mubr.f32.gmra.mrb[0].mxu0 %v5766
      %v5989 = vpop.f32.mrb[0].mxu0
      %v5990 = vadd.f32 %v5671, %v5989
      %v5991 = vpop.f32.mrb[0].mxu0
      %5992 = vdwg.mxu0
      %5993 = vst [vmem:[%s145] sm:$0xff] %v5835
      %5994 = vst [vmem:[%s145 + $0x8] sm:$0xff] %v5840
      %5995 = vst [vmem:[%s145 + $0x10] sm:$0xff] %v5845
      %5996 = vst [vmem:[%s145 + $0x18] sm:$0xff] %v5850
      %5997 = vst [vmem:[%s145 + $0x20] sm:$0xff] %v5855
      %5998 = vst [vmem:[%s145 + $0x28] sm:$0xff] %v5860
      %5999 = vst [vmem:[%s145 + $0x30] sm:$0xff] %v5865
      %6000 = vst [vmem:[%s145 + $0x38] sm:$0xff] %v5870
      %6001 = vst [vmem:[%s145 + $0x40] sm:$0xff] %v5875
      %6002 = vst [vmem:[%s145 + $0x48] sm:$0xff] %v5880
      %6003 = vst [vmem:[%s145 + $0x50] sm:$0xff] %v5885
      %6004 = vst [vmem:[%s145 + $0x58] sm:$0xff] %v5890
      %6005 = vst [vmem:[%s145 + $0x60] sm:$0xff] %v5895
      %6006 = vst [vmem:[%s145 + $0x68] sm:$0xff] %v5900
      %6007 = vst [vmem:[%s145 + $0x70] sm:$0xff] %v5905
      %6008 = vst [vmem:[%s145 + $0x78] sm:$0xff] %v5910
      %6009 = vst [vmem:[%s145 + $0x80] sm:$0xff] %v5915
      %6010 = vst [vmem:[%s145 + $0x88] sm:$0xff] %v5920
      %6011 = vst [vmem:[%s145 + $0x90] sm:$0xff] %v5925
      %6012 = vst [vmem:[%s145 + $0x98] sm:$0xff] %v5930
      %6013 = vst [vmem:[%s145 + $0xa0] sm:$0xff] %v5935
      %6014 = vst [vmem:[%s145 + $0xa8] sm:$0xff] %v5940
      %6015 = vst [vmem:[%s145 + $0xb0] sm:$0xff] %v5945
      %6016 = vst [vmem:[%s145 + $0xb8] sm:$0xff] %v5950
      %6017 = vst [vmem:[%s145 + $0xc0] sm:$0xff] %v5955
      %6018 = vst [vmem:[%s145 + $0xc8] sm:$0xff] %v5960
      %6019 = vst [vmem:[%s145 + $0xd0] sm:$0xff] %v5965
      %6020 = vst [vmem:[%s145 + $0xd8] sm:$0xff] %v5970
      %6021 = vst [vmem:[%s145 + $0xe0] sm:$0xff] %v5975
      %6022 = vst [vmem:[%s145 + $0xe8] sm:$0xff] %v5980
      %6023 = vst [vmem:[%s145 + $0xf0] sm:$0xff] %v5985
      %6024 = vst [vmem:[%s145 + $0xf8] sm:$0xff] %v5990
      %s6025 = smul.u32 32, %s13
      %p6026 = scmp.lt.s32.totalorder %s6025, 127
      %s6027 = scalar_select %p6026, %s6025, 127
      %s6028 = smul.addr %s6027, 8
      %s6029 = scalar_lea.vmem %s2, %s6028
      // Predicated region
      $region29: #{fwd.1} parent=27 // pred_check
        %p6030 = pneg %p78
      $region30: #{fwd.1} parent=27 // pred_check_branch
        %6032 = sbr.rel (%p6030) target = $region32
      $region31: #{fwd.1} parent=27 // pred_region
        %s6033 = smul.u32 32, %s13
      $region32: #{fwd.1} parent=27 // pred_fallthru
        _
    $region28: #{fwd.1} parent=5 // pred_fallthru
      _
    %p6034 = scmp.le.s32.totalorder 2, %s8
    // Predicated region
    $region33: #{fwd.1} parent=5 // pred_check
      %p6035 = pneg %p6034
    $region34: #{fwd.1} parent=5 // pred_check_branch
      %6037 = sbr.rel (%p6035) target = $region36
    $region35: #{fwd.1} parent=5 // pred_region
      %s6038 = ssub.s32 %s8, 2
      // Predicated region
      $region37: #{fwd.1} parent=35 // pred_check
        %p6039 = pneg %p84
      $region38: #{fwd.1} parent=35 // pred_check_branch
        %6041 = sbr.rel (%p6039) target = $region40
      $region39: #{fwd.1} parent=35 // pred_region
        %s6042 = smul.u32 32, %s14
        %p6043 = scmp.lt.s32.totalorder %s6042, 127
        %s6044 = scalar_select %p6043, %s6042, 127
        %s6045 = smul.addr %s6044, 8
        %s6046 = scalar_lea.vmem %s2, %s6045
      $region40: #{fwd.1} parent=35 // pred_fallthru
        _
    $region36: #{fwd.1} parent=5 // pred_fallthru
      _
  $region6: #{fwd.1} parent=0 // loop_footer
    %s12 = sadd.s32 1, %s8
  $region7: #{fwd.1} parent=0 // loop_footer_branch
    %7 = sbr.rel target = $region3
  $region8: #{fwd.1} parent=0 // loop_exit
    _

</llo_original>
